<compile_context>
chip_gen: v6e
topology: v6e:2x2x1
jax: 0.10.0
libtpu: 0.0.40
codegen_flags: <defaults>
</compile_context>

<pallas_src>
import functools
import math

import jax
import jax.numpy as jnp
from jax.experimental import pallas as pl
from jax.experimental.pallas import tpu as pltpu


def _round_up(a, b):
    return (a + b - 1) // b * b


def _invariant_spec(block_shape):
    """BlockSpec for a grid-invariant operand (constant index_map).

    Single-buffered (pl.Buffered(1)): the block is fetched once, so double
    buffering only wastes VMEM.  Falls back gracefully on jax versions
    without `pipeline_mode`.
    """
    ndim = len(block_shape)
    index_map = lambda b, t, _n=ndim: (0,) * _n
    try:
        return pl.BlockSpec(block_shape, index_map, pipeline_mode=pl.Buffered(1))
    except (TypeError, AttributeError):  # pragma: no cover - older jax
        return pl.BlockSpec(block_shape, index_map)


# ----------------------------------------------------------------------------
# Pallas kernel: one (batch b, h-tile t) step.
#   xp_ref  : (1, 1, slab_rows, C)   halo slab of the padded image; rows are
#                                    flattened padded positions h*Wp + w
#   w1a_ref : (KK, C, O_pad + 128)   tap-major [W1^T | e_tap]  (fused per-tap
#                                    channel sums in the extra 128 lanes)
#   b1a_ref : (1, O_pad + 128)       [b1 | 0]
#   w2b_ref : (KK, O_pad, O_pad)     tap-major second generator Linear
#   b2b_ref : (KK, 1, O_pad)
#   bias_ref: (1, O_pad)             conv bias
#   o_ref   : (1, T', O_pad)         rows = flattened padded positions of tile
# ----------------------------------------------------------------------------
def _dynaconv_kernel(xp_ref, w1a_ref, b1a_ref, w2b_ref, b2b_ref, bias_ref,
                     o_ref, *, o_pad, kk, kh, kw, wp, t_rows):
    n1 = b1a_ref.shape[-1]

    # ---- layer 1 (+ per-tap channel sums), accumulated tap by tap ----------
    hxs = jnp.zeros((t_rows, n1), jnp.float32)
    for i in range(kh):
        for j in range(kw):
            tap = i * kw + j
            base = i * wp + j                                  # static offset
            slab = xp_ref[0, 0, base:base + t_rows, :]         # (T', C)
            hxs = hxs + jnp.dot(slab, w1a_ref[tap],
                                preferred_element_type=jnp.float32)
    hxs = hxs + b1a_ref[...]
    h = jnp.tanh(hxs[:, :o_pad])                               # (T', O_pad) f32 (EUP)
    xs = hxs[:, o_pad:]                                        # (T', 128); col tap = sum_c x

    # ---- layer 2, chunked per tap; contract with xs immediately ------------
    # (K = O_pad for these matmuls; at O <= 128 the 256-deep v6e/v7x MXU runs
    #  <= 50% depth fill — fine, the kernel is DMA/overhead bound at demo size.)
    h_m = h.astype(w2b_ref.dtype)
    out = jnp.zeros((t_rows, o_pad), jnp.float32)
    for tap in range(kk):
        k_tap = (jnp.dot(h_m, w2b_ref[tap], preferred_element_type=jnp.float32)
                 + b2b_ref[tap])                               # (T', O_pad), one tap at a time
        # TODO(synk): verify the (T',1)->(T',O_pad) lane-broadcast lowering; if
        # it emits vselect chains, pre-broadcast the KK tap sums before the loop.
        out = out + k_tap * xs[:, tap:tap + 1]
    out = out + bias_ref[...]
    o_ref[0] = out.astype(o_ref.dtype)


# ----------------------------------------------------------------------------
# Parameter packing — call ONCE per parameter update (hoisted out of forward).
# ----------------------------------------------------------------------------
def pack_dynaconv_params(params, *, in_channels, out_channels, kernel_size,
                         mxu_dtype=jnp.bfloat16):
    w1, b1, w2, b2, bias = params      # torch layouts: w1 (O, C*KK), w2 (O*KK, O)
    kh, kw = kernel_size
    kk = kh * kw
    c, o = in_channels, out_channels
    o_pad = _round_up(o, 128)
    xs_pad = 128                        # channel-sum block: one column per tap
    assert kk <= xs_pad, "kernel taps must fit a single 128-lane block"
    n1 = o_pad + xs_pad
    f32 = jnp.float32

    # layer 1, tap-major: w1a[tap, c, o] = w1[o, c*kk + tap]; col o_pad+tap sums c.
    w1_r = jnp.transpose(w1.astype(f32).reshape(o, c, kk), (2, 1, 0))      # (kk, c, o)
    sums = jnp.broadcast_to(jnp.eye(kk, xs_pad, dtype=f32)[:, None, :],
                            (kk, c, xs_pad))
    w1a = (jnp.zeros((kk, c, n1), f32)
           .at[:, :, :o].set(w1_r)
           .at[:, :, o_pad:].set(sums)
           .astype(mxu_dtype))
    b1a = jnp.zeros((1, n1), f32).at[0, :o].set(b1.astype(f32))

    # layer 2, tap-major: w2b[tap, in_o, out_o] = w2[out_o*kk + tap, in_o]
    w2_r = jnp.transpose(w2.astype(f32).reshape(o, kk, o), (1, 2, 0))      # (kk, in, out)
    w2b = (jnp.zeros((kk, o_pad, o_pad), f32)
           .at[:, :o, :o].set(w2_r).astype(mxu_dtype))
    b2b = (jnp.zeros((kk, 1, o_pad), f32)
           .at[:, 0, :o].set(jnp.transpose(b2.astype(f32).reshape(o, kk))))
    bias_pad = jnp.zeros((1, o_pad), f32).at[0, :o].set(bias.astype(f32))
    return (w1a, b1a, w2b, b2b, bias_pad)


# ----------------------------------------------------------------------------
# Forward wrapper.
# ----------------------------------------------------------------------------
def dynaconv_forward(x, packed_params, *, kernel_size, stride, padding,
                     out_channels, row_tile=512, mxu_dtype=jnp.bfloat16,
                     out_dtype=jnp.float32):
    """DynaConv forward. x: (B, C, H, W). Returns (B, O, Hout, Wout)."""
    kh, kw = (kernel_size if isinstance(kernel_size, tuple)
              else (kernel_size, kernel_size))
    kk = kh * kw
    B, C, H, W = x.shape
    O = out_channels
    w1a, b1a, w2b, b2b, bias_pad = packed_params
    o_pad = w2b.shape[-1]
    n1 = w1a.shape[-1]

    # Dense (stride-1) output grid; stride > 1 is a subsample of it (see end).
    Hp, Wp = H + 2 * padding, W + 2 * padding
    Hout, Wout = Hp - kh + 1, Wp - kw + 1

    # ---- h-tile size: TH output rows per grid step --------------------------
    #  * TH*Wp must be a multiple of 8 (sublane-aligned output block),
    #  * >= 2 tiles per image (>= 4 grid steps at B >= 2) so DMA/writeback
    #    overlap compute and v7x megacore has work on both cores,
    #  * T' = TH*Wp rows capped near `row_tile` to bound VMEM / vreg pressure.
    th_unit = 8 // math.gcd(Wp, 8)
    tiles_per_image = max(2, -(-4 // B))
    th_steps = _round_up(max(1, -(-Hout // tiles_per_image)), th_unit)
    th_rows = max(th_unit, (row_tile // Wp) // th_unit * th_unit)
    TH = max(th_unit, min(th_steps, th_rows))
    Hout_pad = _round_up(Hout, TH)
    Hp_pad = Hout_pad + kh              # spare rows: last tap slab stays in bounds
    t_rows = TH * Wp
    n_tiles = Hout_pad // TH
    slab_rows = (TH + kh) * Wp

    # ---- glue: padded NHWC image -> per-tile halo slabs (one small pass) ----
    x_nhwc = jnp.transpose(x, (0, 2, 3, 1))
    xp = jnp.pad(x_nhwc, ((0, 0),
                          (padding, Hp_pad - Hp + padding),
                          (padding, padding),
                          (0, 0)))
    xp2 = xp.reshape(B, Hp_pad * Wp, C)
    slabs = jnp.stack([xp2[:, t * t_rows: t * t_rows + slab_rows]
                       for t in range(n_tiles)], axis=1)       # (B, n_tiles, slab_rows, C)
    slabs = slabs.astype(mxu_dtype)

    grid = (B, n_tiles)
    out_rows = pl.pallas_call(
        functools.partial(_dynaconv_kernel, o_pad=o_pad, kk=kk, kh=kh, kw=kw,
                          wp=Wp, t_rows=t_rows),
        out_shape=jax.ShapeDtypeStruct((B, Hout_pad * Wp, o_pad), out_dtype),
        grid_spec=pltpu.PrefetchScalarGridSpec(
            num_scalar_prefetch=0,
            grid=grid,
            in_specs=[
                # halo slab of the padded image for this (b, h-tile)
                pl.BlockSpec((1, 1, slab_rows, C), lambda b, t: (b, t, 0, 0)),
                _invariant_spec((kk, C, n1)),           # [W1^T | taps] (tap-major)
                _invariant_spec((1, n1)),               # [b1 | 0]
                _invariant_spec((kk, o_pad, o_pad)),    # W2 (tap-major)
                _invariant_spec((kk, 1, o_pad)),        # b2 (tap-major)
                _invariant_spec((1, o_pad)),            # conv bias
            ],
            out_specs=pl.BlockSpec((1, t_rows, o_pad), lambda b, t: (b, t, 0)),
        ),
        compiler_params=pltpu.CompilerParams(
            dimension_semantics=("parallel", "parallel"),
            # live set (halo slab x2 + single-buffered weights + f32 accumulators)
            # is ~1-2 MiB at demo sizes; 32 MiB leaves headroom even on v7x (64 MiB).
            vmem_limit_bytes=32 * 1024 * 1024,
        ),
    )(slabs, w1a, b1a, w2b, b2b, bias_pad)

    # ---- rearrange to NCHW; drop padded rows / garbage cols / O padding -----
    # TODO(synk): store channel-major tiles from the kernel (XLU transpose) so
    # this becomes a pure reshape when O is a lane multiple.
    out = out_rows.reshape(B, Hout_pad, Wp, o_pad)[:, :Hout, :Wout, :O]
    out = jnp.transpose(out, (0, 3, 1, 2))                      # (B, O, Hout1, Wout1)
    if stride != 1:
        # TODO(synk): stride > 1 currently computes the dense output and
        # subsamples (stride^2 wasted flops); use strided tap slabs instead.
        out = out[:, :, ::stride, ::stride]
    return out


# ----------------------------------------------------------------------------
# Pure-JAX reference of the same (repaired-intent) semantics.
# ----------------------------------------------------------------------------
def _im2col_rows(x, kh, kw, stride, padding):
    B, C, H, W = x.shape
    Hout = (H + 2 * padding - kh) // stride + 1
    Wout = (W + 2 * padding - kw) // stride + 1
    x_nhwc = jnp.transpose(x, (0, 2, 3, 1))
    xp = jnp.pad(x_nhwc, ((0, 0), (padding, padding), (padding, padding), (0, 0)))
    patches = []
    for i in range(kh):
        for j in range(kw):
            patches.append(
                xp[:, i:i + stride * Hout:stride, j:j + stride * Wout:stride, :])
    p = jnp.stack(patches, axis=-1)                  # (B, Hout, Wout, C, kh*kw)
    rows = p.reshape(B * Hout * Wout, C * kh * kw)   # feature = c*KK + i*kw + j
    return rows, Hout, Wout


def dynaconv_reference(x, params, *, kernel_size, stride, padding, out_channels):
    B, C, H, W = x.shape
    kh, kw = kernel_size
    KK = kh * kw
    O = out_channels
    w1, b1, w2, b2, bias = params

    rows, Hout, Wout = _im2col_rows(x, kh, kw, stride, padding)
    L = Hout * Wout
    h = jnp.tanh(rows @ w1.T + b1)
    k = (h @ w2.T + b2).reshape(B, L, O, KK)
    xs = rows.reshape(B, L, C, KK).sum(axis=2)
    out = jnp.einsum('bloi,bli->blo', k, xs)
    out = out.transpose(0, 2, 1).reshape(B, O, Hout, Wout)
    return out + bias.reshape(1, O, 1, 1)


def init_params(key, in_channels, out_channels, kernel_size):
    """Deterministic init mirroring the module's parameter shapes."""
    kh, kw = kernel_size
    Din = in_channels * kh * kw
    O = out_channels
    k1, k2, k3, k4, k5 = jax.random.split(key, 5)
    bound1 = math.sqrt(6.0 / Din)
    w1 = jax.random.uniform(k1, (O, Din), jnp.float32, -bound1, bound1)
    b1 = jax.random.uniform(k2, (O,), jnp.float32, -1.0 / math.sqrt(Din),
                            1.0 / math.sqrt(Din))
    bound2 = 1.0 / math.sqrt(O)
    w2 = jax.random.uniform(k3, (O * kh * kw, O), jnp.float32, -bound2, bound2)
    b2 = jax.random.uniform(k4, (O * kh * kw,), jnp.float32, -bound2, bound2)
    bias = jax.random.uniform(k5, (O,), jnp.float32, -1.0 / math.sqrt(Din),
                              1.0 / math.sqrt(Din))
    return (w1, b1, w2, b2, bias)


if __name__ == "__main__":
    # small deterministic example: B=2, C=4, H=W=16, O=8, k=3, stride=1, pad=1
    B, C, H, W = 2, 4, 16, 16
    O = 8
    ks = (3, 3)
    stride, padding = 1, 1

    key = jax.random.PRNGKey(0)
    kx, kp = jax.random.split(key)
    x = jax.random.normal(kx, (B, C, H, W), jnp.float32)
    params = init_params(kp, C, O, ks)

    ref = dynaconv_reference(x, params, kernel_size=ks, stride=stride,
                             padding=padding, out_channels=O)

    # f32-MXU / f32-out path: tight correctness check.
    packed_f32 = pack_dynaconv_params(params, in_channels=C, out_channels=O,
                                      kernel_size=ks, mxu_dtype=jnp.float32)
    fwd_f32 = jax.jit(functools.partial(
        dynaconv_forward, kernel_size=ks, stride=stride, padding=padding,
        out_channels=O, mxu_dtype=jnp.float32, out_dtype=jnp.float32))
    out_f32 = jax.block_until_ready(fwd_f32(x, packed_f32))
    assert out_f32.shape == (B, O, H // stride, W // stride), out_f32.shape
    assert jnp.allclose(out_f32, ref, rtol=1e-3, atol=1e-3), "f32 mismatch vs reference"

    # bf16-MXU / bf16-out path (recommended default on v5e/v6e/v7x): loose check.
    packed_bf16 = pack_dynaconv_params(params, in_channels=C, out_channels=O,
                                       kernel_size=ks, mxu_dtype=jnp.bfloat16)
    fwd_bf16 = jax.jit(functools.partial(
        dynaconv_forward, kernel_size=ks, stride=stride, padding=padding,
        out_channels=O, mxu_dtype=jnp.bfloat16, out_dtype=jnp.bfloat16))
    out_bf16 = jax.block_until_ready(fwd_bf16(x, packed_bf16))
    scale = jnp.max(jnp.abs(ref))
    err = jnp.max(jnp.abs(out_bf16.astype(jnp.float32) - ref))
    assert err <= 5e-2 * scale + 5e-2, f"bf16 mismatch: err={err}, scale={scale}"

    print("KERNEL_OK")
</pallas_src>

<mosaic_0001>
module attributes {stable_mosaic.version = 11 : i64} {
  func.func @_dynaconv_kernel(%arg0: i32, %arg1: i32, %arg2: memref<1x1x198x4xf32, #tpu.memory_space<vmem>>, %arg3: memref<9x4x256xf32, #tpu.memory_space<vmem>>, %arg4: memref<1x256xf32, #tpu.memory_space<vmem>>, %arg5: memref<9x128x128xf32, #tpu.memory_space<vmem>>, %arg6: memref<9x1x128xf32, #tpu.memory_space<vmem>>, %arg7: memref<1x128xf32, #tpu.memory_space<vmem>>, %arg8: memref<1x144x128xf32, #tpu.memory_space<vmem>>) attributes {dimension_semantics = [#tpu.dimension_semantics<parallel>, #tpu.dimension_semantics<parallel>], iteration_bounds = array<i64: 2, 2>, scalar_prefetch = 0 : i64, scratch_operands = 0 : i64, tpu.core_type = #tpu.core_type<tc>, window_params = [{transform_indices = @transform_0, window_bounds = array<i64: 1, 1, 198, 4>}, {pipeline_mode = #tpu.pipeline_mode<synchronous>, transform_indices = @transform_1, window_bounds = array<i64: 9, 4, 256>}, {pipeline_mode = #tpu.pipeline_mode<synchronous>, transform_indices = @transform_2, window_bounds = array<i64: 1, 256>}, {pipeline_mode = #tpu.pipeline_mode<synchronous>, transform_indices = @transform_3, window_bounds = array<i64: 9, 128, 128>}, {pipeline_mode = #tpu.pipeline_mode<synchronous>, transform_indices = @transform_4, window_bounds = array<i64: 9, 1, 128>}, {pipeline_mode = #tpu.pipeline_mode<synchronous>, transform_indices = @transform_5, window_bounds = array<i64: 1, 128>}, {transform_indices = @transform_6, window_bounds = array<i64: 1, 144, 128>}]} {
    %cst = arith.constant 0.000000e+00 : f32
    %0 = vector.broadcast %cst : f32 to vector<144x256xf32>
    %c0 = arith.constant 0 : index
    %c0_0 = arith.constant 0 : index
    %c0_1 = arith.constant 0 : index
    %c0_2 = arith.constant 0 : index
    %1 = vector.load %arg2[%c0, %c0_0, %c0_1, %c0_2] : memref<1x1x198x4xf32, #tpu.memory_space<vmem>>, vector<1x1x144x4xf32>
    %2 = vector.shape_cast %1 : vector<1x1x144x4xf32> to vector<144x4xf32>
    %c0_3 = arith.constant 0 : index
    %c0_4 = arith.constant 0 : index
    %c0_5 = arith.constant 0 : index
    %3 = vector.load %arg3[%c0_3, %c0_4, %c0_5] : memref<9x4x256xf32, #tpu.memory_space<vmem>>, vector<1x4x256xf32>
    %4 = vector.shape_cast %3 : vector<1x4x256xf32> to vector<4x256xf32>
    %cst_6 = arith.constant dense<0.000000e+00> : vector<144x256xf32>
    %5 = tpu.matmul %2, %4, %cst_6 {dimension_numbers = #tpu.dot_dimension_numbers<[1], [0], [0], [1], [0, 0, 1, 1], [], []>} : vector<144x4xf32>, vector<4x256xf32>, vector<144x256xf32> -> vector<144x256xf32>
    %6 = arith.addf %0, %5 : vector<144x256xf32>
    %c0_7 = arith.constant 0 : index
    %c0_8 = arith.constant 0 : index
    %c1 = arith.constant 1 : index
    %c0_9 = arith.constant 0 : index
    %7 = vector.load %arg2[%c0_7, %c0_8, %c1, %c0_9] : memref<1x1x198x4xf32, #tpu.memory_space<vmem>>, vector<1x1x144x4xf32>
    %8 = vector.shape_cast %7 : vector<1x1x144x4xf32> to vector<144x4xf32>
    %c1_10 = arith.constant 1 : index
    %c0_11 = arith.constant 0 : index
    %c0_12 = arith.constant 0 : index
    %9 = vector.load %arg3[%c1_10, %c0_11, %c0_12] : memref<9x4x256xf32, #tpu.memory_space<vmem>>, vector<1x4x256xf32>
    %10 = vector.shape_cast %9 : vector<1x4x256xf32> to vector<4x256xf32>
    %cst_13 = arith.constant dense<0.000000e+00> : vector<144x256xf32>
    %11 = tpu.matmul %8, %10, %cst_13 {dimension_numbers = #tpu.dot_dimension_numbers<[1], [0], [0], [1], [0, 0, 1, 1], [], []>} : vector<144x4xf32>, vector<4x256xf32>, vector<144x256xf32> -> vector<144x256xf32>
    %12 = arith.addf %6, %11 : vector<144x256xf32>
    %c0_14 = arith.constant 0 : index
    %c0_15 = arith.constant 0 : index
    %c2 = arith.constant 2 : index
    %c0_16 = arith.constant 0 : index
    %13 = vector.load %arg2[%c0_14, %c0_15, %c2, %c0_16] : memref<1x1x198x4xf32, #tpu.memory_space<vmem>>, vector<1x1x144x4xf32>
    %14 = vector.shape_cast %13 : vector<1x1x144x4xf32> to vector<144x4xf32>
    %c2_17 = arith.constant 2 : index
    %c0_18 = arith.constant 0 : index
    %c0_19 = arith.constant 0 : index
    %15 = vector.load %arg3[%c2_17, %c0_18, %c0_19] : memref<9x4x256xf32, #tpu.memory_space<vmem>>, vector<1x4x256xf32>
    %16 = vector.shape_cast %15 : vector<1x4x256xf32> to vector<4x256xf32>
    %cst_20 = arith.constant dense<0.000000e+00> : vector<144x256xf32>
    %17 = tpu.matmul %14, %16, %cst_20 {dimension_numbers = #tpu.dot_dimension_numbers<[1], [0], [0], [1], [0, 0, 1, 1], [], []>} : vector<144x4xf32>, vector<4x256xf32>, vector<144x256xf32> -> vector<144x256xf32>
    %18 = arith.addf %12, %17 : vector<144x256xf32>
    %c0_21 = arith.constant 0 : index
    %c0_22 = arith.constant 0 : index
    %c18 = arith.constant 18 : index
    %c0_23 = arith.constant 0 : index
    %19 = vector.load %arg2[%c0_21, %c0_22, %c18, %c0_23] : memref<1x1x198x4xf32, #tpu.memory_space<vmem>>, vector<1x1x144x4xf32>
    %20 = vector.shape_cast %19 : vector<1x1x144x4xf32> to vector<144x4xf32>
    %c3 = arith.constant 3 : index
    %c0_24 = arith.constant 0 : index
    %c0_25 = arith.constant 0 : index
    %21 = vector.load %arg3[%c3, %c0_24, %c0_25] : memref<9x4x256xf32, #tpu.memory_space<vmem>>, vector<1x4x256xf32>
    %22 = vector.shape_cast %21 : vector<1x4x256xf32> to vector<4x256xf32>
    %cst_26 = arith.constant dense<0.000000e+00> : vector<144x256xf32>
    %23 = tpu.matmul %20, %22, %cst_26 {dimension_numbers = #tpu.dot_dimension_numbers<[1], [0], [0], [1], [0, 0, 1, 1], [], []>} : vector<144x4xf32>, vector<4x256xf32>, vector<144x256xf32> -> vector<144x256xf32>
    %24 = arith.addf %18, %23 : vector<144x256xf32>
    %c0_27 = arith.constant 0 : index
    %c0_28 = arith.constant 0 : index
    %c19 = arith.constant 19 : index
    %c0_29 = arith.constant 0 : index
    %25 = vector.load %arg2[%c0_27, %c0_28, %c19, %c0_29] : memref<1x1x198x4xf32, #tpu.memory_space<vmem>>, vector<1x1x144x4xf32>
    %26 = vector.shape_cast %25 : vector<1x1x144x4xf32> to vector<144x4xf32>
    %c4 = arith.constant 4 : index
    %c0_30 = arith.constant 0 : index
    %c0_31 = arith.constant 0 : index
    %27 = vector.load %arg3[%c4, %c0_30, %c0_31] : memref<9x4x256xf32, #tpu.memory_space<vmem>>, vector<1x4x256xf32>
    %28 = vector.shape_cast %27 : vector<1x4x256xf32> to vector<4x256xf32>
    %cst_32 = arith.constant dense<0.000000e+00> : vector<144x256xf32>
    %29 = tpu.matmul %26, %28, %cst_32 {dimension_numbers = #tpu.dot_dimension_numbers<[1], [0], [0], [1], [0, 0, 1, 1], [], []>} : vector<144x4xf32>, vector<4x256xf32>, vector<144x256xf32> -> vector<144x256xf32>
    %30 = arith.addf %24, %29 : vector<144x256xf32>
    %c0_33 = arith.constant 0 : index
    %c0_34 = arith.constant 0 : index
    %c20 = arith.constant 20 : index
    %c0_35 = arith.constant 0 : index
    %31 = vector.load %arg2[%c0_33, %c0_34, %c20, %c0_35] : memref<1x1x198x4xf32, #tpu.memory_space<vmem>>, vector<1x1x144x4xf32>
    %32 = vector.shape_cast %31 : vector<1x1x144x4xf32> to vector<144x4xf32>
    %c5 = arith.constant 5 : index
    %c0_36 = arith.constant 0 : index
    %c0_37 = arith.constant 0 : index
    %33 = vector.load %arg3[%c5, %c0_36, %c0_37] : memref<9x4x256xf32, #tpu.memory_space<vmem>>, vector<1x4x256xf32>
    %34 = vector.shape_cast %33 : vector<1x4x256xf32> to vector<4x256xf32>
    %cst_38 = arith.constant dense<0.000000e+00> : vector<144x256xf32>
    %35 = tpu.matmul %32, %34, %cst_38 {dimension_numbers = #tpu.dot_dimension_numbers<[1], [0], [0], [1], [0, 0, 1, 1], [], []>} : vector<144x4xf32>, vector<4x256xf32>, vector<144x256xf32> -> vector<144x256xf32>
    %36 = arith.addf %30, %35 : vector<144x256xf32>
    %c0_39 = arith.constant 0 : index
    %c0_40 = arith.constant 0 : index
    %c36 = arith.constant 36 : index
    %c0_41 = arith.constant 0 : index
    %37 = vector.load %arg2[%c0_39, %c0_40, %c36, %c0_41] : memref<1x1x198x4xf32, #tpu.memory_space<vmem>>, vector<1x1x144x4xf32>
    %38 = vector.shape_cast %37 : vector<1x1x144x4xf32> to vector<144x4xf32>
    %c6 = arith.constant 6 : index
    %c0_42 = arith.constant 0 : index
    %c0_43 = arith.constant 0 : index
    %39 = vector.load %arg3[%c6, %c0_42, %c0_43] : memref<9x4x256xf32, #tpu.memory_space<vmem>>, vector<1x4x256xf32>
    %40 = vector.shape_cast %39 : vector<1x4x256xf32> to vector<4x256xf32>
    %cst_44 = arith.constant dense<0.000000e+00> : vector<144x256xf32>
    %41 = tpu.matmul %38, %40, %cst_44 {dimension_numbers = #tpu.dot_dimension_numbers<[1], [0], [0], [1], [0, 0, 1, 1], [], []>} : vector<144x4xf32>, vector<4x256xf32>, vector<144x256xf32> -> vector<144x256xf32>
    %42 = arith.addf %36, %41 : vector<144x256xf32>
    %c0_45 = arith.constant 0 : index
    %c0_46 = arith.constant 0 : index
    %c37 = arith.constant 37 : index
    %c0_47 = arith.constant 0 : index
    %43 = vector.load %arg2[%c0_45, %c0_46, %c37, %c0_47] : memref<1x1x198x4xf32, #tpu.memory_space<vmem>>, vector<1x1x144x4xf32>
    %44 = vector.shape_cast %43 : vector<1x1x144x4xf32> to vector<144x4xf32>
    %c7 = arith.constant 7 : index
    %c0_48 = arith.constant 0 : index
    %c0_49 = arith.constant 0 : index
    %45 = vector.load %arg3[%c7, %c0_48, %c0_49] : memref<9x4x256xf32, #tpu.memory_space<vmem>>, vector<1x4x256xf32>
    %46 = vector.shape_cast %45 : vector<1x4x256xf32> to vector<4x256xf32>
    %cst_50 = arith.constant dense<0.000000e+00> : vector<144x256xf32>
    %47 = tpu.matmul %44, %46, %cst_50 {dimension_numbers = #tpu.dot_dimension_numbers<[1], [0], [0], [1], [0, 0, 1, 1], [], []>} : vector<144x4xf32>, vector<4x256xf32>, vector<144x256xf32> -> vector<144x256xf32>
    %48 = arith.addf %42, %47 : vector<144x256xf32>
    %c0_51 = arith.constant 0 : index
    %c0_52 = arith.constant 0 : index
    %c38 = arith.constant 38 : index
    %c0_53 = arith.constant 0 : index
    %49 = vector.load %arg2[%c0_51, %c0_52, %c38, %c0_53] : memref<1x1x198x4xf32, #tpu.memory_space<vmem>>, vector<1x1x144x4xf32>
    %50 = vector.shape_cast %49 : vector<1x1x144x4xf32> to vector<144x4xf32>
    %c8 = arith.constant 8 : index
    %c0_54 = arith.constant 0 : index
    %c0_55 = arith.constant 0 : index
    %51 = vector.load %arg3[%c8, %c0_54, %c0_55] : memref<9x4x256xf32, #tpu.memory_space<vmem>>, vector<1x4x256xf32>
    %52 = vector.shape_cast %51 : vector<1x4x256xf32> to vector<4x256xf32>
    %cst_56 = arith.constant dense<0.000000e+00> : vector<144x256xf32>
    %53 = tpu.matmul %50, %52, %cst_56 {dimension_numbers = #tpu.dot_dimension_numbers<[1], [0], [0], [1], [0, 0, 1, 1], [], []>} : vector<144x4xf32>, vector<4x256xf32>, vector<144x256xf32> -> vector<144x256xf32>
    %54 = arith.addf %48, %53 : vector<144x256xf32>
    %c0_57 = arith.constant 0 : index
    %c0_58 = arith.constant 0 : index
    %55 = vector.load %arg4[%c0_57, %c0_58] : memref<1x256xf32, #tpu.memory_space<vmem>>, vector<1x256xf32>
    %56 = vector.broadcast %55 : vector<1x256xf32> to vector<144x256xf32>
    %57 = arith.addf %54, %56 : vector<144x256xf32>
    %58 = vector.extract_strided_slice %57 {offsets = [0, 0], sizes = [144, 128], strides = [1, 1]} : vector<144x256xf32> to vector<144x128xf32>
    %59 = math.tanh %58 : vector<144x128xf32>
    %60 = vector.extract_strided_slice %57 {offsets = [0, 128], sizes = [144, 128], strides = [1, 1]} : vector<144x256xf32> to vector<144x128xf32>
    %cst_59 = arith.constant 0.000000e+00 : f32
    %61 = vector.broadcast %cst_59 : f32 to vector<144x128xf32>
    %c0_60 = arith.constant 0 : index
    %c0_61 = arith.constant 0 : index
    %c0_62 = arith.constant 0 : index
    %62 = vector.load %arg5[%c0_60, %c0_61, %c0_62] : memref<9x128x128xf32, #tpu.memory_space<vmem>>, vector<1x128x128xf32>
    %63 = vector.shape_cast %62 : vector<1x128x128xf32> to vector<128x128xf32>
    %cst_63 = arith.constant dense<0.000000e+00> : vector<144x128xf32>
    %64 = tpu.matmul %59, %63, %cst_63 {dimension_numbers = #tpu.dot_dimension_numbers<[1], [0], [0], [1], [0, 0, 1, 1], [], []>} : vector<144x128xf32>, vector<128x128xf32>, vector<144x128xf32> -> vector<144x128xf32>
    %c0_64 = arith.constant 0 : index
    %c0_65 = arith.constant 0 : index
    %c0_66 = arith.constant 0 : index
    %65 = vector.load %arg6[%c0_64, %c0_65, %c0_66] : memref<9x1x128xf32, #tpu.memory_space<vmem>>, vector<1x1x128xf32>
    %66 = vector.shape_cast %65 : vector<1x1x128xf32> to vector<1x128xf32>
    %67 = vector.broadcast %66 : vector<1x128xf32> to vector<144x128xf32>
    %68 = arith.addf %64, %67 : vector<144x128xf32>
    %69 = vector.extract_strided_slice %60 {offsets = [0, 0], sizes = [144, 1], strides = [1, 1]} : vector<144x128xf32> to vector<144x1xf32>
    %70 = vector.broadcast %69 : vector<144x1xf32> to vector<144x128xf32>
    %71 = arith.mulf %68, %70 : vector<144x128xf32>
    %72 = arith.addf %61, %71 : vector<144x128xf32>
    %c1_67 = arith.constant 1 : index
    %c0_68 = arith.constant 0 : index
    %c0_69 = arith.constant 0 : index
    %73 = vector.load %arg5[%c1_67, %c0_68, %c0_69] : memref<9x128x128xf32, #tpu.memory_space<vmem>>, vector<1x128x128xf32>
    %74 = vector.shape_cast %73 : vector<1x128x128xf32> to vector<128x128xf32>
    %cst_70 = arith.constant dense<0.000000e+00> : vector<144x128xf32>
    %75 = tpu.matmul %59, %74, %cst_70 {dimension_numbers = #tpu.dot_dimension_numbers<[1], [0], [0], [1], [0, 0, 1, 1], [], []>} : vector<144x128xf32>, vector<128x128xf32>, vector<144x128xf32> -> vector<144x128xf32>
    %c1_71 = arith.constant 1 : index
    %c0_72 = arith.constant 0 : index
    %c0_73 = arith.constant 0 : index
    %76 = vector.load %arg6[%c1_71, %c0_72, %c0_73] : memref<9x1x128xf32, #tpu.memory_space<vmem>>, vector<1x1x128xf32>
    %77 = vector.shape_cast %76 : vector<1x1x128xf32> to vector<1x128xf32>
    %78 = vector.broadcast %77 : vector<1x128xf32> to vector<144x128xf32>
    %79 = arith.addf %75, %78 : vector<144x128xf32>
    %80 = vector.extract_strided_slice %60 {offsets = [0, 1], sizes = [144, 1], strides = [1, 1]} : vector<144x128xf32> to vector<144x1xf32>
    %81 = vector.broadcast %80 : vector<144x1xf32> to vector<144x128xf32>
    %82 = arith.mulf %79, %81 : vector<144x128xf32>
    %83 = arith.addf %72, %82 : vector<144x128xf32>
    %c2_74 = arith.constant 2 : index
    %c0_75 = arith.constant 0 : index
    %c0_76 = arith.constant 0 : index
    %84 = vector.load %arg5[%c2_74, %c0_75, %c0_76] : memref<9x128x128xf32, #tpu.memory_space<vmem>>, vector<1x128x128xf32>
    %85 = vector.shape_cast %84 : vector<1x128x128xf32> to vector<128x128xf32>
    %cst_77 = arith.constant dense<0.000000e+00> : vector<144x128xf32>
    %86 = tpu.matmul %59, %85, %cst_77 {dimension_numbers = #tpu.dot_dimension_numbers<[1], [0], [0], [1], [0, 0, 1, 1], [], []>} : vector<144x128xf32>, vector<128x128xf32>, vector<144x128xf32> -> vector<144x128xf32>
    %c2_78 = arith.constant 2 : index
    %c0_79 = arith.constant 0 : index
    %c0_80 = arith.constant 0 : index
    %87 = vector.load %arg6[%c2_78, %c0_79, %c0_80] : memref<9x1x128xf32, #tpu.memory_space<vmem>>, vector<1x1x128xf32>
    %88 = vector.shape_cast %87 : vector<1x1x128xf32> to vector<1x128xf32>
    %89 = vector.broadcast %88 : vector<1x128xf32> to vector<144x128xf32>
    %90 = arith.addf %86, %89 : vector<144x128xf32>
    %91 = vector.extract_strided_slice %60 {offsets = [0, 2], sizes = [144, 1], strides = [1, 1]} : vector<144x128xf32> to vector<144x1xf32>
    %92 = vector.broadcast %91 : vector<144x1xf32> to vector<144x128xf32>
    %93 = arith.mulf %90, %92 : vector<144x128xf32>
    %94 = arith.addf %83, %93 : vector<144x128xf32>
    %c3_81 = arith.constant 3 : index
    %c0_82 = arith.constant 0 : index
    %c0_83 = arith.constant 0 : index
    %95 = vector.load %arg5[%c3_81, %c0_82, %c0_83] : memref<9x128x128xf32, #tpu.memory_space<vmem>>, vector<1x128x128xf32>
    %96 = vector.shape_cast %95 : vector<1x128x128xf32> to vector<128x128xf32>
    %cst_84 = arith.constant dense<0.000000e+00> : vector<144x128xf32>
    %97 = tpu.matmul %59, %96, %cst_84 {dimension_numbers = #tpu.dot_dimension_numbers<[1], [0], [0], [1], [0, 0, 1, 1], [], []>} : vector<144x128xf32>, vector<128x128xf32>, vector<144x128xf32> -> vector<144x128xf32>
    %c3_85 = arith.constant 3 : index
    %c0_86 = arith.constant 0 : index
    %c0_87 = arith.constant 0 : index
    %98 = vector.load %arg6[%c3_85, %c0_86, %c0_87] : memref<9x1x128xf32, #tpu.memory_space<vmem>>, vector<1x1x128xf32>
    %99 = vector.shape_cast %98 : vector<1x1x128xf32> to vector<1x128xf32>
    %100 = vector.broadcast %99 : vector<1x128xf32> to vector<144x128xf32>
    %101 = arith.addf %97, %100 : vector<144x128xf32>
    %102 = vector.extract_strided_slice %60 {offsets = [0, 3], sizes = [144, 1], strides = [1, 1]} : vector<144x128xf32> to vector<144x1xf32>
    %103 = vector.broadcast %102 : vector<144x1xf32> to vector<144x128xf32>
    %104 = arith.mulf %101, %103 : vector<144x128xf32>
    %105 = arith.addf %94, %104 : vector<144x128xf32>
    %c4_88 = arith.constant 4 : index
    %c0_89 = arith.constant 0 : index
    %c0_90 = arith.constant 0 : index
    %106 = vector.load %arg5[%c4_88, %c0_89, %c0_90] : memref<9x128x128xf32, #tpu.memory_space<vmem>>, vector<1x128x128xf32>
    %107 = vector.shape_cast %106 : vector<1x128x128xf32> to vector<128x128xf32>
    %cst_91 = arith.constant dense<0.000000e+00> : vector<144x128xf32>
    %108 = tpu.matmul %59, %107, %cst_91 {dimension_numbers = #tpu.dot_dimension_numbers<[1], [0], [0], [1], [0, 0, 1, 1], [], []>} : vector<144x128xf32>, vector<128x128xf32>, vector<144x128xf32> -> vector<144x128xf32>
    %c4_92 = arith.constant 4 : index
    %c0_93 = arith.constant 0 : index
    %c0_94 = arith.constant 0 : index
    %109 = vector.load %arg6[%c4_92, %c0_93, %c0_94] : memref<9x1x128xf32, #tpu.memory_space<vmem>>, vector<1x1x128xf32>
    %110 = vector.shape_cast %109 : vector<1x1x128xf32> to vector<1x128xf32>
    %111 = vector.broadcast %110 : vector<1x128xf32> to vector<144x128xf32>
    %112 = arith.addf %108, %111 : vector<144x128xf32>
    %113 = vector.extract_strided_slice %60 {offsets = [0, 4], sizes = [144, 1], strides = [1, 1]} : vector<144x128xf32> to vector<144x1xf32>
    %114 = vector.broadcast %113 : vector<144x1xf32> to vector<144x128xf32>
    %115 = arith.mulf %112, %114 : vector<144x128xf32>
    %116 = arith.addf %105, %115 : vector<144x128xf32>
    %c5_95 = arith.constant 5 : index
    %c0_96 = arith.constant 0 : index
    %c0_97 = arith.constant 0 : index
    %117 = vector.load %arg5[%c5_95, %c0_96, %c0_97] : memref<9x128x128xf32, #tpu.memory_space<vmem>>, vector<1x128x128xf32>
    %118 = vector.shape_cast %117 : vector<1x128x128xf32> to vector<128x128xf32>
    %cst_98 = arith.constant dense<0.000000e+00> : vector<144x128xf32>
    %119 = tpu.matmul %59, %118, %cst_98 {dimension_numbers = #tpu.dot_dimension_numbers<[1], [0], [0], [1], [0, 0, 1, 1], [], []>} : vector<144x128xf32>, vector<128x128xf32>, vector<144x128xf32> -> vector<144x128xf32>
    %c5_99 = arith.constant 5 : index
    %c0_100 = arith.constant 0 : index
    %c0_101 = arith.constant 0 : index
    %120 = vector.load %arg6[%c5_99, %c0_100, %c0_101] : memref<9x1x128xf32, #tpu.memory_space<vmem>>, vector<1x1x128xf32>
    %121 = vector.shape_cast %120 : vector<1x1x128xf32> to vector<1x128xf32>
    %122 = vector.broadcast %121 : vector<1x128xf32> to vector<144x128xf32>
    %123 = arith.addf %119, %122 : vector<144x128xf32>
    %124 = vector.extract_strided_slice %60 {offsets = [0, 5], sizes = [144, 1], strides = [1, 1]} : vector<144x128xf32> to vector<144x1xf32>
    %125 = vector.broadcast %124 : vector<144x1xf32> to vector<144x128xf32>
    %126 = arith.mulf %123, %125 : vector<144x128xf32>
    %127 = arith.addf %116, %126 : vector<144x128xf32>
    %c6_102 = arith.constant 6 : index
    %c0_103 = arith.constant 0 : index
    %c0_104 = arith.constant 0 : index
    %128 = vector.load %arg5[%c6_102, %c0_103, %c0_104] : memref<9x128x128xf32, #tpu.memory_space<vmem>>, vector<1x128x128xf32>
    %129 = vector.shape_cast %128 : vector<1x128x128xf32> to vector<128x128xf32>
    %cst_105 = arith.constant dense<0.000000e+00> : vector<144x128xf32>
    %130 = tpu.matmul %59, %129, %cst_105 {dimension_numbers = #tpu.dot_dimension_numbers<[1], [0], [0], [1], [0, 0, 1, 1], [], []>} : vector<144x128xf32>, vector<128x128xf32>, vector<144x128xf32> -> vector<144x128xf32>
    %c6_106 = arith.constant 6 : index
    %c0_107 = arith.constant 0 : index
    %c0_108 = arith.constant 0 : index
    %131 = vector.load %arg6[%c6_106, %c0_107, %c0_108] : memref<9x1x128xf32, #tpu.memory_space<vmem>>, vector<1x1x128xf32>
    %132 = vector.shape_cast %131 : vector<1x1x128xf32> to vector<1x128xf32>
    %133 = vector.broadcast %132 : vector<1x128xf32> to vector<144x128xf32>
    %134 = arith.addf %130, %133 : vector<144x128xf32>
    %135 = vector.extract_strided_slice %60 {offsets = [0, 6], sizes = [144, 1], strides = [1, 1]} : vector<144x128xf32> to vector<144x1xf32>
    %136 = vector.broadcast %135 : vector<144x1xf32> to vector<144x128xf32>
    %137 = arith.mulf %134, %136 : vector<144x128xf32>
    %138 = arith.addf %127, %137 : vector<144x128xf32>
    %c7_109 = arith.constant 7 : index
    %c0_110 = arith.constant 0 : index
    %c0_111 = arith.constant 0 : index
    %139 = vector.load %arg5[%c7_109, %c0_110, %c0_111] : memref<9x128x128xf32, #tpu.memory_space<vmem>>, vector<1x128x128xf32>
    %140 = vector.shape_cast %139 : vector<1x128x128xf32> to vector<128x128xf32>
    %cst_112 = arith.constant dense<0.000000e+00> : vector<144x128xf32>
    %141 = tpu.matmul %59, %140, %cst_112 {dimension_numbers = #tpu.dot_dimension_numbers<[1], [0], [0], [1], [0, 0, 1, 1], [], []>} : vector<144x128xf32>, vector<128x128xf32>, vector<144x128xf32> -> vector<144x128xf32>
    %c7_113 = arith.constant 7 : index
    %c0_114 = arith.constant 0 : index
    %c0_115 = arith.constant 0 : index
    %142 = vector.load %arg6[%c7_113, %c0_114, %c0_115] : memref<9x1x128xf32, #tpu.memory_space<vmem>>, vector<1x1x128xf32>
    %143 = vector.shape_cast %142 : vector<1x1x128xf32> to vector<1x128xf32>
    %144 = vector.broadcast %143 : vector<1x128xf32> to vector<144x128xf32>
    %145 = arith.addf %141, %144 : vector<144x128xf32>
    %146 = vector.extract_strided_slice %60 {offsets = [0, 7], sizes = [144, 1], strides = [1, 1]} : vector<144x128xf32> to vector<144x1xf32>
    %147 = vector.broadcast %146 : vector<144x1xf32> to vector<144x128xf32>
    %148 = arith.mulf %145, %147 : vector<144x128xf32>
    %149 = arith.addf %138, %148 : vector<144x128xf32>
    %c8_116 = arith.constant 8 : index
    %c0_117 = arith.constant 0 : index
    %c0_118 = arith.constant 0 : index
    %150 = vector.load %arg5[%c8_116, %c0_117, %c0_118] : memref<9x128x128xf32, #tpu.memory_space<vmem>>, vector<1x128x128xf32>
    %151 = vector.shape_cast %150 : vector<1x128x128xf32> to vector<128x128xf32>
    %cst_119 = arith.constant dense<0.000000e+00> : vector<144x128xf32>
    %152 = tpu.matmul %59, %151, %cst_119 {dimension_numbers = #tpu.dot_dimension_numbers<[1], [0], [0], [1], [0, 0, 1, 1], [], []>} : vector<144x128xf32>, vector<128x128xf32>, vector<144x128xf32> -> vector<144x128xf32>
    %c8_120 = arith.constant 8 : index
    %c0_121 = arith.constant 0 : index
    %c0_122 = arith.constant 0 : index
    %153 = vector.load %arg6[%c8_120, %c0_121, %c0_122] : memref<9x1x128xf32, #tpu.memory_space<vmem>>, vector<1x1x128xf32>
    %154 = vector.shape_cast %153 : vector<1x1x128xf32> to vector<1x128xf32>
    %155 = vector.broadcast %154 : vector<1x128xf32> to vector<144x128xf32>
    %156 = arith.addf %152, %155 : vector<144x128xf32>
    %157 = vector.extract_strided_slice %60 {offsets = [0, 8], sizes = [144, 1], strides = [1, 1]} : vector<144x128xf32> to vector<144x1xf32>
    %158 = vector.broadcast %157 : vector<144x1xf32> to vector<144x128xf32>
    %159 = arith.mulf %156, %158 : vector<144x128xf32>
    %160 = arith.addf %149, %159 : vector<144x128xf32>
    %c0_123 = arith.constant 0 : index
    %c0_124 = arith.constant 0 : index
    %161 = vector.load %arg7[%c0_123, %c0_124] : memref<1x128xf32, #tpu.memory_space<vmem>>, vector<1x128xf32>
    %162 = vector.broadcast %161 : vector<1x128xf32> to vector<144x128xf32>
    %163 = arith.addf %160, %162 : vector<144x128xf32>
    %c0_125 = arith.constant 0 : index
    %c0_126 = arith.constant 0 : index
    %c0_127 = arith.constant 0 : index
    %164 = vector.load %arg8[%c0_125, %c0_126, %c0_127] : memref<1x144x128xf32, #tpu.memory_space<vmem>>, vector<1x144x128xf32>
    %165 = vector.shape_cast %164 : vector<1x144x128xf32> to vector<144x128xf32>
    %166 = vector.shape_cast %163 : vector<144x128xf32> to vector<1x144x128xf32>
    tpu.vector_store %arg8[%c0_125, %c0_126, %c0_127], %166 {strides = array<i32>} : memref<1x144x128xf32, #tpu.memory_space<vmem>>, vector<1x144x128xf32>,
    return
  }
  func.func @transform_0(%arg0: i32, %arg1: i32) -> (i32, i32, i32, i32) {
    %c0_i32 = arith.constant 0 : i32
    %c0_i32_0 = arith.constant 0 : i32
    %c0_i32_1 = arith.constant 0 : i32
    return %arg0, %arg1, %c0_i32, %c0_i32_0 : i32, i32, i32, i32
  }
  func.func @transform_1(%arg0: i32, %arg1: i32) -> (i32, i32, i32) {
    %c0_i32 = arith.constant 0 : i32
    %c0_i32_0 = arith.constant 0 : i32
    %c0_i32_1 = arith.constant 0 : i32
    %c0_i32_2 = arith.constant 0 : i32
    return %c0_i32, %c0_i32_0, %c0_i32_1 : i32, i32, i32
  }
  func.func @transform_2(%arg0: i32, %arg1: i32) -> (i32, i32) {
    %c0_i32 = arith.constant 0 : i32
    %c0_i32_0 = arith.constant 0 : i32
    %c0_i32_1 = arith.constant 0 : i32
    return %c0_i32, %c0_i32_0 : i32, i32
  }
  func.func @transform_3(%arg0: i32, %arg1: i32) -> (i32, i32, i32) {
    %c0_i32 = arith.constant 0 : i32
    %c0_i32_0 = arith.constant 0 : i32
    %c0_i32_1 = arith.constant 0 : i32
    %c0_i32_2 = arith.constant 0 : i32
    return %c0_i32, %c0_i32_0, %c0_i32_1 : i32, i32, i32
  }
  func.func @transform_4(%arg0: i32, %arg1: i32) -> (i32, i32, i32) {
    %c0_i32 = arith.constant 0 : i32
    %c0_i32_0 = arith.constant 0 : i32
    %c0_i32_1 = arith.constant 0 : i32
    %c0_i32_2 = arith.constant 0 : i32
    return %c0_i32, %c0_i32_0, %c0_i32_1 : i32, i32, i32
  }
  func.func @transform_5(%arg0: i32, %arg1: i32) -> (i32, i32) {
    %c0_i32 = arith.constant 0 : i32
    %c0_i32_0 = arith.constant 0 : i32
    %c0_i32_1 = arith.constant 0 : i32
    return %c0_i32, %c0_i32_0 : i32, i32
  }
  func.func @transform_6(%arg0: i32, %arg1: i32) -> (i32, i32, i32) {
    %c0_i32 = arith.constant 0 : i32
    %c0_i32_0 = arith.constant 0 : i32
    return %arg0, %arg1, %c0_i32 : i32, i32, i32
  }
}

</mosaic_0001>

<llo_original>
// kernel: dynaconv_forward.1
$region0: #{dynaconv_forward.1}
  #allocation0 [shape = 'u32[]', space=smem, size = 0x4, offset = 0x4, fixed_abs, tag = 'smem constant byte address 0x4 - core index']
  #allocation1 [shape = 'u32[144,128]{1,0:T(1,128)}', space=vmem, size = 0x12000, scoped, tag = 'internal scratch']
  %s0 = inlined_call_operand.vmem [shape: f32[2,2,198,4], index: 0, kind: input, shape index: {}]
  %s1 = inlined_call_operand.vmem [shape: f32[9,4,256], index: 1, kind: input, shape index: {}]
  %s2 = inlined_call_operand.vmem [shape: f32[1,256], index: 2, kind: input, shape index: {}]
  %s3 = inlined_call_operand.vmem [shape: f32[9,128,128], index: 3, kind: input, shape index: {}]
  %s4 = inlined_call_operand.vmem [shape: f32[9,1,128], index: 4, kind: input, shape index: {}]
  %s5 = inlined_call_operand.vmem [shape: f32[1,128], index: 5, kind: input, shape index: {}]
  %s6 = inlined_call_operand.vmem [shape: f32[2,288,128], index: 6, kind: output, shape index: {}]
  %s7 = sld [smem:[#allocation0]]
  $region57: #{dynaconv_forward.1} parent=0
    _
  %s9 = ssub.s32 1, %s7
  %s10 = scalar_select 0, %s9, %s7
  loop: start=0, step=1, limit=6
  $region2: #{dynaconv_forward.1} parent=0 // loop_pre_header
    _
  $region3: #{dynaconv_forward.1} parent=0 // loop_header
    %s12 = sphi 0, %s16
    %p13 = scmp.ge.s32.totalorder %s12, 6
    %s19 = sphi 0, %s31
    %s20 = sphi 0, %s27
    %s21 = sphi 0, %s19
    %s22 = sphi 0, %s20
    %s23 = sphi 0, %s21
    %s24 = sphi 0, %s22
    %s36 = sphi 0, %s38
    %s39 = sphi 0, %s36
    %s40 = sphi 0, %s39
    %s56 = sphi 0, %s40
    %s60 = sphi 0, %s60
    %s62 = sphi 0, %s60
    %s63 = sphi 0, %s62
    %s77 = sphi 0, %s63
    %s81 = sphi 0, %s81
    %s83 = sphi 0, %s81
    %s84 = sphi 0, %s83
    %s98 = sphi 0, %s84
    %s102 = sphi 0, %s102
    %s104 = sphi 0, %s102
    %s105 = sphi 0, %s104
    %s119 = sphi 0, %s105
    %s123 = sphi 0, %s123
    %s125 = sphi 0, %s123
    %s126 = sphi 0, %s125
    %s140 = sphi 0, %s126
    %s144 = sphi 0, %s144
    %s146 = sphi 0, %s144
    %s147 = sphi 0, %s146
    %s161 = sphi 0, %s147
    %s169 = sphi 0, %s171
    %s172 = sphi 0, %s169
    %s173 = sphi 0, %s172
    %s189 = sphi 0, %s173
  $region4: #{dynaconv_forward.1} parent=0 // loop_header_branch
    %15 = sbr.rel (%p13) target = $region8
  $region5: #{dynaconv_forward.1} parent=0 // loop_body
    %s17 = ssub.s32 %s12, 1
    %s18 = ssub.s32 %s12, 2
    %s25 = sadd.s32 1, %s20
    %p26 = scmp.ge.s32.totalorder %s25, 2
    %s27 = scalar_select %p26, 0, %s25
    %s28 = sadd.s32 1, %s19
    %s29 = scalar_select %p26, %s28, %s19
    %p30 = scmp.ge.s32.totalorder %s29, 2
    %s31 = scalar_select %p30, 0, %s29
    %s32 = ssub.s32 %s19, %s31
    %s33 = ssub.s32 %s20, %s27
    %s34 = sor.u32 %s32, %s33
    %p35 = scmp.eq.s32.totalorder %s34, 0
    %s37 = sadd.s32 %s36, 1
    %s38 = scalar_select %p35, %s36, %s37
    %p41 = pneg %p35
    %p42 = scmp.eq.s32.totalorder %s12, 3
    %p43 = por %p41, %p42
    %p44 = scmp.ne.s32.totalorder %s36, %s39
    %p45 = scmp.eq.s32.totalorder %s12, 0
    %p46 = por %p44, %p45
    %p47 = scmp.ne.s32.totalorder %s36, %s39
    %p48 = scmp.eq.s32.totalorder %s17, 3
    %p49 = por %p47, %p48
    %p50 = scmp.ne.s32.totalorder %s39, %s40
    %p51 = scmp.eq.s32.totalorder %s17, 0
    %p52 = por %p50, %p51
    %p53 = scmp.ne.s32.totalorder %s39, %s40
    %p54 = scmp.eq.s32.totalorder %s18, 3
    %p55 = por %p53, %p54
    %p57 = scmp.ne.s32.totalorder %s40, %s56
    %p58 = scmp.eq.s32.totalorder %s18, 0
    %p59 = por %p57, %p58
    %s61 = sadd.s32 %s60, 1
    %p64 = scmp.eq.s32.totalorder %s12, 3
    %p65 = scmp.ne.s32.totalorder %s60, %s62
    %p66 = scmp.eq.s32.totalorder %s12, 0
    %p67 = por %p65, %p66
    %p68 = scmp.ne.s32.totalorder %s60, %s62
    %p69 = scmp.eq.s32.totalorder %s17, 3
    %p70 = por %p68, %p69
    %p71 = scmp.ne.s32.totalorder %s62, %s63
    %p72 = scmp.eq.s32.totalorder %s17, 0
    %p73 = por %p71, %p72
    %p74 = scmp.ne.s32.totalorder %s62, %s63
    %p75 = scmp.eq.s32.totalorder %s18, 3
    %p76 = por %p74, %p75
    %p78 = scmp.ne.s32.totalorder %s63, %s77
    %p79 = scmp.eq.s32.totalorder %s18, 0
    %p80 = por %p78, %p79
    %s82 = sadd.s32 %s81, 1
    %p85 = scmp.eq.s32.totalorder %s12, 3
    %p86 = scmp.ne.s32.totalorder %s81, %s83
    %p87 = scmp.eq.s32.totalorder %s12, 0
    %p88 = por %p86, %p87
    %p89 = scmp.ne.s32.totalorder %s81, %s83
    %p90 = scmp.eq.s32.totalorder %s17, 3
    %p91 = por %p89, %p90
    %p92 = scmp.ne.s32.totalorder %s83, %s84
    %p93 = scmp.eq.s32.totalorder %s17, 0
    %p94 = por %p92, %p93
    %p95 = scmp.ne.s32.totalorder %s83, %s84
    %p96 = scmp.eq.s32.totalorder %s18, 3
    %p97 = por %p95, %p96
    %p99 = scmp.ne.s32.totalorder %s84, %s98
    %p100 = scmp.eq.s32.totalorder %s18, 0
    %p101 = por %p99, %p100
    %s103 = sadd.s32 %s102, 1
    %p106 = scmp.eq.s32.totalorder %s12, 3
    %p107 = scmp.ne.s32.totalorder %s102, %s104
    %p108 = scmp.eq.s32.totalorder %s12, 0
    %p109 = por %p107, %p108
    %p110 = scmp.ne.s32.totalorder %s102, %s104
    %p111 = scmp.eq.s32.totalorder %s17, 3
    %p112 = por %p110, %p111
    %p113 = scmp.ne.s32.totalorder %s104, %s105
    %p114 = scmp.eq.s32.totalorder %s17, 0
    %p115 = por %p113, %p114
    %p116 = scmp.ne.s32.totalorder %s104, %s105
    %p117 = scmp.eq.s32.totalorder %s18, 3
    %p118 = por %p116, %p117
    %p120 = scmp.ne.s32.totalorder %s105, %s119
    %p121 = scmp.eq.s32.totalorder %s18, 0
    %p122 = por %p120, %p121
    %s124 = sadd.s32 %s123, 1
    %p127 = scmp.eq.s32.totalorder %s12, 3
    %p128 = scmp.ne.s32.totalorder %s123, %s125
    %p129 = scmp.eq.s32.totalorder %s12, 0
    %p130 = por %p128, %p129
    %p131 = scmp.ne.s32.totalorder %s123, %s125
    %p132 = scmp.eq.s32.totalorder %s17, 3
    %p133 = por %p131, %p132
    %p134 = scmp.ne.s32.totalorder %s125, %s126
    %p135 = scmp.eq.s32.totalorder %s17, 0
    %p136 = por %p134, %p135
    %p137 = scmp.ne.s32.totalorder %s125, %s126
    %p138 = scmp.eq.s32.totalorder %s18, 3
    %p139 = por %p137, %p138
    %p141 = scmp.ne.s32.totalorder %s126, %s140
    %p142 = scmp.eq.s32.totalorder %s18, 0
    %p143 = por %p141, %p142
    %s145 = sadd.s32 %s144, 1
    %p148 = scmp.eq.s32.totalorder %s12, 3
    %p149 = scmp.ne.s32.totalorder %s144, %s146
    %p150 = scmp.eq.s32.totalorder %s12, 0
    %p151 = por %p149, %p150
    %p152 = scmp.ne.s32.totalorder %s144, %s146
    %p153 = scmp.eq.s32.totalorder %s17, 3
    %p154 = por %p152, %p153
    %p155 = scmp.ne.s32.totalorder %s146, %s147
    %p156 = scmp.eq.s32.totalorder %s17, 0
    %p157 = por %p155, %p156
    %p158 = scmp.ne.s32.totalorder %s146, %s147
    %p159 = scmp.eq.s32.totalorder %s18, 3
    %p160 = por %p158, %p159
    %p162 = scmp.ne.s32.totalorder %s147, %s161
    %p163 = scmp.eq.s32.totalorder %s18, 0
    %p164 = por %p162, %p163
    %s165 = ssub.s32 %s19, %s31
    %s166 = ssub.s32 %s20, %s27
    %s167 = sor.u32 %s165, %s166
    %p168 = scmp.eq.s32.totalorder %s167, 0
    %s170 = sadd.s32 %s169, 1
    %s171 = scalar_select %p168, %s169, %s170
    %p174 = pneg %p168
    %p175 = scmp.eq.s32.totalorder %s12, 3
    %p176 = por %p174, %p175
    %p177 = scmp.ne.s32.totalorder %s169, %s172
    %p178 = scmp.eq.s32.totalorder %s12, 0
    %p179 = por %p177, %p178
    %p180 = scmp.ne.s32.totalorder %s169, %s172
    %p181 = scmp.eq.s32.totalorder %s17, 3
    %p182 = por %p180, %p181
    %p183 = scmp.ne.s32.totalorder %s172, %s173
    %p184 = scmp.eq.s32.totalorder %s17, 0
    %p185 = por %p183, %p184
    %p186 = scmp.ne.s32.totalorder %s172, %s173
    %p187 = scmp.eq.s32.totalorder %s18, 3
    %p188 = por %p186, %p187
    %p190 = scmp.ne.s32.totalorder %s173, %s189
    %p191 = scmp.eq.s32.totalorder %s18, 0
    %p192 = por %p190, %p191
    %p193 = scmp.le.s32.totalorder 1, %s12
    %p194 = scmp.lt.s32.totalorder %s12, 5
    %p195 = pnand %p193, %p194
    %p196 = pneg %p195
    // Predicated region
    $region9: #{dynaconv_forward.1} parent=5 // pred_check
      _
    $region10: #{dynaconv_forward.1} parent=5 // pred_check_branch
      %198 = sbr.rel (%p195) target = $region12
    $region11: #{dynaconv_forward.1} parent=5 // pred_region
      %s199 = ssub.s32 %s12, 1
      // Predicated region
      $region13: #{dynaconv_forward.1} parent=11 // pred_check
        %p200 = pneg %p73
      $region14: #{dynaconv_forward.1} parent=11 // pred_check_branch
        %202 = sbr.rel (%p200) target = $region16
      $region15: #{dynaconv_forward.1} parent=11 // pred_region
        _
      $region16: #{dynaconv_forward.1} parent=11 // pred_fallthru
        _
      // Predicated region
      $region17: #{dynaconv_forward.1} parent=11 // pred_check
        %p203 = pneg %p94
      $region18: #{dynaconv_forward.1} parent=11 // pred_check_branch
        %205 = sbr.rel (%p203) target = $region20
      $region19: #{dynaconv_forward.1} parent=11 // pred_region
        _
      $region20: #{dynaconv_forward.1} parent=11 // pred_fallthru
        _
      // Predicated region
      $region21: #{dynaconv_forward.1} parent=11 // pred_check
        %p206 = pneg %p115
      $region22: #{dynaconv_forward.1} parent=11 // pred_check_branch
        %208 = sbr.rel (%p206) target = $region24
      $region23: #{dynaconv_forward.1} parent=11 // pred_region
        _
      $region24: #{dynaconv_forward.1} parent=11 // pred_fallthru
        _
      // Predicated region
      $region25: #{dynaconv_forward.1} parent=11 // pred_check
        %p209 = pneg %p136
      $region26: #{dynaconv_forward.1} parent=11 // pred_check_branch
        %211 = sbr.rel (%p209) target = $region28
      $region27: #{dynaconv_forward.1} parent=11 // pred_region
        _
      $region28: #{dynaconv_forward.1} parent=11 // pred_fallthru
        _
      // Predicated region
      $region29: #{dynaconv_forward.1} parent=11 // pred_check
        %p212 = pneg %p157
      $region30: #{dynaconv_forward.1} parent=11 // pred_check_branch
        %214 = sbr.rel (%p212) target = $region32
      $region31: #{dynaconv_forward.1} parent=11 // pred_region
        _
      $region32: #{dynaconv_forward.1} parent=11 // pred_fallthru
        _
    $region12: #{dynaconv_forward.1} parent=5 // pred_fallthru
      _
    %p215 = scmp.lt.s32.totalorder %s12, 4
    // Predicated region
    $region33: #{dynaconv_forward.1} parent=5 // pred_check
      %p216 = pneg %p215
    $region34: #{dynaconv_forward.1} parent=5 // pred_check_branch
      %218 = sbr.rel (%p216) target = $region36
    $region35: #{dynaconv_forward.1} parent=5 // pred_region
      // Predicated region
      $region37: #{dynaconv_forward.1} parent=35 // pred_check
        %p219 = pneg %p46
      $region38: #{dynaconv_forward.1} parent=35 // pred_check_branch
        %221 = sbr.rel (%p219) target = $region40
      $region39: #{dynaconv_forward.1} parent=35 // pred_region
        %p222 = scmp.lt.s32.totalorder %s19, 1
        %s223 = scalar_select %p222, %s19, 1
        %p224 = scmp.lt.s32.totalorder %s20, 1
        %s225 = scalar_select %p224, %s20, 1
        %s226 = smul.addr %s225, 25
        %s227 = smul.addr %s223, 50
        %s228 = sadd.s32 %s226, %s227
        %s229 = smul.addr %s228, 8
        %s230 = scalar_lea.vmem %s0, %s229
      $region40: #{dynaconv_forward.1} parent=35 // pred_fallthru
        _
    $region36: #{dynaconv_forward.1} parent=5 // pred_fallthru
      _
    %p231 = scmp.le.s32.totalorder 1, %s12
    %p232 = scmp.lt.s32.totalorder %s12, 5
    %p233 = pnand %p231, %p232
    %p234 = pneg %p233
    // Predicated region
    $region41: #{dynaconv_forward.1} parent=5 // pred_check
      _
    $region42: #{dynaconv_forward.1} parent=5 // pred_check_branch
      %236 = sbr.rel (%p233) target = $region44
    $region43: #{dynaconv_forward.1} parent=5 // pred_region
      %s237 = ssub.s32 %s12, 1
      %p238 = scmp.lt.s32.totalorder %s21, 1
      %s239 = scalar_select %p238, %s21, 1
      %p240 = scmp.lt.s32.totalorder %s22, 1
      %s241 = scalar_select %p240, %s22, 1
      %s242 = smul.addr %s241, 25
      %s243 = smul.addr %s239, 50
      %s244 = sadd.s32 %s242, %s243
      %s245 = smul.addr %s244, 8
      %s246 = scalar_lea.vmem %s0, %s245
      %p247 = pneg %p52
      %p248 = pneg %p49
      %p249 = pneg %p73
      %p250 = pneg %p70
      %p251 = pneg %p94
      %p252 = pneg %p91
      %p253 = pneg %p115
      %p254 = pneg %p112
      %p255 = pneg %p136
      %p256 = pneg %p133
      %p257 = pneg %p157
      %p258 = pneg %p154
      %p259 = pneg %p185
      %p260 = pneg %p182
      %s261 = smul.u32 18, %s22
      %p262 = scmp.lt.s32.totalorder %s21, 1
      %s263 = scalar_select %p262, %s21, 1
      %p264 = scmp.lt.s32.totalorder %s261, 35
      %s265 = scalar_select %p264, %s261, 35
      %s266 = smul.addr %s263, 36
      %s267 = sadd.s32 %s265, %s266
      %s268 = smul.addr %s267, 8
      %s269 = scalar_lea.vmem %s6, %s268
      %p270 = scmp.lt.s32.totalorder %s21, 1
      %s271 = scalar_select %p270, %s21, 1
      %p272 = scmp.lt.s32.totalorder %s22, 1
      %s273 = scalar_select %p272, %s22, 1
      %s274 = smul.addr %s273, 25
      %s275 = smul.addr %s271, 50
      %s276 = sadd.s32 %s274, %s275
      %s277 = smul.addr %s276, 8
      %s278 = scalar_lea.vmem %s0, %s277
      %s279 = smul.u32 18, %s22
      %p280 = scmp.lt.s32.totalorder %s21, 1
      %s281 = scalar_select %p280, %s21, 1
      %p282 = scmp.lt.s32.totalorder %s279, 35
      %s283 = scalar_select %p282, %s279, 35
      %s284 = smul.addr %s281, 36
      %s285 = sadd.s32 %s283, %s284
      %s286 = smul.addr %s285, 8
      %s287 = scalar_lea.vmem %s6, %s286
      %s288 = smul.u32 18, %s22
      %v289 = vld [vmem:[%s278] sm:$0xff]
      %v290 = vld [vmem:[%s278 + $0x8] sm:$0xff]
      %v291 = vld [vmem:[%s278 + $0x10] sm:$0xff]
      %v292 = vld [vmem:[%s278 + $0x18] sm:$0xff]
      %v293 = vld [vmem:[%s278 + $0x20] sm:$0xff]
      %v294 = vld [vmem:[%s278 + $0x28] sm:$0xff]
      %v295 = vld [vmem:[%s278 + $0x30] sm:$0xff]
      %v296 = vld [vmem:[%s278 + $0x38] sm:$0xff]
      %v297 = vld [vmem:[%s278 + $0x40] sm:$0xff]
      %v298 = vld [vmem:[%s278 + $0x48] sm:$0xff]
      %v299 = vld [vmem:[%s278 + $0x50] sm:$0xff]
      %v300 = vld [vmem:[%s278 + $0x58] sm:$0xff]
      %v301 = vld [vmem:[%s278 + $0x60] sm:$0xff]
      %v302 = vld [vmem:[%s278 + $0x68] sm:$0xff]
      %v303 = vld [vmem:[%s278 + $0x70] sm:$0xff]
      %v304 = vld [vmem:[%s278 + $0x78] sm:$0xff]
      %v305 = vld [vmem:[%s278 + $0x80] sm:$0xff]
      %v306 = vld [vmem:[%s278 + $0x88] sm:$0xff]
      %v307 = vld [vmem:[%s1] sm:$0xff]
      %v308 = vld [vmem:[%s278 + $0x1] sm:$0xff]
      %v309 = vld [vmem:[%s278 + $0x9] sm:$0xff]
      %v310 = vld [vmem:[%s278 + $0x11] sm:$0xff]
      %v311 = vld [vmem:[%s278 + $0x19] sm:$0xff]
      %v312 = vld [vmem:[%s278 + $0x21] sm:$0xff]
      %v313 = vld [vmem:[%s278 + $0x29] sm:$0xff]
      %v314 = vld [vmem:[%s278 + $0x31] sm:$0xff]
      %v315 = vld [vmem:[%s278 + $0x39] sm:$0xff]
      %v316 = vld [vmem:[%s278 + $0x41] sm:$0xff]
      %v317 = vld [vmem:[%s278 + $0x49] sm:$0xff]
      %v318 = vld [vmem:[%s278 + $0x51] sm:$0xff]
      %v319 = vld [vmem:[%s278 + $0x59] sm:$0xff]
      %v320 = vld [vmem:[%s278 + $0x61] sm:$0xff]
      %v321 = vld [vmem:[%s278 + $0x69] sm:$0xff]
      %v322 = vld [vmem:[%s278 + $0x71] sm:$0xff]
      %v323 = vld [vmem:[%s278 + $0x79] sm:$0xff]
      %v324 = vld [vmem:[%s278 + $0x81] sm:$0xff]
      %v325 = vld [vmem:[%s278 + $0x89] sm:$0xff]
      %s326 = scalar_lea.vmem %s1, 8
      %v327 = vld [vmem:[%s326] sm:$0xff]
      %v329 = vcombine.high %v327, %v327
      %vm330 = vcmask 31744
      %v332 = vsel %vm330, %v308, 0
      %v335 = vsel %vm330, %v309, 0
      %v338 = vsel %vm330, %v310, 0
      %v341 = vsel %vm330, %v311, 0
      %v344 = vsel %vm330, %v312, 0
      %v347 = vsel %vm330, %v313, 0
      %v350 = vsel %vm330, %v314, 0
      %v353 = vsel %vm330, %v315, 0
      %v356 = vsel %vm330, %v316, 0
      %v359 = vsel %vm330, %v317, 0
      %v362 = vsel %vm330, %v318, 0
      %v365 = vsel %vm330, %v319, 0
      %v368 = vsel %vm330, %v320, 0
      %v371 = vsel %vm330, %v321, 0
      %v374 = vsel %vm330, %v322, 0
      %v377 = vsel %vm330, %v323, 0
      %v380 = vsel %vm330, %v324, 0
      %v383 = vsel %vm330, %v325, 0
      %vm385 = vcmask 1043456
      %v386 = vsel %vm385, %v327, 0
      %v388 = vsel %vm385, %v329, 0
      %390 = vmatprep.subr.mxu0 0.0
      %391 = vmatpush1.msra.mxu0 0.0
      %392 = vmatprep.subr.mxu0 0.0
      %393 = vmatpush1.msra.mxu0 0.0
      %394 = vmatprep.subr.mxu0 0.0
      %395 = vmatpush1.msra.mxu0 0.0
      %396 = vmatprep.subr.mxu0 0.0
      %397 = vmatpush1.msra.mxu0 0.0
      %398 = vmatprep.subr.mxu0 0.0
      %399 = vmatpush1.msra.mxu0 0.0
      %400 = vmatprep.subr.mxu0 0.0
      %401 = vmatpush1.msra.mxu0 0.0
      %402 = vmatprep.subr.mxu0 0.0
      %403 = vmatpush1.msra.mxu0 0.0
      %404 = vmatprep.subr.mxu0 0.0
      %405 = vmatpush1.msra.mxu0 0.0
      %406 = vmatprep.subr.mxu0 0.0
      %407 = vmatpush1.msra.mxu0 0.0
      %408 = vmatprep.subr.mxu0 0.0
      %409 = vmatpush1.msra.mxu0 0.0
      %410 = vmatprep.subr.mxu0 0.0
      %411 = vmatpush1.msra.mxu0 0.0
      %412 = vmatprep.subr.mxu0 0.0
      %413 = vmatpush1.msra.mxu0 0.0
      %414 = vmatprep.subr.mxu0 0.0
      %415 = vmatpush1.msra.mxu0 0.0
      %416 = vmatprep.subr.mxu0 0.0
      %417 = vmatpush1.msra.mxu0 0.0
      %418 = vmatprep.subr.mxu0 0.0
      %419 = vmatpush1.msra.mxu0 0.0
      %420 = vmatprep.subr.mxu0 %v388
      %421 = vmatpush1.msra.mxu0 %v386
      %422 = vmatprep.subr.mxu0 0.0
      %423 = vmatpush2.msra.mxu0 0.0
      %424 = vmatprep.subr.mxu0 0.0
      %425 = vmatpush2.msra.mxu0 0.0
      %426 = vmatprep.subr.mxu0 0.0
      %427 = vmatpush2.msra.mxu0 0.0
      %428 = vmatprep.subr.mxu0 0.0
      %429 = vmatpush2.msra.mxu0 0.0
      %430 = vmatprep.subr.mxu0 0.0
      %431 = vmatpush2.msra.mxu0 0.0
      %432 = vmatprep.subr.mxu0 0.0
      %433 = vmatpush2.msra.mxu0 0.0
      %434 = vmatprep.subr.mxu0 0.0
      %435 = vmatpush2.msra.mxu0 0.0
      %436 = vmatprep.subr.mxu0 0.0
      %437 = vmatpush2.msra.mxu0 0.0
      %438 = vmatprep.subr.mxu0 0.0
      %439 = vmatpush2.msra.mxu0 0.0
      %440 = vmatprep.subr.mxu0 0.0
      %441 = vmatpush2.msra.mxu0 0.0
      %442 = vmatprep.subr.mxu0 0.0
      %443 = vmatpush2.msra.mxu0 0.0
      %444 = vmatprep.subr.mxu0 0.0
      %445 = vmatpush2.msra.mxu0 0.0
      %446 = vmatprep.subr.mxu0 0.0
      %447 = vmatpush2.msra.mxu0 0.0
      %448 = vmatprep.subr.mxu0 0.0
      %449 = vmatpush2.msra.mxu0 0.0
      %450 = vmatprep.subr.mxu0 0.0
      %451 = vmatpush2.msra.mxu0 0.0
      %452 = vmatprep.subr.mxu0 0.0
      %453 = vmatpush2.msra.mxu0 0.0
      %454 = vmatprep.mubr.f32.mxu0 0.0
      %455 = vmatmul.mubr.f32.gmra.mxu0 %v332
      %v456 = vpop.f32.mrf.mxu0
      %v457 = vadd.f32 0.0, %v456
      %v458 = vpop.f32.mrf.mxu0
      %v459 = vadd.f32 0.0, %v458
      %460 = vmatprep.mubr.f32.mxu0 0.0
      %461 = vmatmul.mubr.f32.gmra.mxu0 %v335
      %v462 = vpop.f32.mrf.mxu0
      %v463 = vadd.f32 0.0, %v462
      %v464 = vpop.f32.mrf.mxu0
      %v465 = vadd.f32 0.0, %v464
      %466 = vmatprep.mubr.f32.mxu0 0.0
      %467 = vmatmul.mubr.f32.gmra.mxu0 %v338
      %v468 = vpop.f32.mrf.mxu0
      %v469 = vadd.f32 0.0, %v468
      %v470 = vpop.f32.mrf.mxu0
      %v471 = vadd.f32 0.0, %v470
      %472 = vmatprep.mubr.f32.mxu0 0.0
      %473 = vmatmul.mubr.f32.gmra.mxu0 %v341
      %v474 = vpop.f32.mrf.mxu0
      %v475 = vadd.f32 0.0, %v474
      %v476 = vpop.f32.mrf.mxu0
      %v477 = vadd.f32 0.0, %v476
      %478 = vmatprep.mubr.f32.mxu0 0.0
      %479 = vmatmul.mubr.f32.gmra.mxu0 %v344
      %v480 = vpop.f32.mrf.mxu0
      %v481 = vadd.f32 0.0, %v480
      %v482 = vpop.f32.mrf.mxu0
      %v483 = vadd.f32 0.0, %v482
      %484 = vmatprep.mubr.f32.mxu0 0.0
      %485 = vmatmul.mubr.f32.gmra.mxu0 %v347
      %v486 = vpop.f32.mrf.mxu0
      %v487 = vadd.f32 0.0, %v486
      %v488 = vpop.f32.mrf.mxu0
      %v489 = vadd.f32 0.0, %v488
      %490 = vmatprep.mubr.f32.mxu0 0.0
      %491 = vmatmul.mubr.f32.gmra.mxu0 %v350
      %v492 = vpop.f32.mrf.mxu0
      %v493 = vadd.f32 0.0, %v492
      %v494 = vpop.f32.mrf.mxu0
      %v495 = vadd.f32 0.0, %v494
      %496 = vmatprep.mubr.f32.mxu0 0.0
      %497 = vmatmul.mubr.f32.gmra.mxu0 %v353
      %v498 = vpop.f32.mrf.mxu0
      %v499 = vadd.f32 0.0, %v498
      %v500 = vpop.f32.mrf.mxu0
      %v501 = vadd.f32 0.0, %v500
      %502 = vmatprep.mubr.f32.mxu0 0.0
      %503 = vmatmul.mubr.f32.gmra.mxu0 %v356
      %v504 = vpop.f32.mrf.mxu0
      %v505 = vadd.f32 0.0, %v504
      %v506 = vpop.f32.mrf.mxu0
      %v507 = vadd.f32 0.0, %v506
      %508 = vmatprep.mubr.f32.mxu0 0.0
      %509 = vmatmul.mubr.f32.gmra.mxu0 %v359
      %v510 = vpop.f32.mrf.mxu0
      %v511 = vadd.f32 0.0, %v510
      %v512 = vpop.f32.mrf.mxu0
      %v513 = vadd.f32 0.0, %v512
      %514 = vmatprep.mubr.f32.mxu0 0.0
      %515 = vmatmul.mubr.f32.gmra.mxu0 %v362
      %v516 = vpop.f32.mrf.mxu0
      %v517 = vadd.f32 0.0, %v516
      %v518 = vpop.f32.mrf.mxu0
      %v519 = vadd.f32 0.0, %v518
      %520 = vmatprep.mubr.f32.mxu0 0.0
      %521 = vmatmul.mubr.f32.gmra.mxu0 %v365
      %v522 = vpop.f32.mrf.mxu0
      %v523 = vadd.f32 0.0, %v522
      %v524 = vpop.f32.mrf.mxu0
      %v525 = vadd.f32 0.0, %v524
      %526 = vmatprep.mubr.f32.mxu0 0.0
      %527 = vmatmul.mubr.f32.gmra.mxu0 %v368
      %v528 = vpop.f32.mrf.mxu0
      %v529 = vadd.f32 0.0, %v528
      %v530 = vpop.f32.mrf.mxu0
      %v531 = vadd.f32 0.0, %v530
      %532 = vmatprep.mubr.f32.mxu0 0.0
      %533 = vmatmul.mubr.f32.gmra.mxu0 %v371
      %v534 = vpop.f32.mrf.mxu0
      %v535 = vadd.f32 0.0, %v534
      %v536 = vpop.f32.mrf.mxu0
      %v537 = vadd.f32 0.0, %v536
      %538 = vmatprep.mubr.f32.mxu0 0.0
      %539 = vmatmul.mubr.f32.gmra.mxu0 %v374
      %v540 = vpop.f32.mrf.mxu0
      %v541 = vadd.f32 0.0, %v540
      %v542 = vpop.f32.mrf.mxu0
      %v543 = vadd.f32 0.0, %v542
      %544 = vmatprep.mubr.f32.mxu0 0.0
      %545 = vmatmul.mubr.f32.gmra.mxu0 %v377
      %v546 = vpop.f32.mrf.mxu0
      %v547 = vadd.f32 0.0, %v546
      %v548 = vpop.f32.mrf.mxu0
      %v549 = vadd.f32 0.0, %v548
      %550 = vmatprep.mubr.f32.mxu0 0.0
      %551 = vmatmul.mubr.f32.gmra.mxu0 %v380
      %v552 = vpop.f32.mrf.mxu0
      %v553 = vadd.f32 0.0, %v552
      %v554 = vpop.f32.mrf.mxu0
      %v555 = vadd.f32 0.0, %v554
      %556 = vmatprep.mubr.f32.mxu0 0.0
      %557 = vmatmul.mubr.f32.gmra.mxu0 %v383
      %v558 = vpop.f32.mrf.mxu0
      %v559 = vadd.f32 0.0, %v558
      %v560 = vpop.f32.mrf.mxu0
      %v561 = vadd.f32 0.0, %v560
      %562 = vdwg.mxu0
      %v564 = vcombine.high %v307, %v307
      %v566 = vsel %vm330, %v289, 0
      %v569 = vsel %vm330, %v290, 0
      %v572 = vsel %vm330, %v291, 0
      %v575 = vsel %vm330, %v292, 0
      %v578 = vsel %vm330, %v293, 0
      %v581 = vsel %vm330, %v294, 0
      %v584 = vsel %vm330, %v295, 0
      %v587 = vsel %vm330, %v296, 0
      %v590 = vsel %vm330, %v297, 0
      %v593 = vsel %vm330, %v298, 0
      %v596 = vsel %vm330, %v299, 0
      %v599 = vsel %vm330, %v300, 0
      %v602 = vsel %vm330, %v301, 0
      %v605 = vsel %vm330, %v302, 0
      %v608 = vsel %vm330, %v303, 0
      %v611 = vsel %vm330, %v304, 0
      %v614 = vsel %vm330, %v305, 0
      %v617 = vsel %vm330, %v306, 0
      %v619 = vsel %vm385, %v307, 0
      %v621 = vsel %vm385, %v564, 0
      %623 = vmatprep.subr.mxu0 0.0
      %624 = vmatpush1.msra.mxu0 0.0
      %625 = vmatprep.subr.mxu0 0.0
      %626 = vmatpush1.msra.mxu0 0.0
      %627 = vmatprep.subr.mxu0 0.0
      %628 = vmatpush1.msra.mxu0 0.0
      %629 = vmatprep.subr.mxu0 0.0
      %630 = vmatpush1.msra.mxu0 0.0
      %631 = vmatprep.subr.mxu0 0.0
      %632 = vmatpush1.msra.mxu0 0.0
      %633 = vmatprep.subr.mxu0 0.0
      %634 = vmatpush1.msra.mxu0 0.0
      %635 = vmatprep.subr.mxu0 0.0
      %636 = vmatpush1.msra.mxu0 0.0
      %637 = vmatprep.subr.mxu0 0.0
      %638 = vmatpush1.msra.mxu0 0.0
      %639 = vmatprep.subr.mxu0 0.0
      %640 = vmatpush1.msra.mxu0 0.0
      %641 = vmatprep.subr.mxu0 0.0
      %642 = vmatpush1.msra.mxu0 0.0
      %643 = vmatprep.subr.mxu0 0.0
      %644 = vmatpush1.msra.mxu0 0.0
      %645 = vmatprep.subr.mxu0 0.0
      %646 = vmatpush1.msra.mxu0 0.0
      %647 = vmatprep.subr.mxu0 0.0
      %648 = vmatpush1.msra.mxu0 0.0
      %649 = vmatprep.subr.mxu0 0.0
      %650 = vmatpush1.msra.mxu0 0.0
      %651 = vmatprep.subr.mxu0 0.0
      %652 = vmatpush1.msra.mxu0 0.0
      %653 = vmatprep.subr.mxu0 %v621
      %654 = vmatpush1.msra.mxu0 %v619
      %655 = vmatprep.subr.mxu0 0.0
      %656 = vmatpush2.msra.mxu0 0.0
      %657 = vmatprep.subr.mxu0 0.0
      %658 = vmatpush2.msra.mxu0 0.0
      %659 = vmatprep.subr.mxu0 0.0
      %660 = vmatpush2.msra.mxu0 0.0
      %661 = vmatprep.subr.mxu0 0.0
      %662 = vmatpush2.msra.mxu0 0.0
      %663 = vmatprep.subr.mxu0 0.0
      %664 = vmatpush2.msra.mxu0 0.0
      %665 = vmatprep.subr.mxu0 0.0
      %666 = vmatpush2.msra.mxu0 0.0
      %667 = vmatprep.subr.mxu0 0.0
      %668 = vmatpush2.msra.mxu0 0.0
      %669 = vmatprep.subr.mxu0 0.0
      %670 = vmatpush2.msra.mxu0 0.0
      %671 = vmatprep.subr.mxu0 0.0
      %672 = vmatpush2.msra.mxu0 0.0
      %673 = vmatprep.subr.mxu0 0.0
      %674 = vmatpush2.msra.mxu0 0.0
      %675 = vmatprep.subr.mxu0 0.0
      %676 = vmatpush2.msra.mxu0 0.0
      %677 = vmatprep.subr.mxu0 0.0
      %678 = vmatpush2.msra.mxu0 0.0
      %679 = vmatprep.subr.mxu0 0.0
      %680 = vmatpush2.msra.mxu0 0.0
      %681 = vmatprep.subr.mxu0 0.0
      %682 = vmatpush2.msra.mxu0 0.0
      %683 = vmatprep.subr.mxu0 0.0
      %684 = vmatpush2.msra.mxu0 0.0
      %685 = vmatprep.subr.mxu0 0.0
      %686 = vmatpush2.msra.mxu0 0.0
      %687 = vmatprep.mubr.f32.mxu0 0.0
      %688 = vmatmul.mubr.f32.gmra.mxu0 %v566
      %v689 = vpop.f32.mrf.mxu0
      %v690 = vadd.f32 %v457, %v689
      %v691 = vpop.f32.mrf.mxu0
      %v692 = vadd.f32 %v459, %v691
      %693 = vmatprep.mubr.f32.mxu0 0.0
      %694 = vmatmul.mubr.f32.gmra.mxu0 %v569
      %v695 = vpop.f32.mrf.mxu0
      %v696 = vadd.f32 %v463, %v695
      %v697 = vpop.f32.mrf.mxu0
      %v698 = vadd.f32 %v465, %v697
      %699 = vmatprep.mubr.f32.mxu0 0.0
      %700 = vmatmul.mubr.f32.gmra.mxu0 %v572
      %v701 = vpop.f32.mrf.mxu0
      %v702 = vadd.f32 %v469, %v701
      %v703 = vpop.f32.mrf.mxu0
      %v704 = vadd.f32 %v471, %v703
      %705 = vmatprep.mubr.f32.mxu0 0.0
      %706 = vmatmul.mubr.f32.gmra.mxu0 %v575
      %v707 = vpop.f32.mrf.mxu0
      %v708 = vadd.f32 %v475, %v707
      %v709 = vpop.f32.mrf.mxu0
      %v710 = vadd.f32 %v477, %v709
      %711 = vmatprep.mubr.f32.mxu0 0.0
      %712 = vmatmul.mubr.f32.gmra.mxu0 %v578
      %v713 = vpop.f32.mrf.mxu0
      %v714 = vadd.f32 %v481, %v713
      %v715 = vpop.f32.mrf.mxu0
      %v716 = vadd.f32 %v483, %v715
      %717 = vmatprep.mubr.f32.mxu0 0.0
      %718 = vmatmul.mubr.f32.gmra.mxu0 %v581
      %v719 = vpop.f32.mrf.mxu0
      %v720 = vadd.f32 %v487, %v719
      %v721 = vpop.f32.mrf.mxu0
      %v722 = vadd.f32 %v489, %v721
      %723 = vmatprep.mubr.f32.mxu0 0.0
      %724 = vmatmul.mubr.f32.gmra.mxu0 %v584
      %v725 = vpop.f32.mrf.mxu0
      %v726 = vadd.f32 %v493, %v725
      %v727 = vpop.f32.mrf.mxu0
      %v728 = vadd.f32 %v495, %v727
      %729 = vmatprep.mubr.f32.mxu0 0.0
      %730 = vmatmul.mubr.f32.gmra.mxu0 %v587
      %v731 = vpop.f32.mrf.mxu0
      %v732 = vadd.f32 %v499, %v731
      %v733 = vpop.f32.mrf.mxu0
      %v734 = vadd.f32 %v501, %v733
      %735 = vmatprep.mubr.f32.mxu0 0.0
      %736 = vmatmul.mubr.f32.gmra.mxu0 %v590
      %v737 = vpop.f32.mrf.mxu0
      %v738 = vadd.f32 %v505, %v737
      %v739 = vpop.f32.mrf.mxu0
      %v740 = vadd.f32 %v507, %v739
      %741 = vmatprep.mubr.f32.mxu0 0.0
      %742 = vmatmul.mubr.f32.gmra.mxu0 %v593
      %v743 = vpop.f32.mrf.mxu0
      %v744 = vadd.f32 %v511, %v743
      %v745 = vpop.f32.mrf.mxu0
      %v746 = vadd.f32 %v513, %v745
      %747 = vmatprep.mubr.f32.mxu0 0.0
      %748 = vmatmul.mubr.f32.gmra.mxu0 %v596
      %v749 = vpop.f32.mrf.mxu0
      %v750 = vadd.f32 %v517, %v749
      %v751 = vpop.f32.mrf.mxu0
      %v752 = vadd.f32 %v519, %v751
      %753 = vmatprep.mubr.f32.mxu0 0.0
      %754 = vmatmul.mubr.f32.gmra.mxu0 %v599
      %v755 = vpop.f32.mrf.mxu0
      %v756 = vadd.f32 %v523, %v755
      %v757 = vpop.f32.mrf.mxu0
      %v758 = vadd.f32 %v525, %v757
      %759 = vmatprep.mubr.f32.mxu0 0.0
      %760 = vmatmul.mubr.f32.gmra.mxu0 %v602
      %v761 = vpop.f32.mrf.mxu0
      %v762 = vadd.f32 %v529, %v761
      %v763 = vpop.f32.mrf.mxu0
      %v764 = vadd.f32 %v531, %v763
      %765 = vmatprep.mubr.f32.mxu0 0.0
      %766 = vmatmul.mubr.f32.gmra.mxu0 %v605
      %v767 = vpop.f32.mrf.mxu0
      %v768 = vadd.f32 %v535, %v767
      %v769 = vpop.f32.mrf.mxu0
      %v770 = vadd.f32 %v537, %v769
      %771 = vmatprep.mubr.f32.mxu0 0.0
      %772 = vmatmul.mubr.f32.gmra.mxu0 %v608
      %v773 = vpop.f32.mrf.mxu0
      %v774 = vadd.f32 %v541, %v773
      %v775 = vpop.f32.mrf.mxu0
      %v776 = vadd.f32 %v543, %v775
      %777 = vmatprep.mubr.f32.mxu0 0.0
      %778 = vmatmul.mubr.f32.gmra.mxu0 %v611
      %v779 = vpop.f32.mrf.mxu0
      %v780 = vadd.f32 %v547, %v779
      %v781 = vpop.f32.mrf.mxu0
      %v782 = vadd.f32 %v549, %v781
      %783 = vmatprep.mubr.f32.mxu0 0.0
      %784 = vmatmul.mubr.f32.gmra.mxu0 %v614
      %v785 = vpop.f32.mrf.mxu0
      %v786 = vadd.f32 %v553, %v785
      %v787 = vpop.f32.mrf.mxu0
      %v788 = vadd.f32 %v555, %v787
      %789 = vmatprep.mubr.f32.mxu0 0.0
      %790 = vmatmul.mubr.f32.gmra.mxu0 %v617
      %v791 = vpop.f32.mrf.mxu0
      %v792 = vadd.f32 %v559, %v791
      %v793 = vpop.f32.mrf.mxu0
      %v794 = vadd.f32 %v561, %v793
      %795 = vdwg.mxu0
      %v796 = vld [vmem:[%s278 + $0x2] sm:$0xff]
      %v797 = vld [vmem:[%s278 + $0xa] sm:$0xff]
      %v798 = vld [vmem:[%s278 + $0x12] sm:$0xff]
      %v799 = vld [vmem:[%s278 + $0x1a] sm:$0xff]
      %v800 = vld [vmem:[%s278 + $0x22] sm:$0xff]
      %v801 = vld [vmem:[%s278 + $0x2a] sm:$0xff]
      %v802 = vld [vmem:[%s278 + $0x32] sm:$0xff]
      %v803 = vld [vmem:[%s278 + $0x3a] sm:$0xff]
      %v804 = vld [vmem:[%s278 + $0x42] sm:$0xff]
      %v805 = vld [vmem:[%s278 + $0x4a] sm:$0xff]
      %v806 = vld [vmem:[%s278 + $0x52] sm:$0xff]
      %v807 = vld [vmem:[%s278 + $0x5a] sm:$0xff]
      %v808 = vld [vmem:[%s278 + $0x62] sm:$0xff]
      %v809 = vld [vmem:[%s278 + $0x6a] sm:$0xff]
      %v810 = vld [vmem:[%s278 + $0x72] sm:$0xff]
      %v811 = vld [vmem:[%s278 + $0x7a] sm:$0xff]
      %v812 = vld [vmem:[%s278 + $0x82] sm:$0xff]
      %v813 = vld [vmem:[%s278 + $0x8a] sm:$0xff]
      %s814 = scalar_lea.vmem %s1, 16
      %v815 = vld [vmem:[%s814] sm:$0xff]
      %v817 = vcombine.high %v815, %v815
      %v819 = vsel %vm330, %v796, 0
      %v822 = vsel %vm330, %v797, 0
      %v825 = vsel %vm330, %v798, 0
      %v828 = vsel %vm330, %v799, 0
      %v831 = vsel %vm330, %v800, 0
      %v834 = vsel %vm330, %v801, 0
      %v837 = vsel %vm330, %v802, 0
      %v840 = vsel %vm330, %v803, 0
      %v843 = vsel %vm330, %v804, 0
      %v846 = vsel %vm330, %v805, 0
      %v849 = vsel %vm330, %v806, 0
      %v852 = vsel %vm330, %v807, 0
      %v855 = vsel %vm330, %v808, 0
      %v858 = vsel %vm330, %v809, 0
      %v861 = vsel %vm330, %v810, 0
      %v864 = vsel %vm330, %v811, 0
      %v867 = vsel %vm330, %v812, 0
      %v870 = vsel %vm330, %v813, 0
      %v872 = vsel %vm385, %v815, 0
      %v874 = vsel %vm385, %v817, 0
      %876 = vmatprep.subr.mxu0 0.0
      %877 = vmatpush1.msra.mxu0 0.0
      %878 = vmatprep.subr.mxu0 0.0
      %879 = vmatpush1.msra.mxu0 0.0
      %880 = vmatprep.subr.mxu0 0.0
      %881 = vmatpush1.msra.mxu0 0.0
      %882 = vmatprep.subr.mxu0 0.0
      %883 = vmatpush1.msra.mxu0 0.0
      %884 = vmatprep.subr.mxu0 0.0
      %885 = vmatpush1.msra.mxu0 0.0
      %886 = vmatprep.subr.mxu0 0.0
      %887 = vmatpush1.msra.mxu0 0.0
      %888 = vmatprep.subr.mxu0 0.0
      %889 = vmatpush1.msra.mxu0 0.0
      %890 = vmatprep.subr.mxu0 0.0
      %891 = vmatpush1.msra.mxu0 0.0
      %892 = vmatprep.subr.mxu0 0.0
      %893 = vmatpush1.msra.mxu0 0.0
      %894 = vmatprep.subr.mxu0 0.0
      %895 = vmatpush1.msra.mxu0 0.0
      %896 = vmatprep.subr.mxu0 0.0
      %897 = vmatpush1.msra.mxu0 0.0
      %898 = vmatprep.subr.mxu0 0.0
      %899 = vmatpush1.msra.mxu0 0.0
      %900 = vmatprep.subr.mxu0 0.0
      %901 = vmatpush1.msra.mxu0 0.0
      %902 = vmatprep.subr.mxu0 0.0
      %903 = vmatpush1.msra.mxu0 0.0
      %904 = vmatprep.subr.mxu0 0.0
      %905 = vmatpush1.msra.mxu0 0.0
      %906 = vmatprep.subr.mxu0 %v874
      %907 = vmatpush1.msra.mxu0 %v872
      %908 = vmatprep.subr.mxu0 0.0
      %909 = vmatpush2.msra.mxu0 0.0
      %910 = vmatprep.subr.mxu0 0.0
      %911 = vmatpush2.msra.mxu0 0.0
      %912 = vmatprep.subr.mxu0 0.0
      %913 = vmatpush2.msra.mxu0 0.0
      %914 = vmatprep.subr.mxu0 0.0
      %915 = vmatpush2.msra.mxu0 0.0
      %916 = vmatprep.subr.mxu0 0.0
      %917 = vmatpush2.msra.mxu0 0.0
      %918 = vmatprep.subr.mxu0 0.0
      %919 = vmatpush2.msra.mxu0 0.0
      %920 = vmatprep.subr.mxu0 0.0
      %921 = vmatpush2.msra.mxu0 0.0
      %922 = vmatprep.subr.mxu0 0.0
      %923 = vmatpush2.msra.mxu0 0.0
      %924 = vmatprep.subr.mxu0 0.0
      %925 = vmatpush2.msra.mxu0 0.0
      %926 = vmatprep.subr.mxu0 0.0
      %927 = vmatpush2.msra.mxu0 0.0
      %928 = vmatprep.subr.mxu0 0.0
      %929 = vmatpush2.msra.mxu0 0.0
      %930 = vmatprep.subr.mxu0 0.0
      %931 = vmatpush2.msra.mxu0 0.0
      %932 = vmatprep.subr.mxu0 0.0
      %933 = vmatpush2.msra.mxu0 0.0
      %934 = vmatprep.subr.mxu0 0.0
      %935 = vmatpush2.msra.mxu0 0.0
      %936 = vmatprep.subr.mxu0 0.0
      %937 = vmatpush2.msra.mxu0 0.0
      %938 = vmatprep.subr.mxu0 0.0
      %939 = vmatpush2.msra.mxu0 0.0
      %940 = vmatprep.mubr.f32.mxu0 0.0
      %941 = vmatmul.mubr.f32.gmra.mxu0 %v819
      %v942 = vpop.f32.mrf.mxu0
      %v943 = vadd.f32 0.0, %v942
      %v944 = vpop.f32.mrf.mxu0
      %v945 = vadd.f32 0.0, %v944
      %946 = vmatprep.mubr.f32.mxu0 0.0
      %947 = vmatmul.mubr.f32.gmra.mxu0 %v822
      %v948 = vpop.f32.mrf.mxu0
      %v949 = vadd.f32 0.0, %v948
      %v950 = vpop.f32.mrf.mxu0
      %v951 = vadd.f32 0.0, %v950
      %952 = vmatprep.mubr.f32.mxu0 0.0
      %953 = vmatmul.mubr.f32.gmra.mxu0 %v825
      %v954 = vpop.f32.mrf.mxu0
      %v955 = vadd.f32 0.0, %v954
      %v956 = vpop.f32.mrf.mxu0
      %v957 = vadd.f32 0.0, %v956
      %958 = vmatprep.mubr.f32.mxu0 0.0
      %959 = vmatmul.mubr.f32.gmra.mxu0 %v828
      %v960 = vpop.f32.mrf.mxu0
      %v961 = vadd.f32 0.0, %v960
      %v962 = vpop.f32.mrf.mxu0
      %v963 = vadd.f32 0.0, %v962
      %964 = vmatprep.mubr.f32.mxu0 0.0
      %965 = vmatmul.mubr.f32.gmra.mxu0 %v831
      %v966 = vpop.f32.mrf.mxu0
      %v967 = vadd.f32 0.0, %v966
      %v968 = vpop.f32.mrf.mxu0
      %v969 = vadd.f32 0.0, %v968
      %970 = vmatprep.mubr.f32.mxu0 0.0
      %971 = vmatmul.mubr.f32.gmra.mxu0 %v834
      %v972 = vpop.f32.mrf.mxu0
      %v973 = vadd.f32 0.0, %v972
      %v974 = vpop.f32.mrf.mxu0
      %v975 = vadd.f32 0.0, %v974
      %976 = vmatprep.mubr.f32.mxu0 0.0
      %977 = vmatmul.mubr.f32.gmra.mxu0 %v837
      %v978 = vpop.f32.mrf.mxu0
      %v979 = vadd.f32 0.0, %v978
      %v980 = vpop.f32.mrf.mxu0
      %v981 = vadd.f32 0.0, %v980
      %982 = vmatprep.mubr.f32.mxu0 0.0
      %983 = vmatmul.mubr.f32.gmra.mxu0 %v840
      %v984 = vpop.f32.mrf.mxu0
      %v985 = vadd.f32 0.0, %v984
      %v986 = vpop.f32.mrf.mxu0
      %v987 = vadd.f32 0.0, %v986
      %988 = vmatprep.mubr.f32.mxu0 0.0
      %989 = vmatmul.mubr.f32.gmra.mxu0 %v843
      %v990 = vpop.f32.mrf.mxu0
      %v991 = vadd.f32 0.0, %v990
      %v992 = vpop.f32.mrf.mxu0
      %v993 = vadd.f32 0.0, %v992
      %994 = vmatprep.mubr.f32.mxu0 0.0
      %995 = vmatmul.mubr.f32.gmra.mxu0 %v846
      %v996 = vpop.f32.mrf.mxu0
      %v997 = vadd.f32 0.0, %v996
      %v998 = vpop.f32.mrf.mxu0
      %v999 = vadd.f32 0.0, %v998
      %1000 = vmatprep.mubr.f32.mxu0 0.0
      %1001 = vmatmul.mubr.f32.gmra.mxu0 %v849
      %v1002 = vpop.f32.mrf.mxu0
      %v1003 = vadd.f32 0.0, %v1002
      %v1004 = vpop.f32.mrf.mxu0
      %v1005 = vadd.f32 0.0, %v1004
      %1006 = vmatprep.mubr.f32.mxu0 0.0
      %1007 = vmatmul.mubr.f32.gmra.mxu0 %v852
      %v1008 = vpop.f32.mrf.mxu0
      %v1009 = vadd.f32 0.0, %v1008
      %v1010 = vpop.f32.mrf.mxu0
      %v1011 = vadd.f32 0.0, %v1010
      %1012 = vmatprep.mubr.f32.mxu0 0.0
      %1013 = vmatmul.mubr.f32.gmra.mxu0 %v855
      %v1014 = vpop.f32.mrf.mxu0
      %v1015 = vadd.f32 0.0, %v1014
      %v1016 = vpop.f32.mrf.mxu0
      %v1017 = vadd.f32 0.0, %v1016
      %1018 = vmatprep.mubr.f32.mxu0 0.0
      %1019 = vmatmul.mubr.f32.gmra.mxu0 %v858
      %v1020 = vpop.f32.mrf.mxu0
      %v1021 = vadd.f32 0.0, %v1020
      %v1022 = vpop.f32.mrf.mxu0
      %v1023 = vadd.f32 0.0, %v1022
      %1024 = vmatprep.mubr.f32.mxu0 0.0
      %1025 = vmatmul.mubr.f32.gmra.mxu0 %v861
      %v1026 = vpop.f32.mrf.mxu0
      %v1027 = vadd.f32 0.0, %v1026
      %v1028 = vpop.f32.mrf.mxu0
      %v1029 = vadd.f32 0.0, %v1028
      %1030 = vmatprep.mubr.f32.mxu0 0.0
      %1031 = vmatmul.mubr.f32.gmra.mxu0 %v864
      %v1032 = vpop.f32.mrf.mxu0
      %v1033 = vadd.f32 0.0, %v1032
      %v1034 = vpop.f32.mrf.mxu0
      %v1035 = vadd.f32 0.0, %v1034
      %1036 = vmatprep.mubr.f32.mxu0 0.0
      %1037 = vmatmul.mubr.f32.gmra.mxu0 %v867
      %v1038 = vpop.f32.mrf.mxu0
      %v1039 = vadd.f32 0.0, %v1038
      %v1040 = vpop.f32.mrf.mxu0
      %v1041 = vadd.f32 0.0, %v1040
      %1042 = vmatprep.mubr.f32.mxu0 0.0
      %1043 = vmatmul.mubr.f32.gmra.mxu0 %v870
      %v1044 = vpop.f32.mrf.mxu0
      %v1045 = vadd.f32 0.0, %v1044
      %v1046 = vpop.f32.mrf.mxu0
      %v1047 = vadd.f32 0.0, %v1046
      %1048 = vdwg.mxu0
      %v1049 = vadd.f32 %v690, %v943
      %v1050 = vadd.f32 %v692, %v945
      %v1051 = vadd.f32 %v696, %v949
      %v1052 = vadd.f32 %v698, %v951
      %v1053 = vadd.f32 %v702, %v955
      %v1054 = vadd.f32 %v704, %v957
      %v1055 = vadd.f32 %v708, %v961
      %v1056 = vadd.f32 %v710, %v963
      %v1057 = vadd.f32 %v714, %v967
      %v1058 = vadd.f32 %v716, %v969
      %v1059 = vadd.f32 %v720, %v973
      %v1060 = vadd.f32 %v722, %v975
      %v1061 = vadd.f32 %v726, %v979
      %v1062 = vadd.f32 %v728, %v981
      %v1063 = vadd.f32 %v732, %v985
      %v1064 = vadd.f32 %v734, %v987
      %v1065 = vadd.f32 %v738, %v991
      %v1066 = vadd.f32 %v740, %v993
      %v1067 = vadd.f32 %v744, %v997
      %v1068 = vadd.f32 %v746, %v999
      %v1069 = vadd.f32 %v750, %v1003
      %v1070 = vadd.f32 %v752, %v1005
      %v1071 = vadd.f32 %v756, %v1009
      %v1072 = vadd.f32 %v758, %v1011
      %v1073 = vadd.f32 %v762, %v1015
      %v1074 = vadd.f32 %v764, %v1017
      %v1075 = vadd.f32 %v768, %v1021
      %v1076 = vadd.f32 %v770, %v1023
      %v1077 = vadd.f32 %v774, %v1027
      %v1078 = vadd.f32 %v776, %v1029
      %v1079 = vadd.f32 %v780, %v1033
      %v1080 = vadd.f32 %v782, %v1035
      %v1081 = vadd.f32 %v786, %v1039
      %v1082 = vadd.f32 %v788, %v1041
      %v1083 = vadd.f32 %v792, %v1045
      %v1084 = vadd.f32 %v794, %v1047
      %v1085 = vld [vmem:[%s278 + $0x12] sm:$0xff]
      %v1086 = vld [vmem:[%s278 + $0x1a] sm:$0xff]
      %v1087 = vld [vmem:[%s278 + $0x22] sm:$0xff]
      %v1088 = vld [vmem:[%s278 + $0x2a] sm:$0xff]
      %v1089 = vld [vmem:[%s278 + $0x32] sm:$0xff]
      %v1090 = vld [vmem:[%s278 + $0x3a] sm:$0xff]
      %v1091 = vld [vmem:[%s278 + $0x42] sm:$0xff]
      %v1092 = vld [vmem:[%s278 + $0x4a] sm:$0xff]
      %v1093 = vld [vmem:[%s278 + $0x52] sm:$0xff]
      %v1094 = vld [vmem:[%s278 + $0x5a] sm:$0xff]
      %v1095 = vld [vmem:[%s278 + $0x62] sm:$0xff]
      %v1096 = vld [vmem:[%s278 + $0x6a] sm:$0xff]
      %v1097 = vld [vmem:[%s278 + $0x72] sm:$0xff]
      %v1098 = vld [vmem:[%s278 + $0x7a] sm:$0xff]
      %v1099 = vld [vmem:[%s278 + $0x82] sm:$0xff]
      %v1100 = vld [vmem:[%s278 + $0x8a] sm:$0xff]
      %v1101 = vld [vmem:[%s278 + $0x92] sm:$0xff]
      %v1102 = vld [vmem:[%s278 + $0x9a] sm:$0xff]
      %s1103 = scalar_lea.vmem %s1, 24
      %v1104 = vld [vmem:[%s1103] sm:$0xff]
      %v1106 = vcombine.high %v1104, %v1104
      %v1108 = vsel %vm330, %v1085, 0
      %v1111 = vsel %vm330, %v1086, 0
      %v1114 = vsel %vm330, %v1087, 0
      %v1117 = vsel %vm330, %v1088, 0
      %v1120 = vsel %vm330, %v1089, 0
      %v1123 = vsel %vm330, %v1090, 0
      %v1126 = vsel %vm330, %v1091, 0
      %v1129 = vsel %vm330, %v1092, 0
      %v1132 = vsel %vm330, %v1093, 0
      %v1135 = vsel %vm330, %v1094, 0
      %v1138 = vsel %vm330, %v1095, 0
      %v1141 = vsel %vm330, %v1096, 0
      %v1144 = vsel %vm330, %v1097, 0
      %v1147 = vsel %vm330, %v1098, 0
      %v1150 = vsel %vm330, %v1099, 0
      %v1153 = vsel %vm330, %v1100, 0
      %v1156 = vsel %vm330, %v1101, 0
      %v1159 = vsel %vm330, %v1102, 0
      %v1161 = vsel %vm385, %v1104, 0
      %v1163 = vsel %vm385, %v1106, 0
      %1165 = vmatprep.subr.mxu0 0.0
      %1166 = vmatpush1.msra.mxu0 0.0
      %1167 = vmatprep.subr.mxu0 0.0
      %1168 = vmatpush1.msra.mxu0 0.0
      %1169 = vmatprep.subr.mxu0 0.0
      %1170 = vmatpush1.msra.mxu0 0.0
      %1171 = vmatprep.subr.mxu0 0.0
      %1172 = vmatpush1.msra.mxu0 0.0
      %1173 = vmatprep.subr.mxu0 0.0
      %1174 = vmatpush1.msra.mxu0 0.0
      %1175 = vmatprep.subr.mxu0 0.0
      %1176 = vmatpush1.msra.mxu0 0.0
      %1177 = vmatprep.subr.mxu0 0.0
      %1178 = vmatpush1.msra.mxu0 0.0
      %1179 = vmatprep.subr.mxu0 0.0
      %1180 = vmatpush1.msra.mxu0 0.0
      %1181 = vmatprep.subr.mxu0 0.0
      %1182 = vmatpush1.msra.mxu0 0.0
      %1183 = vmatprep.subr.mxu0 0.0
      %1184 = vmatpush1.msra.mxu0 0.0
      %1185 = vmatprep.subr.mxu0 0.0
      %1186 = vmatpush1.msra.mxu0 0.0
      %1187 = vmatprep.subr.mxu0 0.0
      %1188 = vmatpush1.msra.mxu0 0.0
      %1189 = vmatprep.subr.mxu0 0.0
      %1190 = vmatpush1.msra.mxu0 0.0
      %1191 = vmatprep.subr.mxu0 0.0
      %1192 = vmatpush1.msra.mxu0 0.0
      %1193 = vmatprep.subr.mxu0 0.0
      %1194 = vmatpush1.msra.mxu0 0.0
      %1195 = vmatprep.subr.mxu0 %v1163
      %1196 = vmatpush1.msra.mxu0 %v1161
      %1197 = vmatprep.subr.mxu0 0.0
      %1198 = vmatpush2.msra.mxu0 0.0
      %1199 = vmatprep.subr.mxu0 0.0
      %1200 = vmatpush2.msra.mxu0 0.0
      %1201 = vmatprep.subr.mxu0 0.0
      %1202 = vmatpush2.msra.mxu0 0.0
      %1203 = vmatprep.subr.mxu0 0.0
      %1204 = vmatpush2.msra.mxu0 0.0
      %1205 = vmatprep.subr.mxu0 0.0
      %1206 = vmatpush2.msra.mxu0 0.0
      %1207 = vmatprep.subr.mxu0 0.0
      %1208 = vmatpush2.msra.mxu0 0.0
      %1209 = vmatprep.subr.mxu0 0.0
      %1210 = vmatpush2.msra.mxu0 0.0
      %1211 = vmatprep.subr.mxu0 0.0
      %1212 = vmatpush2.msra.mxu0 0.0
      %1213 = vmatprep.subr.mxu0 0.0
      %1214 = vmatpush2.msra.mxu0 0.0
      %1215 = vmatprep.subr.mxu0 0.0
      %1216 = vmatpush2.msra.mxu0 0.0
      %1217 = vmatprep.subr.mxu0 0.0
      %1218 = vmatpush2.msra.mxu0 0.0
      %1219 = vmatprep.subr.mxu0 0.0
      %1220 = vmatpush2.msra.mxu0 0.0
      %1221 = vmatprep.subr.mxu0 0.0
      %1222 = vmatpush2.msra.mxu0 0.0
      %1223 = vmatprep.subr.mxu0 0.0
      %1224 = vmatpush2.msra.mxu0 0.0
      %1225 = vmatprep.subr.mxu0 0.0
      %1226 = vmatpush2.msra.mxu0 0.0
      %1227 = vmatprep.subr.mxu0 0.0
      %1228 = vmatpush2.msra.mxu0 0.0
      %1229 = vmatprep.mubr.f32.mxu0 0.0
      %1230 = vmatmul.mubr.f32.gmra.mxu0 %v1108
      %v1231 = vpop.f32.mrf.mxu0
      %v1232 = vadd.f32 0.0, %v1231
      %v1233 = vpop.f32.mrf.mxu0
      %v1234 = vadd.f32 0.0, %v1233
      %1235 = vmatprep.mubr.f32.mxu0 0.0
      %1236 = vmatmul.mubr.f32.gmra.mxu0 %v1111
      %v1237 = vpop.f32.mrf.mxu0
      %v1238 = vadd.f32 0.0, %v1237
      %v1239 = vpop.f32.mrf.mxu0
      %v1240 = vadd.f32 0.0, %v1239
      %1241 = vmatprep.mubr.f32.mxu0 0.0
      %1242 = vmatmul.mubr.f32.gmra.mxu0 %v1114
      %v1243 = vpop.f32.mrf.mxu0
      %v1244 = vadd.f32 0.0, %v1243
      %v1245 = vpop.f32.mrf.mxu0
      %v1246 = vadd.f32 0.0, %v1245
      %1247 = vmatprep.mubr.f32.mxu0 0.0
      %1248 = vmatmul.mubr.f32.gmra.mxu0 %v1117
      %v1249 = vpop.f32.mrf.mxu0
      %v1250 = vadd.f32 0.0, %v1249
      %v1251 = vpop.f32.mrf.mxu0
      %v1252 = vadd.f32 0.0, %v1251
      %1253 = vmatprep.mubr.f32.mxu0 0.0
      %1254 = vmatmul.mubr.f32.gmra.mxu0 %v1120
      %v1255 = vpop.f32.mrf.mxu0
      %v1256 = vadd.f32 0.0, %v1255
      %v1257 = vpop.f32.mrf.mxu0
      %v1258 = vadd.f32 0.0, %v1257
      %1259 = vmatprep.mubr.f32.mxu0 0.0
      %1260 = vmatmul.mubr.f32.gmra.mxu0 %v1123
      %v1261 = vpop.f32.mrf.mxu0
      %v1262 = vadd.f32 0.0, %v1261
      %v1263 = vpop.f32.mrf.mxu0
      %v1264 = vadd.f32 0.0, %v1263
      %1265 = vmatprep.mubr.f32.mxu0 0.0
      %1266 = vmatmul.mubr.f32.gmra.mxu0 %v1126
      %v1267 = vpop.f32.mrf.mxu0
      %v1268 = vadd.f32 0.0, %v1267
      %v1269 = vpop.f32.mrf.mxu0
      %v1270 = vadd.f32 0.0, %v1269
      %1271 = vmatprep.mubr.f32.mxu0 0.0
      %1272 = vmatmul.mubr.f32.gmra.mxu0 %v1129
      %v1273 = vpop.f32.mrf.mxu0
      %v1274 = vadd.f32 0.0, %v1273
      %v1275 = vpop.f32.mrf.mxu0
      %v1276 = vadd.f32 0.0, %v1275
      %1277 = vmatprep.mubr.f32.mxu0 0.0
      %1278 = vmatmul.mubr.f32.gmra.mxu0 %v1132
      %v1279 = vpop.f32.mrf.mxu0
      %v1280 = vadd.f32 0.0, %v1279
      %v1281 = vpop.f32.mrf.mxu0
      %v1282 = vadd.f32 0.0, %v1281
      %1283 = vmatprep.mubr.f32.mxu0 0.0
      %1284 = vmatmul.mubr.f32.gmra.mxu0 %v1135
      %v1285 = vpop.f32.mrf.mxu0
      %v1286 = vadd.f32 0.0, %v1285
      %v1287 = vpop.f32.mrf.mxu0
      %v1288 = vadd.f32 0.0, %v1287
      %1289 = vmatprep.mubr.f32.mxu0 0.0
      %1290 = vmatmul.mubr.f32.gmra.mxu0 %v1138
      %v1291 = vpop.f32.mrf.mxu0
      %v1292 = vadd.f32 0.0, %v1291
      %v1293 = vpop.f32.mrf.mxu0
      %v1294 = vadd.f32 0.0, %v1293
      %1295 = vmatprep.mubr.f32.mxu0 0.0
      %1296 = vmatmul.mubr.f32.gmra.mxu0 %v1141
      %v1297 = vpop.f32.mrf.mxu0
      %v1298 = vadd.f32 0.0, %v1297
      %v1299 = vpop.f32.mrf.mxu0
      %v1300 = vadd.f32 0.0, %v1299
      %1301 = vmatprep.mubr.f32.mxu0 0.0
      %1302 = vmatmul.mubr.f32.gmra.mxu0 %v1144
      %v1303 = vpop.f32.mrf.mxu0
      %v1304 = vadd.f32 0.0, %v1303
      %v1305 = vpop.f32.mrf.mxu0
      %v1306 = vadd.f32 0.0, %v1305
      %1307 = vmatprep.mubr.f32.mxu0 0.0
      %1308 = vmatmul.mubr.f32.gmra.mxu0 %v1147
      %v1309 = vpop.f32.mrf.mxu0
      %v1310 = vadd.f32 0.0, %v1309
      %v1311 = vpop.f32.mrf.mxu0
      %v1312 = vadd.f32 0.0, %v1311
      %1313 = vmatprep.mubr.f32.mxu0 0.0
      %1314 = vmatmul.mubr.f32.gmra.mxu0 %v1150
      %v1315 = vpop.f32.mrf.mxu0
      %v1316 = vadd.f32 0.0, %v1315
      %v1317 = vpop.f32.mrf.mxu0
      %v1318 = vadd.f32 0.0, %v1317
      %1319 = vmatprep.mubr.f32.mxu0 0.0
      %1320 = vmatmul.mubr.f32.gmra.mxu0 %v1153
      %v1321 = vpop.f32.mrf.mxu0
      %v1322 = vadd.f32 0.0, %v1321
      %v1323 = vpop.f32.mrf.mxu0
      %v1324 = vadd.f32 0.0, %v1323
      %1325 = vmatprep.mubr.f32.mxu0 0.0
      %1326 = vmatmul.mubr.f32.gmra.mxu0 %v1156
      %v1327 = vpop.f32.mrf.mxu0
      %v1328 = vadd.f32 0.0, %v1327
      %v1329 = vpop.f32.mrf.mxu0
      %v1330 = vadd.f32 0.0, %v1329
      %1331 = vmatprep.mubr.f32.mxu0 0.0
      %1332 = vmatmul.mubr.f32.gmra.mxu0 %v1159
      %v1333 = vpop.f32.mrf.mxu0
      %v1334 = vadd.f32 0.0, %v1333
      %v1335 = vpop.f32.mrf.mxu0
      %v1336 = vadd.f32 0.0, %v1335
      %1337 = vdwg.mxu0
      %v1338 = vadd.f32 %v1049, %v1232
      %v1339 = vadd.f32 %v1050, %v1234
      %v1340 = vadd.f32 %v1051, %v1238
      %v1341 = vadd.f32 %v1052, %v1240
      %v1342 = vadd.f32 %v1053, %v1244
      %v1343 = vadd.f32 %v1054, %v1246
      %v1344 = vadd.f32 %v1055, %v1250
      %v1345 = vadd.f32 %v1056, %v1252
      %v1346 = vadd.f32 %v1057, %v1256
      %v1347 = vadd.f32 %v1058, %v1258
      %v1348 = vadd.f32 %v1059, %v1262
      %v1349 = vadd.f32 %v1060, %v1264
      %v1350 = vadd.f32 %v1061, %v1268
      %v1351 = vadd.f32 %v1062, %v1270
      %v1352 = vadd.f32 %v1063, %v1274
      %v1353 = vadd.f32 %v1064, %v1276
      %v1354 = vadd.f32 %v1065, %v1280
      %v1355 = vadd.f32 %v1066, %v1282
      %v1356 = vadd.f32 %v1067, %v1286
      %v1357 = vadd.f32 %v1068, %v1288
      %v1358 = vadd.f32 %v1069, %v1292
      %v1359 = vadd.f32 %v1070, %v1294
      %v1360 = vadd.f32 %v1071, %v1298
      %v1361 = vadd.f32 %v1072, %v1300
      %v1362 = vadd.f32 %v1073, %v1304
      %v1363 = vadd.f32 %v1074, %v1306
      %v1364 = vadd.f32 %v1075, %v1310
      %v1365 = vadd.f32 %v1076, %v1312
      %v1366 = vadd.f32 %v1077, %v1316
      %v1367 = vadd.f32 %v1078, %v1318
      %v1368 = vadd.f32 %v1079, %v1322
      %v1369 = vadd.f32 %v1080, %v1324
      %v1370 = vadd.f32 %v1081, %v1328
      %v1371 = vadd.f32 %v1082, %v1330
      %v1372 = vadd.f32 %v1083, %v1334
      %v1373 = vadd.f32 %v1084, %v1336
      %v1374 = vld [vmem:[%s278 + $0x13] sm:$0xff]
      %v1375 = vld [vmem:[%s278 + $0x1b] sm:$0xff]
      %v1376 = vld [vmem:[%s278 + $0x23] sm:$0xff]
      %v1377 = vld [vmem:[%s278 + $0x2b] sm:$0xff]
      %v1378 = vld [vmem:[%s278 + $0x33] sm:$0xff]
      %v1379 = vld [vmem:[%s278 + $0x3b] sm:$0xff]
      %v1380 = vld [vmem:[%s278 + $0x43] sm:$0xff]
      %v1381 = vld [vmem:[%s278 + $0x4b] sm:$0xff]
      %v1382 = vld [vmem:[%s278 + $0x53] sm:$0xff]
      %v1383 = vld [vmem:[%s278 + $0x5b] sm:$0xff]
      %v1384 = vld [vmem:[%s278 + $0x63] sm:$0xff]
      %v1385 = vld [vmem:[%s278 + $0x6b] sm:$0xff]
      %v1386 = vld [vmem:[%s278 + $0x73] sm:$0xff]
      %v1387 = vld [vmem:[%s278 + $0x7b] sm:$0xff]
      %v1388 = vld [vmem:[%s278 + $0x83] sm:$0xff]
      %v1389 = vld [vmem:[%s278 + $0x8b] sm:$0xff]
      %v1390 = vld [vmem:[%s278 + $0x93] sm:$0xff]
      %v1391 = vld [vmem:[%s278 + $0x9b] sm:$0xff]
      %s1392 = scalar_lea.vmem %s1, 32
      %v1393 = vld [vmem:[%s1392] sm:$0xff]
      %v1395 = vcombine.high %v1393, %v1393
      %v1397 = vsel %vm330, %v1374, 0
      %v1400 = vsel %vm330, %v1375, 0
      %v1403 = vsel %vm330, %v1376, 0
      %v1406 = vsel %vm330, %v1377, 0
      %v1409 = vsel %vm330, %v1378, 0
      %v1412 = vsel %vm330, %v1379, 0
      %v1415 = vsel %vm330, %v1380, 0
      %v1418 = vsel %vm330, %v1381, 0
      %v1421 = vsel %vm330, %v1382, 0
      %v1424 = vsel %vm330, %v1383, 0
      %v1427 = vsel %vm330, %v1384, 0
      %v1430 = vsel %vm330, %v1385, 0
      %v1433 = vsel %vm330, %v1386, 0
      %v1436 = vsel %vm330, %v1387, 0
      %v1439 = vsel %vm330, %v1388, 0
      %v1442 = vsel %vm330, %v1389, 0
      %v1445 = vsel %vm330, %v1390, 0
      %v1448 = vsel %vm330, %v1391, 0
      %v1450 = vsel %vm385, %v1393, 0
      %v1452 = vsel %vm385, %v1395, 0
      %1454 = vmatprep.subr.mxu0 0.0
      %1455 = vmatpush1.msra.mxu0 0.0
      %1456 = vmatprep.subr.mxu0 0.0
      %1457 = vmatpush1.msra.mxu0 0.0
      %1458 = vmatprep.subr.mxu0 0.0
      %1459 = vmatpush1.msra.mxu0 0.0
      %1460 = vmatprep.subr.mxu0 0.0
      %1461 = vmatpush1.msra.mxu0 0.0
      %1462 = vmatprep.subr.mxu0 0.0
      %1463 = vmatpush1.msra.mxu0 0.0
      %1464 = vmatprep.subr.mxu0 0.0
      %1465 = vmatpush1.msra.mxu0 0.0
      %1466 = vmatprep.subr.mxu0 0.0
      %1467 = vmatpush1.msra.mxu0 0.0
      %1468 = vmatprep.subr.mxu0 0.0
      %1469 = vmatpush1.msra.mxu0 0.0
      %1470 = vmatprep.subr.mxu0 0.0
      %1471 = vmatpush1.msra.mxu0 0.0
      %1472 = vmatprep.subr.mxu0 0.0
      %1473 = vmatpush1.msra.mxu0 0.0
      %1474 = vmatprep.subr.mxu0 0.0
      %1475 = vmatpush1.msra.mxu0 0.0
      %1476 = vmatprep.subr.mxu0 0.0
      %1477 = vmatpush1.msra.mxu0 0.0
      %1478 = vmatprep.subr.mxu0 0.0
      %1479 = vmatpush1.msra.mxu0 0.0
      %1480 = vmatprep.subr.mxu0 0.0
      %1481 = vmatpush1.msra.mxu0 0.0
      %1482 = vmatprep.subr.mxu0 0.0
      %1483 = vmatpush1.msra.mxu0 0.0
      %1484 = vmatprep.subr.mxu0 %v1452
      %1485 = vmatpush1.msra.mxu0 %v1450
      %1486 = vmatprep.subr.mxu0 0.0
      %1487 = vmatpush2.msra.mxu0 0.0
      %1488 = vmatprep.subr.mxu0 0.0
      %1489 = vmatpush2.msra.mxu0 0.0
      %1490 = vmatprep.subr.mxu0 0.0
      %1491 = vmatpush2.msra.mxu0 0.0
      %1492 = vmatprep.subr.mxu0 0.0
      %1493 = vmatpush2.msra.mxu0 0.0
      %1494 = vmatprep.subr.mxu0 0.0
      %1495 = vmatpush2.msra.mxu0 0.0
      %1496 = vmatprep.subr.mxu0 0.0
      %1497 = vmatpush2.msra.mxu0 0.0
      %1498 = vmatprep.subr.mxu0 0.0
      %1499 = vmatpush2.msra.mxu0 0.0
      %1500 = vmatprep.subr.mxu0 0.0
      %1501 = vmatpush2.msra.mxu0 0.0
      %1502 = vmatprep.subr.mxu0 0.0
      %1503 = vmatpush2.msra.mxu0 0.0
      %1504 = vmatprep.subr.mxu0 0.0
      %1505 = vmatpush2.msra.mxu0 0.0
      %1506 = vmatprep.subr.mxu0 0.0
      %1507 = vmatpush2.msra.mxu0 0.0
      %1508 = vmatprep.subr.mxu0 0.0
      %1509 = vmatpush2.msra.mxu0 0.0
      %1510 = vmatprep.subr.mxu0 0.0
      %1511 = vmatpush2.msra.mxu0 0.0
      %1512 = vmatprep.subr.mxu0 0.0
      %1513 = vmatpush2.msra.mxu0 0.0
      %1514 = vmatprep.subr.mxu0 0.0
      %1515 = vmatpush2.msra.mxu0 0.0
      %1516 = vmatprep.subr.mxu0 0.0
      %1517 = vmatpush2.msra.mxu0 0.0
      %1518 = vmatprep.mubr.f32.mxu0 0.0
      %1519 = vmatmul.mubr.f32.gmra.mxu0 %v1397
      %v1520 = vpop.f32.mrf.mxu0
      %v1521 = vadd.f32 0.0, %v1520
      %v1522 = vpop.f32.mrf.mxu0
      %v1523 = vadd.f32 0.0, %v1522
      %1524 = vmatprep.mubr.f32.mxu0 0.0
      %1525 = vmatmul.mubr.f32.gmra.mxu0 %v1400
      %v1526 = vpop.f32.mrf.mxu0
      %v1527 = vadd.f32 0.0, %v1526
      %v1528 = vpop.f32.mrf.mxu0
      %v1529 = vadd.f32 0.0, %v1528
      %1530 = vmatprep.mubr.f32.mxu0 0.0
      %1531 = vmatmul.mubr.f32.gmra.mxu0 %v1403
      %v1532 = vpop.f32.mrf.mxu0
      %v1533 = vadd.f32 0.0, %v1532
      %v1534 = vpop.f32.mrf.mxu0
      %v1535 = vadd.f32 0.0, %v1534
      %1536 = vmatprep.mubr.f32.mxu0 0.0
      %1537 = vmatmul.mubr.f32.gmra.mxu0 %v1406
      %v1538 = vpop.f32.mrf.mxu0
      %v1539 = vadd.f32 0.0, %v1538
      %v1540 = vpop.f32.mrf.mxu0
      %v1541 = vadd.f32 0.0, %v1540
      %1542 = vmatprep.mubr.f32.mxu0 0.0
      %1543 = vmatmul.mubr.f32.gmra.mxu0 %v1409
      %v1544 = vpop.f32.mrf.mxu0
      %v1545 = vadd.f32 0.0, %v1544
      %v1546 = vpop.f32.mrf.mxu0
      %v1547 = vadd.f32 0.0, %v1546
      %1548 = vmatprep.mubr.f32.mxu0 0.0
      %1549 = vmatmul.mubr.f32.gmra.mxu0 %v1412
      %v1550 = vpop.f32.mrf.mxu0
      %v1551 = vadd.f32 0.0, %v1550
      %v1552 = vpop.f32.mrf.mxu0
      %v1553 = vadd.f32 0.0, %v1552
      %1554 = vmatprep.mubr.f32.mxu0 0.0
      %1555 = vmatmul.mubr.f32.gmra.mxu0 %v1415
      %v1556 = vpop.f32.mrf.mxu0
      %v1557 = vadd.f32 0.0, %v1556
      %v1558 = vpop.f32.mrf.mxu0
      %v1559 = vadd.f32 0.0, %v1558
      %1560 = vmatprep.mubr.f32.mxu0 0.0
      %1561 = vmatmul.mubr.f32.gmra.mxu0 %v1418
      %v1562 = vpop.f32.mrf.mxu0
      %v1563 = vadd.f32 0.0, %v1562
      %v1564 = vpop.f32.mrf.mxu0
      %v1565 = vadd.f32 0.0, %v1564
      %1566 = vmatprep.mubr.f32.mxu0 0.0
      %1567 = vmatmul.mubr.f32.gmra.mxu0 %v1421
      %v1568 = vpop.f32.mrf.mxu0
      %v1569 = vadd.f32 0.0, %v1568
      %v1570 = vpop.f32.mrf.mxu0
      %v1571 = vadd.f32 0.0, %v1570
      %1572 = vmatprep.mubr.f32.mxu0 0.0
      %1573 = vmatmul.mubr.f32.gmra.mxu0 %v1424
      %v1574 = vpop.f32.mrf.mxu0
      %v1575 = vadd.f32 0.0, %v1574
      %v1576 = vpop.f32.mrf.mxu0
      %v1577 = vadd.f32 0.0, %v1576
      %1578 = vmatprep.mubr.f32.mxu0 0.0
      %1579 = vmatmul.mubr.f32.gmra.mxu0 %v1427
      %v1580 = vpop.f32.mrf.mxu0
      %v1581 = vadd.f32 0.0, %v1580
      %v1582 = vpop.f32.mrf.mxu0
      %v1583 = vadd.f32 0.0, %v1582
      %1584 = vmatprep.mubr.f32.mxu0 0.0
      %1585 = vmatmul.mubr.f32.gmra.mxu0 %v1430
      %v1586 = vpop.f32.mrf.mxu0
      %v1587 = vadd.f32 0.0, %v1586
      %v1588 = vpop.f32.mrf.mxu0
      %v1589 = vadd.f32 0.0, %v1588
      %1590 = vmatprep.mubr.f32.mxu0 0.0
      %1591 = vmatmul.mubr.f32.gmra.mxu0 %v1433
      %v1592 = vpop.f32.mrf.mxu0
      %v1593 = vadd.f32 0.0, %v1592
      %v1594 = vpop.f32.mrf.mxu0
      %v1595 = vadd.f32 0.0, %v1594
      %1596 = vmatprep.mubr.f32.mxu0 0.0
      %1597 = vmatmul.mubr.f32.gmra.mxu0 %v1436
      %v1598 = vpop.f32.mrf.mxu0
      %v1599 = vadd.f32 0.0, %v1598
      %v1600 = vpop.f32.mrf.mxu0
      %v1601 = vadd.f32 0.0, %v1600
      %1602 = vmatprep.mubr.f32.mxu0 0.0
      %1603 = vmatmul.mubr.f32.gmra.mxu0 %v1439
      %v1604 = vpop.f32.mrf.mxu0
      %v1605 = vadd.f32 0.0, %v1604
      %v1606 = vpop.f32.mrf.mxu0
      %v1607 = vadd.f32 0.0, %v1606
      %1608 = vmatprep.mubr.f32.mxu0 0.0
      %1609 = vmatmul.mubr.f32.gmra.mxu0 %v1442
      %v1610 = vpop.f32.mrf.mxu0
      %v1611 = vadd.f32 0.0, %v1610
      %v1612 = vpop.f32.mrf.mxu0
      %v1613 = vadd.f32 0.0, %v1612
      %1614 = vmatprep.mubr.f32.mxu0 0.0
      %1615 = vmatmul.mubr.f32.gmra.mxu0 %v1445
      %v1616 = vpop.f32.mrf.mxu0
      %v1617 = vadd.f32 0.0, %v1616
      %v1618 = vpop.f32.mrf.mxu0
      %v1619 = vadd.f32 0.0, %v1618
      %1620 = vmatprep.mubr.f32.mxu0 0.0
      %1621 = vmatmul.mubr.f32.gmra.mxu0 %v1448
      %v1622 = vpop.f32.mrf.mxu0
      %v1623 = vadd.f32 0.0, %v1622
      %v1624 = vpop.f32.mrf.mxu0
      %v1625 = vadd.f32 0.0, %v1624
      %1626 = vdwg.mxu0
      %v1627 = vadd.f32 %v1338, %v1521
      %v1628 = vadd.f32 %v1339, %v1523
      %v1629 = vadd.f32 %v1340, %v1527
      %v1630 = vadd.f32 %v1341, %v1529
      %v1631 = vadd.f32 %v1342, %v1533
      %v1632 = vadd.f32 %v1343, %v1535
      %v1633 = vadd.f32 %v1344, %v1539
      %v1634 = vadd.f32 %v1345, %v1541
      %v1635 = vadd.f32 %v1346, %v1545
      %v1636 = vadd.f32 %v1347, %v1547
      %v1637 = vadd.f32 %v1348, %v1551
      %v1638 = vadd.f32 %v1349, %v1553
      %v1639 = vadd.f32 %v1350, %v1557
      %v1640 = vadd.f32 %v1351, %v1559
      %v1641 = vadd.f32 %v1352, %v1563
      %v1642 = vadd.f32 %v1353, %v1565
      %v1643 = vadd.f32 %v1354, %v1569
      %v1644 = vadd.f32 %v1355, %v1571
      %v1645 = vadd.f32 %v1356, %v1575
      %v1646 = vadd.f32 %v1357, %v1577
      %v1647 = vadd.f32 %v1358, %v1581
      %v1648 = vadd.f32 %v1359, %v1583
      %v1649 = vadd.f32 %v1360, %v1587
      %v1650 = vadd.f32 %v1361, %v1589
      %v1651 = vadd.f32 %v1362, %v1593
      %v1652 = vadd.f32 %v1363, %v1595
      %v1653 = vadd.f32 %v1364, %v1599
      %v1654 = vadd.f32 %v1365, %v1601
      %v1655 = vadd.f32 %v1366, %v1605
      %v1656 = vadd.f32 %v1367, %v1607
      %v1657 = vadd.f32 %v1368, %v1611
      %v1658 = vadd.f32 %v1369, %v1613
      %v1659 = vadd.f32 %v1370, %v1617
      %v1660 = vadd.f32 %v1371, %v1619
      %v1661 = vadd.f32 %v1372, %v1623
      %v1662 = vadd.f32 %v1373, %v1625
      %v1663 = vld [vmem:[%s278 + $0x14] sm:$0xff]
      %v1664 = vld [vmem:[%s278 + $0x1c] sm:$0xff]
      %v1665 = vld [vmem:[%s278 + $0x24] sm:$0xff]
      %v1666 = vld [vmem:[%s278 + $0x2c] sm:$0xff]
      %v1667 = vld [vmem:[%s278 + $0x34] sm:$0xff]
      %v1668 = vld [vmem:[%s278 + $0x3c] sm:$0xff]
      %v1669 = vld [vmem:[%s278 + $0x44] sm:$0xff]
      %v1670 = vld [vmem:[%s278 + $0x4c] sm:$0xff]
      %v1671 = vld [vmem:[%s278 + $0x54] sm:$0xff]
      %v1672 = vld [vmem:[%s278 + $0x5c] sm:$0xff]
      %v1673 = vld [vmem:[%s278 + $0x64] sm:$0xff]
      %v1674 = vld [vmem:[%s278 + $0x6c] sm:$0xff]
      %v1675 = vld [vmem:[%s278 + $0x74] sm:$0xff]
      %v1676 = vld [vmem:[%s278 + $0x7c] sm:$0xff]
      %v1677 = vld [vmem:[%s278 + $0x84] sm:$0xff]
      %v1678 = vld [vmem:[%s278 + $0x8c] sm:$0xff]
      %v1679 = vld [vmem:[%s278 + $0x94] sm:$0xff]
      %v1680 = vld [vmem:[%s278 + $0x9c] sm:$0xff]
      %s1681 = scalar_lea.vmem %s1, 40
      %v1682 = vld [vmem:[%s1681] sm:$0xff]
      %v1684 = vcombine.high %v1682, %v1682
      %v1686 = vsel %vm330, %v1663, 0
      %v1689 = vsel %vm330, %v1664, 0
      %v1692 = vsel %vm330, %v1665, 0
      %v1695 = vsel %vm330, %v1666, 0
      %v1698 = vsel %vm330, %v1667, 0
      %v1701 = vsel %vm330, %v1668, 0
      %v1704 = vsel %vm330, %v1669, 0
      %v1707 = vsel %vm330, %v1670, 0
      %v1710 = vsel %vm330, %v1671, 0
      %v1713 = vsel %vm330, %v1672, 0
      %v1716 = vsel %vm330, %v1673, 0
      %v1719 = vsel %vm330, %v1674, 0
      %v1722 = vsel %vm330, %v1675, 0
      %v1725 = vsel %vm330, %v1676, 0
      %v1728 = vsel %vm330, %v1677, 0
      %v1731 = vsel %vm330, %v1678, 0
      %v1734 = vsel %vm330, %v1679, 0
      %v1737 = vsel %vm330, %v1680, 0
      %v1739 = vsel %vm385, %v1682, 0
      %v1741 = vsel %vm385, %v1684, 0
      %1743 = vmatprep.subr.mxu0 0.0
      %1744 = vmatpush1.msra.mxu0 0.0
      %1745 = vmatprep.subr.mxu0 0.0
      %1746 = vmatpush1.msra.mxu0 0.0
      %1747 = vmatprep.subr.mxu0 0.0
      %1748 = vmatpush1.msra.mxu0 0.0
      %1749 = vmatprep.subr.mxu0 0.0
      %1750 = vmatpush1.msra.mxu0 0.0
      %1751 = vmatprep.subr.mxu0 0.0
      %1752 = vmatpush1.msra.mxu0 0.0
      %1753 = vmatprep.subr.mxu0 0.0
      %1754 = vmatpush1.msra.mxu0 0.0
      %1755 = vmatprep.subr.mxu0 0.0
      %1756 = vmatpush1.msra.mxu0 0.0
      %1757 = vmatprep.subr.mxu0 0.0
      %1758 = vmatpush1.msra.mxu0 0.0
      %1759 = vmatprep.subr.mxu0 0.0
      %1760 = vmatpush1.msra.mxu0 0.0
      %1761 = vmatprep.subr.mxu0 0.0
      %1762 = vmatpush1.msra.mxu0 0.0
      %1763 = vmatprep.subr.mxu0 0.0
      %1764 = vmatpush1.msra.mxu0 0.0
      %1765 = vmatprep.subr.mxu0 0.0
      %1766 = vmatpush1.msra.mxu0 0.0
      %1767 = vmatprep.subr.mxu0 0.0
      %1768 = vmatpush1.msra.mxu0 0.0
      %1769 = vmatprep.subr.mxu0 0.0
      %1770 = vmatpush1.msra.mxu0 0.0
      %1771 = vmatprep.subr.mxu0 0.0
      %1772 = vmatpush1.msra.mxu0 0.0
      %1773 = vmatprep.subr.mxu0 %v1741
      %1774 = vmatpush1.msra.mxu0 %v1739
      %1775 = vmatprep.subr.mxu0 0.0
      %1776 = vmatpush2.msra.mxu0 0.0
      %1777 = vmatprep.subr.mxu0 0.0
      %1778 = vmatpush2.msra.mxu0 0.0
      %1779 = vmatprep.subr.mxu0 0.0
      %1780 = vmatpush2.msra.mxu0 0.0
      %1781 = vmatprep.subr.mxu0 0.0
      %1782 = vmatpush2.msra.mxu0 0.0
      %1783 = vmatprep.subr.mxu0 0.0
      %1784 = vmatpush2.msra.mxu0 0.0
      %1785 = vmatprep.subr.mxu0 0.0
      %1786 = vmatpush2.msra.mxu0 0.0
      %1787 = vmatprep.subr.mxu0 0.0
      %1788 = vmatpush2.msra.mxu0 0.0
      %1789 = vmatprep.subr.mxu0 0.0
      %1790 = vmatpush2.msra.mxu0 0.0
      %1791 = vmatprep.subr.mxu0 0.0
      %1792 = vmatpush2.msra.mxu0 0.0
      %1793 = vmatprep.subr.mxu0 0.0
      %1794 = vmatpush2.msra.mxu0 0.0
      %1795 = vmatprep.subr.mxu0 0.0
      %1796 = vmatpush2.msra.mxu0 0.0
      %1797 = vmatprep.subr.mxu0 0.0
      %1798 = vmatpush2.msra.mxu0 0.0
      %1799 = vmatprep.subr.mxu0 0.0
      %1800 = vmatpush2.msra.mxu0 0.0
      %1801 = vmatprep.subr.mxu0 0.0
      %1802 = vmatpush2.msra.mxu0 0.0
      %1803 = vmatprep.subr.mxu0 0.0
      %1804 = vmatpush2.msra.mxu0 0.0
      %1805 = vmatprep.subr.mxu0 0.0
      %1806 = vmatpush2.msra.mxu0 0.0
      %1807 = vmatprep.mubr.f32.mxu0 0.0
      %1808 = vmatmul.mubr.f32.gmra.mxu0 %v1686
      %v1809 = vpop.f32.mrf.mxu0
      %v1810 = vadd.f32 0.0, %v1809
      %v1811 = vpop.f32.mrf.mxu0
      %v1812 = vadd.f32 0.0, %v1811
      %1813 = vmatprep.mubr.f32.mxu0 0.0
      %1814 = vmatmul.mubr.f32.gmra.mxu0 %v1689
      %v1815 = vpop.f32.mrf.mxu0
      %v1816 = vadd.f32 0.0, %v1815
      %v1817 = vpop.f32.mrf.mxu0
      %v1818 = vadd.f32 0.0, %v1817
      %1819 = vmatprep.mubr.f32.mxu0 0.0
      %1820 = vmatmul.mubr.f32.gmra.mxu0 %v1692
      %v1821 = vpop.f32.mrf.mxu0
      %v1822 = vadd.f32 0.0, %v1821
      %v1823 = vpop.f32.mrf.mxu0
      %v1824 = vadd.f32 0.0, %v1823
      %1825 = vmatprep.mubr.f32.mxu0 0.0
      %1826 = vmatmul.mubr.f32.gmra.mxu0 %v1695
      %v1827 = vpop.f32.mrf.mxu0
      %v1828 = vadd.f32 0.0, %v1827
      %v1829 = vpop.f32.mrf.mxu0
      %v1830 = vadd.f32 0.0, %v1829
      %1831 = vmatprep.mubr.f32.mxu0 0.0
      %1832 = vmatmul.mubr.f32.gmra.mxu0 %v1698
      %v1833 = vpop.f32.mrf.mxu0
      %v1834 = vadd.f32 0.0, %v1833
      %v1835 = vpop.f32.mrf.mxu0
      %v1836 = vadd.f32 0.0, %v1835
      %1837 = vmatprep.mubr.f32.mxu0 0.0
      %1838 = vmatmul.mubr.f32.gmra.mxu0 %v1701
      %v1839 = vpop.f32.mrf.mxu0
      %v1840 = vadd.f32 0.0, %v1839
      %v1841 = vpop.f32.mrf.mxu0
      %v1842 = vadd.f32 0.0, %v1841
      %1843 = vmatprep.mubr.f32.mxu0 0.0
      %1844 = vmatmul.mubr.f32.gmra.mxu0 %v1704
      %v1845 = vpop.f32.mrf.mxu0
      %v1846 = vadd.f32 0.0, %v1845
      %v1847 = vpop.f32.mrf.mxu0
      %v1848 = vadd.f32 0.0, %v1847
      %1849 = vmatprep.mubr.f32.mxu0 0.0
      %1850 = vmatmul.mubr.f32.gmra.mxu0 %v1707
      %v1851 = vpop.f32.mrf.mxu0
      %v1852 = vadd.f32 0.0, %v1851
      %v1853 = vpop.f32.mrf.mxu0
      %v1854 = vadd.f32 0.0, %v1853
      %1855 = vmatprep.mubr.f32.mxu0 0.0
      %1856 = vmatmul.mubr.f32.gmra.mxu0 %v1710
      %v1857 = vpop.f32.mrf.mxu0
      %v1858 = vadd.f32 0.0, %v1857
      %v1859 = vpop.f32.mrf.mxu0
      %v1860 = vadd.f32 0.0, %v1859
      %1861 = vmatprep.mubr.f32.mxu0 0.0
      %1862 = vmatmul.mubr.f32.gmra.mxu0 %v1713
      %v1863 = vpop.f32.mrf.mxu0
      %v1864 = vadd.f32 0.0, %v1863
      %v1865 = vpop.f32.mrf.mxu0
      %v1866 = vadd.f32 0.0, %v1865
      %1867 = vmatprep.mubr.f32.mxu0 0.0
      %1868 = vmatmul.mubr.f32.gmra.mxu0 %v1716
      %v1869 = vpop.f32.mrf.mxu0
      %v1870 = vadd.f32 0.0, %v1869
      %v1871 = vpop.f32.mrf.mxu0
      %v1872 = vadd.f32 0.0, %v1871
      %1873 = vmatprep.mubr.f32.mxu0 0.0
      %1874 = vmatmul.mubr.f32.gmra.mxu0 %v1719
      %v1875 = vpop.f32.mrf.mxu0
      %v1876 = vadd.f32 0.0, %v1875
      %v1877 = vpop.f32.mrf.mxu0
      %v1878 = vadd.f32 0.0, %v1877
      %1879 = vmatprep.mubr.f32.mxu0 0.0
      %1880 = vmatmul.mubr.f32.gmra.mxu0 %v1722
      %v1881 = vpop.f32.mrf.mxu0
      %v1882 = vadd.f32 0.0, %v1881
      %v1883 = vpop.f32.mrf.mxu0
      %v1884 = vadd.f32 0.0, %v1883
      %1885 = vmatprep.mubr.f32.mxu0 0.0
      %1886 = vmatmul.mubr.f32.gmra.mxu0 %v1725
      %v1887 = vpop.f32.mrf.mxu0
      %v1888 = vadd.f32 0.0, %v1887
      %v1889 = vpop.f32.mrf.mxu0
      %v1890 = vadd.f32 0.0, %v1889
      %1891 = vmatprep.mubr.f32.mxu0 0.0
      %1892 = vmatmul.mubr.f32.gmra.mxu0 %v1728
      %v1893 = vpop.f32.mrf.mxu0
      %v1894 = vadd.f32 0.0, %v1893
      %v1895 = vpop.f32.mrf.mxu0
      %v1896 = vadd.f32 0.0, %v1895
      %1897 = vmatprep.mubr.f32.mxu0 0.0
      %1898 = vmatmul.mubr.f32.gmra.mxu0 %v1731
      %v1899 = vpop.f32.mrf.mxu0
      %v1900 = vadd.f32 0.0, %v1899
      %v1901 = vpop.f32.mrf.mxu0
      %v1902 = vadd.f32 0.0, %v1901
      %1903 = vmatprep.mubr.f32.mxu0 0.0
      %1904 = vmatmul.mubr.f32.gmra.mxu0 %v1734
      %v1905 = vpop.f32.mrf.mxu0
      %v1906 = vadd.f32 0.0, %v1905
      %v1907 = vpop.f32.mrf.mxu0
      %v1908 = vadd.f32 0.0, %v1907
      %1909 = vmatprep.mubr.f32.mxu0 0.0
      %1910 = vmatmul.mubr.f32.gmra.mxu0 %v1737
      %v1911 = vpop.f32.mrf.mxu0
      %v1912 = vadd.f32 0.0, %v1911
      %v1913 = vpop.f32.mrf.mxu0
      %v1914 = vadd.f32 0.0, %v1913
      %1915 = vdwg.mxu0
      %v1916 = vadd.f32 %v1627, %v1810
      %v1917 = vadd.f32 %v1628, %v1812
      %v1918 = vadd.f32 %v1629, %v1816
      %v1919 = vadd.f32 %v1630, %v1818
      %v1920 = vadd.f32 %v1631, %v1822
      %v1921 = vadd.f32 %v1632, %v1824
      %v1922 = vadd.f32 %v1633, %v1828
      %v1923 = vadd.f32 %v1634, %v1830
      %v1924 = vadd.f32 %v1635, %v1834
      %v1925 = vadd.f32 %v1636, %v1836
      %v1926 = vadd.f32 %v1637, %v1840
      %v1927 = vadd.f32 %v1638, %v1842
      %v1928 = vadd.f32 %v1639, %v1846
      %v1929 = vadd.f32 %v1640, %v1848
      %v1930 = vadd.f32 %v1641, %v1852
      %v1931 = vadd.f32 %v1642, %v1854
      %v1932 = vadd.f32 %v1643, %v1858
      %v1933 = vadd.f32 %v1644, %v1860
      %v1934 = vadd.f32 %v1645, %v1864
      %v1935 = vadd.f32 %v1646, %v1866
      %v1936 = vadd.f32 %v1647, %v1870
      %v1937 = vadd.f32 %v1648, %v1872
      %v1938 = vadd.f32 %v1649, %v1876
      %v1939 = vadd.f32 %v1650, %v1878
      %v1940 = vadd.f32 %v1651, %v1882
      %v1941 = vadd.f32 %v1652, %v1884
      %v1942 = vadd.f32 %v1653, %v1888
      %v1943 = vadd.f32 %v1654, %v1890
      %v1944 = vadd.f32 %v1655, %v1894
      %v1945 = vadd.f32 %v1656, %v1896
      %v1946 = vadd.f32 %v1657, %v1900
      %v1947 = vadd.f32 %v1658, %v1902
      %v1948 = vadd.f32 %v1659, %v1906
      %v1949 = vadd.f32 %v1660, %v1908
      %v1950 = vadd.f32 %v1661, %v1912
      %v1951 = vadd.f32 %v1662, %v1914
      %v1952 = vld [vmem:[%s278 + $0x24] sm:$0xff]
      %v1953 = vld [vmem:[%s278 + $0x2c] sm:$0xff]
      %v1954 = vld [vmem:[%s278 + $0x34] sm:$0xff]
      %v1955 = vld [vmem:[%s278 + $0x3c] sm:$0xff]
      %v1956 = vld [vmem:[%s278 + $0x44] sm:$0xff]
      %v1957 = vld [vmem:[%s278 + $0x4c] sm:$0xff]
      %v1958 = vld [vmem:[%s278 + $0x54] sm:$0xff]
      %v1959 = vld [vmem:[%s278 + $0x5c] sm:$0xff]
      %v1960 = vld [vmem:[%s278 + $0x64] sm:$0xff]
      %v1961 = vld [vmem:[%s278 + $0x6c] sm:$0xff]
      %v1962 = vld [vmem:[%s278 + $0x74] sm:$0xff]
      %v1963 = vld [vmem:[%s278 + $0x7c] sm:$0xff]
      %v1964 = vld [vmem:[%s278 + $0x84] sm:$0xff]
      %v1965 = vld [vmem:[%s278 + $0x8c] sm:$0xff]
      %v1966 = vld [vmem:[%s278 + $0x94] sm:$0xff]
      %v1967 = vld [vmem:[%s278 + $0x9c] sm:$0xff]
      %v1968 = vld [vmem:[%s278 + $0xa4] sm:$0xff]
      %v1969 = vld [vmem:[%s278 + $0xac] sm:$0xff]
      %s1970 = scalar_lea.vmem %s1, 48
      %v1971 = vld [vmem:[%s1970] sm:$0xff]
      %v1973 = vcombine.high %v1971, %v1971
      %v1975 = vsel %vm330, %v1952, 0
      %v1978 = vsel %vm330, %v1953, 0
      %v1981 = vsel %vm330, %v1954, 0
      %v1984 = vsel %vm330, %v1955, 0
      %v1987 = vsel %vm330, %v1956, 0
      %v1990 = vsel %vm330, %v1957, 0
      %v1993 = vsel %vm330, %v1958, 0
      %v1996 = vsel %vm330, %v1959, 0
      %v1999 = vsel %vm330, %v1960, 0
      %v2002 = vsel %vm330, %v1961, 0
      %v2005 = vsel %vm330, %v1962, 0
      %v2008 = vsel %vm330, %v1963, 0
      %v2011 = vsel %vm330, %v1964, 0
      %v2014 = vsel %vm330, %v1965, 0
      %v2017 = vsel %vm330, %v1966, 0
      %v2020 = vsel %vm330, %v1967, 0
      %v2023 = vsel %vm330, %v1968, 0
      %v2026 = vsel %vm330, %v1969, 0
      %v2028 = vsel %vm385, %v1971, 0
      %v2030 = vsel %vm385, %v1973, 0
      %2032 = vmatprep.subr.mxu0 0.0
      %2033 = vmatpush1.msra.mxu0 0.0
      %2034 = vmatprep.subr.mxu0 0.0
      %2035 = vmatpush1.msra.mxu0 0.0
      %2036 = vmatprep.subr.mxu0 0.0
      %2037 = vmatpush1.msra.mxu0 0.0
      %2038 = vmatprep.subr.mxu0 0.0
      %2039 = vmatpush1.msra.mxu0 0.0
      %2040 = vmatprep.subr.mxu0 0.0
      %2041 = vmatpush1.msra.mxu0 0.0
      %2042 = vmatprep.subr.mxu0 0.0
      %2043 = vmatpush1.msra.mxu0 0.0
      %2044 = vmatprep.subr.mxu0 0.0
      %2045 = vmatpush1.msra.mxu0 0.0
      %2046 = vmatprep.subr.mxu0 0.0
      %2047 = vmatpush1.msra.mxu0 0.0
      %2048 = vmatprep.subr.mxu0 0.0
      %2049 = vmatpush1.msra.mxu0 0.0
      %2050 = vmatprep.subr.mxu0 0.0
      %2051 = vmatpush1.msra.mxu0 0.0
      %2052 = vmatprep.subr.mxu0 0.0
      %2053 = vmatpush1.msra.mxu0 0.0
      %2054 = vmatprep.subr.mxu0 0.0
      %2055 = vmatpush1.msra.mxu0 0.0
      %2056 = vmatprep.subr.mxu0 0.0
      %2057 = vmatpush1.msra.mxu0 0.0
      %2058 = vmatprep.subr.mxu0 0.0
      %2059 = vmatpush1.msra.mxu0 0.0
      %2060 = vmatprep.subr.mxu0 0.0
      %2061 = vmatpush1.msra.mxu0 0.0
      %2062 = vmatprep.subr.mxu0 %v2030
      %2063 = vmatpush1.msra.mxu0 %v2028
      %2064 = vmatprep.subr.mxu0 0.0
      %2065 = vmatpush2.msra.mxu0 0.0
      %2066 = vmatprep.subr.mxu0 0.0
      %2067 = vmatpush2.msra.mxu0 0.0
      %2068 = vmatprep.subr.mxu0 0.0
      %2069 = vmatpush2.msra.mxu0 0.0
      %2070 = vmatprep.subr.mxu0 0.0
      %2071 = vmatpush2.msra.mxu0 0.0
      %2072 = vmatprep.subr.mxu0 0.0
      %2073 = vmatpush2.msra.mxu0 0.0
      %2074 = vmatprep.subr.mxu0 0.0
      %2075 = vmatpush2.msra.mxu0 0.0
      %2076 = vmatprep.subr.mxu0 0.0
      %2077 = vmatpush2.msra.mxu0 0.0
      %2078 = vmatprep.subr.mxu0 0.0
      %2079 = vmatpush2.msra.mxu0 0.0
      %2080 = vmatprep.subr.mxu0 0.0
      %2081 = vmatpush2.msra.mxu0 0.0
      %2082 = vmatprep.subr.mxu0 0.0
      %2083 = vmatpush2.msra.mxu0 0.0
      %2084 = vmatprep.subr.mxu0 0.0
      %2085 = vmatpush2.msra.mxu0 0.0
      %2086 = vmatprep.subr.mxu0 0.0
      %2087 = vmatpush2.msra.mxu0 0.0
      %2088 = vmatprep.subr.mxu0 0.0
      %2089 = vmatpush2.msra.mxu0 0.0
      %2090 = vmatprep.subr.mxu0 0.0
      %2091 = vmatpush2.msra.mxu0 0.0
      %2092 = vmatprep.subr.mxu0 0.0
      %2093 = vmatpush2.msra.mxu0 0.0
      %2094 = vmatprep.subr.mxu0 0.0
      %2095 = vmatpush2.msra.mxu0 0.0
      %2096 = vmatprep.mubr.f32.mxu0 0.0
      %2097 = vmatmul.mubr.f32.gmra.mxu0 %v1975
      %v2098 = vpop.f32.mrf.mxu0
      %v2099 = vadd.f32 0.0, %v2098
      %v2100 = vpop.f32.mrf.mxu0
      %v2101 = vadd.f32 0.0, %v2100
      %2102 = vmatprep.mubr.f32.mxu0 0.0
      %2103 = vmatmul.mubr.f32.gmra.mxu0 %v1978
      %v2104 = vpop.f32.mrf.mxu0
      %v2105 = vadd.f32 0.0, %v2104
      %v2106 = vpop.f32.mrf.mxu0
      %v2107 = vadd.f32 0.0, %v2106
      %2108 = vmatprep.mubr.f32.mxu0 0.0
      %2109 = vmatmul.mubr.f32.gmra.mxu0 %v1981
      %v2110 = vpop.f32.mrf.mxu0
      %v2111 = vadd.f32 0.0, %v2110
      %v2112 = vpop.f32.mrf.mxu0
      %v2113 = vadd.f32 0.0, %v2112
      %2114 = vmatprep.mubr.f32.mxu0 0.0
      %2115 = vmatmul.mubr.f32.gmra.mxu0 %v1984
      %v2116 = vpop.f32.mrf.mxu0
      %v2117 = vadd.f32 0.0, %v2116
      %v2118 = vpop.f32.mrf.mxu0
      %v2119 = vadd.f32 0.0, %v2118
      %2120 = vmatprep.mubr.f32.mxu0 0.0
      %2121 = vmatmul.mubr.f32.gmra.mxu0 %v1987
      %v2122 = vpop.f32.mrf.mxu0
      %v2123 = vadd.f32 0.0, %v2122
      %v2124 = vpop.f32.mrf.mxu0
      %v2125 = vadd.f32 0.0, %v2124
      %2126 = vmatprep.mubr.f32.mxu0 0.0
      %2127 = vmatmul.mubr.f32.gmra.mxu0 %v1990
      %v2128 = vpop.f32.mrf.mxu0
      %v2129 = vadd.f32 0.0, %v2128
      %v2130 = vpop.f32.mrf.mxu0
      %v2131 = vadd.f32 0.0, %v2130
      %2132 = vmatprep.mubr.f32.mxu0 0.0
      %2133 = vmatmul.mubr.f32.gmra.mxu0 %v1993
      %v2134 = vpop.f32.mrf.mxu0
      %v2135 = vadd.f32 0.0, %v2134
      %v2136 = vpop.f32.mrf.mxu0
      %v2137 = vadd.f32 0.0, %v2136
      %2138 = vmatprep.mubr.f32.mxu0 0.0
      %2139 = vmatmul.mubr.f32.gmra.mxu0 %v1996
      %v2140 = vpop.f32.mrf.mxu0
      %v2141 = vadd.f32 0.0, %v2140
      %v2142 = vpop.f32.mrf.mxu0
      %v2143 = vadd.f32 0.0, %v2142
      %2144 = vmatprep.mubr.f32.mxu0 0.0
      %2145 = vmatmul.mubr.f32.gmra.mxu0 %v1999
      %v2146 = vpop.f32.mrf.mxu0
      %v2147 = vadd.f32 0.0, %v2146
      %v2148 = vpop.f32.mrf.mxu0
      %v2149 = vadd.f32 0.0, %v2148
      %2150 = vmatprep.mubr.f32.mxu0 0.0
      %2151 = vmatmul.mubr.f32.gmra.mxu0 %v2002
      %v2152 = vpop.f32.mrf.mxu0
      %v2153 = vadd.f32 0.0, %v2152
      %v2154 = vpop.f32.mrf.mxu0
      %v2155 = vadd.f32 0.0, %v2154
      %2156 = vmatprep.mubr.f32.mxu0 0.0
      %2157 = vmatmul.mubr.f32.gmra.mxu0 %v2005
      %v2158 = vpop.f32.mrf.mxu0
      %v2159 = vadd.f32 0.0, %v2158
      %v2160 = vpop.f32.mrf.mxu0
      %v2161 = vadd.f32 0.0, %v2160
      %2162 = vmatprep.mubr.f32.mxu0 0.0
      %2163 = vmatmul.mubr.f32.gmra.mxu0 %v2008
      %v2164 = vpop.f32.mrf.mxu0
      %v2165 = vadd.f32 0.0, %v2164
      %v2166 = vpop.f32.mrf.mxu0
      %v2167 = vadd.f32 0.0, %v2166
      %2168 = vmatprep.mubr.f32.mxu0 0.0
      %2169 = vmatmul.mubr.f32.gmra.mxu0 %v2011
      %v2170 = vpop.f32.mrf.mxu0
      %v2171 = vadd.f32 0.0, %v2170
      %v2172 = vpop.f32.mrf.mxu0
      %v2173 = vadd.f32 0.0, %v2172
      %2174 = vmatprep.mubr.f32.mxu0 0.0
      %2175 = vmatmul.mubr.f32.gmra.mxu0 %v2014
      %v2176 = vpop.f32.mrf.mxu0
      %v2177 = vadd.f32 0.0, %v2176
      %v2178 = vpop.f32.mrf.mxu0
      %v2179 = vadd.f32 0.0, %v2178
      %2180 = vmatprep.mubr.f32.mxu0 0.0
      %2181 = vmatmul.mubr.f32.gmra.mxu0 %v2017
      %v2182 = vpop.f32.mrf.mxu0
      %v2183 = vadd.f32 0.0, %v2182
      %v2184 = vpop.f32.mrf.mxu0
      %v2185 = vadd.f32 0.0, %v2184
      %2186 = vmatprep.mubr.f32.mxu0 0.0
      %2187 = vmatmul.mubr.f32.gmra.mxu0 %v2020
      %v2188 = vpop.f32.mrf.mxu0
      %v2189 = vadd.f32 0.0, %v2188
      %v2190 = vpop.f32.mrf.mxu0
      %v2191 = vadd.f32 0.0, %v2190
      %2192 = vmatprep.mubr.f32.mxu0 0.0
      %2193 = vmatmul.mubr.f32.gmra.mxu0 %v2023
      %v2194 = vpop.f32.mrf.mxu0
      %v2195 = vadd.f32 0.0, %v2194
      %v2196 = vpop.f32.mrf.mxu0
      %v2197 = vadd.f32 0.0, %v2196
      %2198 = vmatprep.mubr.f32.mxu0 0.0
      %2199 = vmatmul.mubr.f32.gmra.mxu0 %v2026
      %v2200 = vpop.f32.mrf.mxu0
      %v2201 = vadd.f32 0.0, %v2200
      %v2202 = vpop.f32.mrf.mxu0
      %v2203 = vadd.f32 0.0, %v2202
      %2204 = vdwg.mxu0
      %v2205 = vadd.f32 %v1916, %v2099
      %v2206 = vadd.f32 %v1917, %v2101
      %v2207 = vadd.f32 %v1918, %v2105
      %v2208 = vadd.f32 %v1919, %v2107
      %v2209 = vadd.f32 %v1920, %v2111
      %v2210 = vadd.f32 %v1921, %v2113
      %v2211 = vadd.f32 %v1922, %v2117
      %v2212 = vadd.f32 %v1923, %v2119
      %v2213 = vadd.f32 %v1924, %v2123
      %v2214 = vadd.f32 %v1925, %v2125
      %v2215 = vadd.f32 %v1926, %v2129
      %v2216 = vadd.f32 %v1927, %v2131
      %v2217 = vadd.f32 %v1928, %v2135
      %v2218 = vadd.f32 %v1929, %v2137
      %v2219 = vadd.f32 %v1930, %v2141
      %v2220 = vadd.f32 %v1931, %v2143
      %v2221 = vadd.f32 %v1932, %v2147
      %v2222 = vadd.f32 %v1933, %v2149
      %v2223 = vadd.f32 %v1934, %v2153
      %v2224 = vadd.f32 %v1935, %v2155
      %v2225 = vadd.f32 %v1936, %v2159
      %v2226 = vadd.f32 %v1937, %v2161
      %v2227 = vadd.f32 %v1938, %v2165
      %v2228 = vadd.f32 %v1939, %v2167
      %v2229 = vadd.f32 %v1940, %v2171
      %v2230 = vadd.f32 %v1941, %v2173
      %v2231 = vadd.f32 %v1942, %v2177
      %v2232 = vadd.f32 %v1943, %v2179
      %v2233 = vadd.f32 %v1944, %v2183
      %v2234 = vadd.f32 %v1945, %v2185
      %v2235 = vadd.f32 %v1946, %v2189
      %v2236 = vadd.f32 %v1947, %v2191
      %v2237 = vadd.f32 %v1948, %v2195
      %v2238 = vadd.f32 %v1949, %v2197
      %v2239 = vadd.f32 %v1950, %v2201
      %v2240 = vadd.f32 %v1951, %v2203
      %v2241 = vld [vmem:[%s278 + $0x25] sm:$0xff]
      %v2242 = vld [vmem:[%s278 + $0x2d] sm:$0xff]
      %v2243 = vld [vmem:[%s278 + $0x35] sm:$0xff]
      %v2244 = vld [vmem:[%s278 + $0x3d] sm:$0xff]
      %v2245 = vld [vmem:[%s278 + $0x45] sm:$0xff]
      %v2246 = vld [vmem:[%s278 + $0x4d] sm:$0xff]
      %v2247 = vld [vmem:[%s278 + $0x55] sm:$0xff]
      %v2248 = vld [vmem:[%s278 + $0x5d] sm:$0xff]
      %v2249 = vld [vmem:[%s278 + $0x65] sm:$0xff]
      %v2250 = vld [vmem:[%s278 + $0x6d] sm:$0xff]
      %v2251 = vld [vmem:[%s278 + $0x75] sm:$0xff]
      %v2252 = vld [vmem:[%s278 + $0x7d] sm:$0xff]
      %v2253 = vld [vmem:[%s278 + $0x85] sm:$0xff]
      %v2254 = vld [vmem:[%s278 + $0x8d] sm:$0xff]
      %v2255 = vld [vmem:[%s278 + $0x95] sm:$0xff]
      %v2256 = vld [vmem:[%s278 + $0x9d] sm:$0xff]
      %v2257 = vld [vmem:[%s278 + $0xa5] sm:$0xff]
      %v2258 = vld [vmem:[%s278 + $0xad] sm:$0xff]
      %s2259 = scalar_lea.vmem %s1, 56
      %v2260 = vld [vmem:[%s2259] sm:$0xff]
      %v2262 = vcombine.high %v2260, %v2260
      %v2264 = vsel %vm330, %v2241, 0
      %v2267 = vsel %vm330, %v2242, 0
      %v2270 = vsel %vm330, %v2243, 0
      %v2273 = vsel %vm330, %v2244, 0
      %v2276 = vsel %vm330, %v2245, 0
      %v2279 = vsel %vm330, %v2246, 0
      %v2282 = vsel %vm330, %v2247, 0
      %v2285 = vsel %vm330, %v2248, 0
      %v2288 = vsel %vm330, %v2249, 0
      %v2291 = vsel %vm330, %v2250, 0
      %v2294 = vsel %vm330, %v2251, 0
      %v2297 = vsel %vm330, %v2252, 0
      %v2300 = vsel %vm330, %v2253, 0
      %v2303 = vsel %vm330, %v2254, 0
      %v2306 = vsel %vm330, %v2255, 0
      %v2309 = vsel %vm330, %v2256, 0
      %v2312 = vsel %vm330, %v2257, 0
      %v2315 = vsel %vm330, %v2258, 0
      %v2317 = vsel %vm385, %v2260, 0
      %v2319 = vsel %vm385, %v2262, 0
      %2321 = vmatprep.subr.mxu0 0.0
      %2322 = vmatpush1.msra.mxu0 0.0
      %2323 = vmatprep.subr.mxu0 0.0
      %2324 = vmatpush1.msra.mxu0 0.0
      %2325 = vmatprep.subr.mxu0 0.0
      %2326 = vmatpush1.msra.mxu0 0.0
      %2327 = vmatprep.subr.mxu0 0.0
      %2328 = vmatpush1.msra.mxu0 0.0
      %2329 = vmatprep.subr.mxu0 0.0
      %2330 = vmatpush1.msra.mxu0 0.0
      %2331 = vmatprep.subr.mxu0 0.0
      %2332 = vmatpush1.msra.mxu0 0.0
      %2333 = vmatprep.subr.mxu0 0.0
      %2334 = vmatpush1.msra.mxu0 0.0
      %2335 = vmatprep.subr.mxu0 0.0
      %2336 = vmatpush1.msra.mxu0 0.0
      %2337 = vmatprep.subr.mxu0 0.0
      %2338 = vmatpush1.msra.mxu0 0.0
      %2339 = vmatprep.subr.mxu0 0.0
      %2340 = vmatpush1.msra.mxu0 0.0
      %2341 = vmatprep.subr.mxu0 0.0
      %2342 = vmatpush1.msra.mxu0 0.0
      %2343 = vmatprep.subr.mxu0 0.0
      %2344 = vmatpush1.msra.mxu0 0.0
      %2345 = vmatprep.subr.mxu0 0.0
      %2346 = vmatpush1.msra.mxu0 0.0
      %2347 = vmatprep.subr.mxu0 0.0
      %2348 = vmatpush1.msra.mxu0 0.0
      %2349 = vmatprep.subr.mxu0 0.0
      %2350 = vmatpush1.msra.mxu0 0.0
      %2351 = vmatprep.subr.mxu0 %v2319
      %2352 = vmatpush1.msra.mxu0 %v2317
      %2353 = vmatprep.subr.mxu0 0.0
      %2354 = vmatpush2.msra.mxu0 0.0
      %2355 = vmatprep.subr.mxu0 0.0
      %2356 = vmatpush2.msra.mxu0 0.0
      %2357 = vmatprep.subr.mxu0 0.0
      %2358 = vmatpush2.msra.mxu0 0.0
      %2359 = vmatprep.subr.mxu0 0.0
      %2360 = vmatpush2.msra.mxu0 0.0
      %2361 = vmatprep.subr.mxu0 0.0
      %2362 = vmatpush2.msra.mxu0 0.0
      %2363 = vmatprep.subr.mxu0 0.0
      %2364 = vmatpush2.msra.mxu0 0.0
      %2365 = vmatprep.subr.mxu0 0.0
      %2366 = vmatpush2.msra.mxu0 0.0
      %2367 = vmatprep.subr.mxu0 0.0
      %2368 = vmatpush2.msra.mxu0 0.0
      %2369 = vmatprep.subr.mxu0 0.0
      %2370 = vmatpush2.msra.mxu0 0.0
      %2371 = vmatprep.subr.mxu0 0.0
      %2372 = vmatpush2.msra.mxu0 0.0
      %2373 = vmatprep.subr.mxu0 0.0
      %2374 = vmatpush2.msra.mxu0 0.0
      %2375 = vmatprep.subr.mxu0 0.0
      %2376 = vmatpush2.msra.mxu0 0.0
      %2377 = vmatprep.subr.mxu0 0.0
      %2378 = vmatpush2.msra.mxu0 0.0
      %2379 = vmatprep.subr.mxu0 0.0
      %2380 = vmatpush2.msra.mxu0 0.0
      %2381 = vmatprep.subr.mxu0 0.0
      %2382 = vmatpush2.msra.mxu0 0.0
      %2383 = vmatprep.subr.mxu0 0.0
      %2384 = vmatpush2.msra.mxu0 0.0
      %2385 = vmatprep.mubr.f32.mxu0 0.0
      %2386 = vmatmul.mubr.f32.gmra.mxu0 %v2264
      %v2387 = vpop.f32.mrf.mxu0
      %v2388 = vadd.f32 0.0, %v2387
      %v2389 = vpop.f32.mrf.mxu0
      %v2390 = vadd.f32 0.0, %v2389
      %2391 = vmatprep.mubr.f32.mxu0 0.0
      %2392 = vmatmul.mubr.f32.gmra.mxu0 %v2267
      %v2393 = vpop.f32.mrf.mxu0
      %v2394 = vadd.f32 0.0, %v2393
      %v2395 = vpop.f32.mrf.mxu0
      %v2396 = vadd.f32 0.0, %v2395
      %2397 = vmatprep.mubr.f32.mxu0 0.0
      %2398 = vmatmul.mubr.f32.gmra.mxu0 %v2270
      %v2399 = vpop.f32.mrf.mxu0
      %v2400 = vadd.f32 0.0, %v2399
      %v2401 = vpop.f32.mrf.mxu0
      %v2402 = vadd.f32 0.0, %v2401
      %2403 = vmatprep.mubr.f32.mxu0 0.0
      %2404 = vmatmul.mubr.f32.gmra.mxu0 %v2273
      %v2405 = vpop.f32.mrf.mxu0
      %v2406 = vadd.f32 0.0, %v2405
      %v2407 = vpop.f32.mrf.mxu0
      %v2408 = vadd.f32 0.0, %v2407
      %2409 = vmatprep.mubr.f32.mxu0 0.0
      %2410 = vmatmul.mubr.f32.gmra.mxu0 %v2276
      %v2411 = vpop.f32.mrf.mxu0
      %v2412 = vadd.f32 0.0, %v2411
      %v2413 = vpop.f32.mrf.mxu0
      %v2414 = vadd.f32 0.0, %v2413
      %2415 = vmatprep.mubr.f32.mxu0 0.0
      %2416 = vmatmul.mubr.f32.gmra.mxu0 %v2279
      %v2417 = vpop.f32.mrf.mxu0
      %v2418 = vadd.f32 0.0, %v2417
      %v2419 = vpop.f32.mrf.mxu0
      %v2420 = vadd.f32 0.0, %v2419
      %2421 = vmatprep.mubr.f32.mxu0 0.0
      %2422 = vmatmul.mubr.f32.gmra.mxu0 %v2282
      %v2423 = vpop.f32.mrf.mxu0
      %v2424 = vadd.f32 0.0, %v2423
      %v2425 = vpop.f32.mrf.mxu0
      %v2426 = vadd.f32 0.0, %v2425
      %2427 = vmatprep.mubr.f32.mxu0 0.0
      %2428 = vmatmul.mubr.f32.gmra.mxu0 %v2285
      %v2429 = vpop.f32.mrf.mxu0
      %v2430 = vadd.f32 0.0, %v2429
      %v2431 = vpop.f32.mrf.mxu0
      %v2432 = vadd.f32 0.0, %v2431
      %2433 = vmatprep.mubr.f32.mxu0 0.0
      %2434 = vmatmul.mubr.f32.gmra.mxu0 %v2288
      %v2435 = vpop.f32.mrf.mxu0
      %v2436 = vadd.f32 0.0, %v2435
      %v2437 = vpop.f32.mrf.mxu0
      %v2438 = vadd.f32 0.0, %v2437
      %2439 = vmatprep.mubr.f32.mxu0 0.0
      %2440 = vmatmul.mubr.f32.gmra.mxu0 %v2291
      %v2441 = vpop.f32.mrf.mxu0
      %v2442 = vadd.f32 0.0, %v2441
      %v2443 = vpop.f32.mrf.mxu0
      %v2444 = vadd.f32 0.0, %v2443
      %2445 = vmatprep.mubr.f32.mxu0 0.0
      %2446 = vmatmul.mubr.f32.gmra.mxu0 %v2294
      %v2447 = vpop.f32.mrf.mxu0
      %v2448 = vadd.f32 0.0, %v2447
      %v2449 = vpop.f32.mrf.mxu0
      %v2450 = vadd.f32 0.0, %v2449
      %2451 = vmatprep.mubr.f32.mxu0 0.0
      %2452 = vmatmul.mubr.f32.gmra.mxu0 %v2297
      %v2453 = vpop.f32.mrf.mxu0
      %v2454 = vadd.f32 0.0, %v2453
      %v2455 = vpop.f32.mrf.mxu0
      %v2456 = vadd.f32 0.0, %v2455
      %2457 = vmatprep.mubr.f32.mxu0 0.0
      %2458 = vmatmul.mubr.f32.gmra.mxu0 %v2300
      %v2459 = vpop.f32.mrf.mxu0
      %v2460 = vadd.f32 0.0, %v2459
      %v2461 = vpop.f32.mrf.mxu0
      %v2462 = vadd.f32 0.0, %v2461
      %2463 = vmatprep.mubr.f32.mxu0 0.0
      %2464 = vmatmul.mubr.f32.gmra.mxu0 %v2303
      %v2465 = vpop.f32.mrf.mxu0
      %v2466 = vadd.f32 0.0, %v2465
      %v2467 = vpop.f32.mrf.mxu0
      %v2468 = vadd.f32 0.0, %v2467
      %2469 = vmatprep.mubr.f32.mxu0 0.0
      %2470 = vmatmul.mubr.f32.gmra.mxu0 %v2306
      %v2471 = vpop.f32.mrf.mxu0
      %v2472 = vadd.f32 0.0, %v2471
      %v2473 = vpop.f32.mrf.mxu0
      %v2474 = vadd.f32 0.0, %v2473
      %2475 = vmatprep.mubr.f32.mxu0 0.0
      %2476 = vmatmul.mubr.f32.gmra.mxu0 %v2309
      %v2477 = vpop.f32.mrf.mxu0
      %v2478 = vadd.f32 0.0, %v2477
      %v2479 = vpop.f32.mrf.mxu0
      %v2480 = vadd.f32 0.0, %v2479
      %2481 = vmatprep.mubr.f32.mxu0 0.0
      %2482 = vmatmul.mubr.f32.gmra.mxu0 %v2312
      %v2483 = vpop.f32.mrf.mxu0
      %v2484 = vadd.f32 0.0, %v2483
      %v2485 = vpop.f32.mrf.mxu0
      %v2486 = vadd.f32 0.0, %v2485
      %2487 = vmatprep.mubr.f32.mxu0 0.0
      %2488 = vmatmul.mubr.f32.gmra.mxu0 %v2315
      %v2489 = vpop.f32.mrf.mxu0
      %v2490 = vadd.f32 0.0, %v2489
      %v2491 = vpop.f32.mrf.mxu0
      %v2492 = vadd.f32 0.0, %v2491
      %2493 = vdwg.mxu0
      %v2494 = vadd.f32 %v2205, %v2388
      %v2495 = vadd.f32 %v2206, %v2390
      %v2496 = vadd.f32 %v2207, %v2394
      %v2497 = vadd.f32 %v2208, %v2396
      %v2498 = vadd.f32 %v2209, %v2400
      %v2499 = vadd.f32 %v2210, %v2402
      %v2500 = vadd.f32 %v2211, %v2406
      %v2501 = vadd.f32 %v2212, %v2408
      %v2502 = vadd.f32 %v2213, %v2412
      %v2503 = vadd.f32 %v2214, %v2414
      %v2504 = vadd.f32 %v2215, %v2418
      %v2505 = vadd.f32 %v2216, %v2420
      %v2506 = vadd.f32 %v2217, %v2424
      %v2507 = vadd.f32 %v2218, %v2426
      %v2508 = vadd.f32 %v2219, %v2430
      %v2509 = vadd.f32 %v2220, %v2432
      %v2510 = vadd.f32 %v2221, %v2436
      %v2511 = vadd.f32 %v2222, %v2438
      %v2512 = vadd.f32 %v2223, %v2442
      %v2513 = vadd.f32 %v2224, %v2444
      %v2514 = vadd.f32 %v2225, %v2448
      %v2515 = vadd.f32 %v2226, %v2450
      %v2516 = vadd.f32 %v2227, %v2454
      %v2517 = vadd.f32 %v2228, %v2456
      %v2518 = vadd.f32 %v2229, %v2460
      %v2519 = vadd.f32 %v2230, %v2462
      %v2520 = vadd.f32 %v2231, %v2466
      %v2521 = vadd.f32 %v2232, %v2468
      %v2522 = vadd.f32 %v2233, %v2472
      %v2523 = vadd.f32 %v2234, %v2474
      %v2524 = vadd.f32 %v2235, %v2478
      %v2525 = vadd.f32 %v2236, %v2480
      %v2526 = vadd.f32 %v2237, %v2484
      %v2527 = vadd.f32 %v2238, %v2486
      %v2528 = vadd.f32 %v2239, %v2490
      %v2529 = vadd.f32 %v2240, %v2492
      %v2530 = vld [vmem:[%s278 + $0x26] sm:$0xff]
      %v2531 = vld [vmem:[%s278 + $0x2e] sm:$0xff]
      %v2532 = vld [vmem:[%s278 + $0x36] sm:$0xff]
      %v2533 = vld [vmem:[%s278 + $0x3e] sm:$0xff]
      %v2534 = vld [vmem:[%s278 + $0x46] sm:$0xff]
      %v2535 = vld [vmem:[%s278 + $0x4e] sm:$0xff]
      %v2536 = vld [vmem:[%s278 + $0x56] sm:$0xff]
      %v2537 = vld [vmem:[%s278 + $0x5e] sm:$0xff]
      %v2538 = vld [vmem:[%s278 + $0x66] sm:$0xff]
      %v2539 = vld [vmem:[%s278 + $0x6e] sm:$0xff]
      %v2540 = vld [vmem:[%s278 + $0x76] sm:$0xff]
      %v2541 = vld [vmem:[%s278 + $0x7e] sm:$0xff]
      %v2542 = vld [vmem:[%s278 + $0x86] sm:$0xff]
      %v2543 = vld [vmem:[%s278 + $0x8e] sm:$0xff]
      %v2544 = vld [vmem:[%s278 + $0x96] sm:$0xff]
      %v2545 = vld [vmem:[%s278 + $0x9e] sm:$0xff]
      %v2546 = vld [vmem:[%s278 + $0xa6] sm:$0xff]
      %v2547 = vld [vmem:[%s278 + $0xae] sm:$0xff]
      %s2548 = scalar_lea.vmem %s1, 64
      %v2549 = vld [vmem:[%s2548] sm:$0xff]
      %v2551 = vcombine.high %v2549, %v2549
      %v2553 = vsel %vm330, %v2530, 0
      %v2556 = vsel %vm330, %v2531, 0
      %v2559 = vsel %vm330, %v2532, 0
      %v2562 = vsel %vm330, %v2533, 0
      %v2565 = vsel %vm330, %v2534, 0
      %v2568 = vsel %vm330, %v2535, 0
      %v2571 = vsel %vm330, %v2536, 0
      %v2574 = vsel %vm330, %v2537, 0
      %v2577 = vsel %vm330, %v2538, 0
      %v2580 = vsel %vm330, %v2539, 0
      %v2583 = vsel %vm330, %v2540, 0
      %v2586 = vsel %vm330, %v2541, 0
      %v2589 = vsel %vm330, %v2542, 0
      %v2592 = vsel %vm330, %v2543, 0
      %v2595 = vsel %vm330, %v2544, 0
      %v2598 = vsel %vm330, %v2545, 0
      %v2601 = vsel %vm330, %v2546, 0
      %v2604 = vsel %vm330, %v2547, 0
      %v2606 = vsel %vm385, %v2549, 0
      %v2608 = vsel %vm385, %v2551, 0
      %2610 = vmatprep.subr.mxu0 0.0
      %2611 = vmatpush1.msra.mxu0 0.0
      %2612 = vmatprep.subr.mxu0 0.0
      %2613 = vmatpush1.msra.mxu0 0.0
      %2614 = vmatprep.subr.mxu0 0.0
      %2615 = vmatpush1.msra.mxu0 0.0
      %2616 = vmatprep.subr.mxu0 0.0
      %2617 = vmatpush1.msra.mxu0 0.0
      %2618 = vmatprep.subr.mxu0 0.0
      %2619 = vmatpush1.msra.mxu0 0.0
      %2620 = vmatprep.subr.mxu0 0.0
      %2621 = vmatpush1.msra.mxu0 0.0
      %2622 = vmatprep.subr.mxu0 0.0
      %2623 = vmatpush1.msra.mxu0 0.0
      %2624 = vmatprep.subr.mxu0 0.0
      %2625 = vmatpush1.msra.mxu0 0.0
      %2626 = vmatprep.subr.mxu0 0.0
      %2627 = vmatpush1.msra.mxu0 0.0
      %2628 = vmatprep.subr.mxu0 0.0
      %2629 = vmatpush1.msra.mxu0 0.0
      %2630 = vmatprep.subr.mxu0 0.0
      %2631 = vmatpush1.msra.mxu0 0.0
      %2632 = vmatprep.subr.mxu0 0.0
      %2633 = vmatpush1.msra.mxu0 0.0
      %2634 = vmatprep.subr.mxu0 0.0
      %2635 = vmatpush1.msra.mxu0 0.0
      %2636 = vmatprep.subr.mxu0 0.0
      %2637 = vmatpush1.msra.mxu0 0.0
      %2638 = vmatprep.subr.mxu0 0.0
      %2639 = vmatpush1.msra.mxu0 0.0
      %2640 = vmatprep.subr.mxu0 %v2608
      %2641 = vmatpush1.msra.mxu0 %v2606
      %2642 = vmatprep.subr.mxu0 0.0
      %2643 = vmatpush2.msra.mxu0 0.0
      %2644 = vmatprep.subr.mxu0 0.0
      %2645 = vmatpush2.msra.mxu0 0.0
      %2646 = vmatprep.subr.mxu0 0.0
      %2647 = vmatpush2.msra.mxu0 0.0
      %2648 = vmatprep.subr.mxu0 0.0
      %2649 = vmatpush2.msra.mxu0 0.0
      %2650 = vmatprep.subr.mxu0 0.0
      %2651 = vmatpush2.msra.mxu0 0.0
      %2652 = vmatprep.subr.mxu0 0.0
      %2653 = vmatpush2.msra.mxu0 0.0
      %2654 = vmatprep.subr.mxu0 0.0
      %2655 = vmatpush2.msra.mxu0 0.0
      %2656 = vmatprep.subr.mxu0 0.0
      %2657 = vmatpush2.msra.mxu0 0.0
      %2658 = vmatprep.subr.mxu0 0.0
      %2659 = vmatpush2.msra.mxu0 0.0
      %2660 = vmatprep.subr.mxu0 0.0
      %2661 = vmatpush2.msra.mxu0 0.0
      %2662 = vmatprep.subr.mxu0 0.0
      %2663 = vmatpush2.msra.mxu0 0.0
      %2664 = vmatprep.subr.mxu0 0.0
      %2665 = vmatpush2.msra.mxu0 0.0
      %2666 = vmatprep.subr.mxu0 0.0
      %2667 = vmatpush2.msra.mxu0 0.0
      %2668 = vmatprep.subr.mxu0 0.0
      %2669 = vmatpush2.msra.mxu0 0.0
      %2670 = vmatprep.subr.mxu0 0.0
      %2671 = vmatpush2.msra.mxu0 0.0
      %2672 = vmatprep.subr.mxu0 0.0
      %2673 = vmatpush2.msra.mxu0 0.0
      %2674 = vmatprep.mubr.f32.mxu0 0.0
      %2675 = vmatmul.mubr.f32.gmra.mxu0 %v2553
      %v2676 = vpop.f32.mrf.mxu0
      %v2677 = vadd.f32 0.0, %v2676
      %v2678 = vpop.f32.mrf.mxu0
      %v2679 = vadd.f32 0.0, %v2678
      %2680 = vmatprep.mubr.f32.mxu0 0.0
      %2681 = vmatmul.mubr.f32.gmra.mxu0 %v2556
      %v2682 = vpop.f32.mrf.mxu0
      %v2683 = vadd.f32 0.0, %v2682
      %v2684 = vpop.f32.mrf.mxu0
      %v2685 = vadd.f32 0.0, %v2684
      %2686 = vmatprep.mubr.f32.mxu0 0.0
      %2687 = vmatmul.mubr.f32.gmra.mxu0 %v2559
      %v2688 = vpop.f32.mrf.mxu0
      %v2689 = vadd.f32 0.0, %v2688
      %v2690 = vpop.f32.mrf.mxu0
      %v2691 = vadd.f32 0.0, %v2690
      %2692 = vmatprep.mubr.f32.mxu0 0.0
      %2693 = vmatmul.mubr.f32.gmra.mxu0 %v2562
      %v2694 = vpop.f32.mrf.mxu0
      %v2695 = vadd.f32 0.0, %v2694
      %v2696 = vpop.f32.mrf.mxu0
      %v2697 = vadd.f32 0.0, %v2696
      %2698 = vmatprep.mubr.f32.mxu0 0.0
      %2699 = vmatmul.mubr.f32.gmra.mxu0 %v2565
      %v2700 = vpop.f32.mrf.mxu0
      %v2701 = vadd.f32 0.0, %v2700
      %v2702 = vpop.f32.mrf.mxu0
      %v2703 = vadd.f32 0.0, %v2702
      %2704 = vmatprep.mubr.f32.mxu0 0.0
      %2705 = vmatmul.mubr.f32.gmra.mxu0 %v2568
      %v2706 = vpop.f32.mrf.mxu0
      %v2707 = vadd.f32 0.0, %v2706
      %v2708 = vpop.f32.mrf.mxu0
      %v2709 = vadd.f32 0.0, %v2708
      %2710 = vmatprep.mubr.f32.mxu0 0.0
      %2711 = vmatmul.mubr.f32.gmra.mxu0 %v2571
      %v2712 = vpop.f32.mrf.mxu0
      %v2713 = vadd.f32 0.0, %v2712
      %v2714 = vpop.f32.mrf.mxu0
      %v2715 = vadd.f32 0.0, %v2714
      %2716 = vmatprep.mubr.f32.mxu0 0.0
      %2717 = vmatmul.mubr.f32.gmra.mxu0 %v2574
      %v2718 = vpop.f32.mrf.mxu0
      %v2719 = vadd.f32 0.0, %v2718
      %v2720 = vpop.f32.mrf.mxu0
      %v2721 = vadd.f32 0.0, %v2720
      %2722 = vmatprep.mubr.f32.mxu0 0.0
      %2723 = vmatmul.mubr.f32.gmra.mxu0 %v2577
      %v2724 = vpop.f32.mrf.mxu0
      %v2725 = vadd.f32 0.0, %v2724
      %v2726 = vpop.f32.mrf.mxu0
      %v2727 = vadd.f32 0.0, %v2726
      %2728 = vmatprep.mubr.f32.mxu0 0.0
      %2729 = vmatmul.mubr.f32.gmra.mxu0 %v2580
      %v2730 = vpop.f32.mrf.mxu0
      %v2731 = vadd.f32 0.0, %v2730
      %v2732 = vpop.f32.mrf.mxu0
      %v2733 = vadd.f32 0.0, %v2732
      %2734 = vmatprep.mubr.f32.mxu0 0.0
      %2735 = vmatmul.mubr.f32.gmra.mxu0 %v2583
      %v2736 = vpop.f32.mrf.mxu0
      %v2737 = vadd.f32 0.0, %v2736
      %v2738 = vpop.f32.mrf.mxu0
      %v2739 = vadd.f32 0.0, %v2738
      %2740 = vmatprep.mubr.f32.mxu0 0.0
      %2741 = vmatmul.mubr.f32.gmra.mxu0 %v2586
      %v2742 = vpop.f32.mrf.mxu0
      %v2743 = vadd.f32 0.0, %v2742
      %v2744 = vpop.f32.mrf.mxu0
      %v2745 = vadd.f32 0.0, %v2744
      %2746 = vmatprep.mubr.f32.mxu0 0.0
      %2747 = vmatmul.mubr.f32.gmra.mxu0 %v2589
      %v2748 = vpop.f32.mrf.mxu0
      %v2749 = vadd.f32 0.0, %v2748
      %v2750 = vpop.f32.mrf.mxu0
      %v2751 = vadd.f32 0.0, %v2750
      %2752 = vmatprep.mubr.f32.mxu0 0.0
      %2753 = vmatmul.mubr.f32.gmra.mxu0 %v2592
      %v2754 = vpop.f32.mrf.mxu0
      %v2755 = vadd.f32 0.0, %v2754
      %v2756 = vpop.f32.mrf.mxu0
      %v2757 = vadd.f32 0.0, %v2756
      %2758 = vmatprep.mubr.f32.mxu0 0.0
      %2759 = vmatmul.mubr.f32.gmra.mxu0 %v2595
      %v2760 = vpop.f32.mrf.mxu0
      %v2761 = vadd.f32 0.0, %v2760
      %v2762 = vpop.f32.mrf.mxu0
      %v2763 = vadd.f32 0.0, %v2762
      %2764 = vmatprep.mubr.f32.mxu0 0.0
      %2765 = vmatmul.mubr.f32.gmra.mxu0 %v2598
      %v2766 = vpop.f32.mrf.mxu0
      %v2767 = vadd.f32 0.0, %v2766
      %v2768 = vpop.f32.mrf.mxu0
      %v2769 = vadd.f32 0.0, %v2768
      %2770 = vmatprep.mubr.f32.mxu0 0.0
      %2771 = vmatmul.mubr.f32.gmra.mxu0 %v2601
      %v2772 = vpop.f32.mrf.mxu0
      %v2773 = vadd.f32 0.0, %v2772
      %v2774 = vpop.f32.mrf.mxu0
      %v2775 = vadd.f32 0.0, %v2774
      %2776 = vmatprep.mubr.f32.mxu0 0.0
      %2777 = vmatmul.mubr.f32.gmra.mxu0 %v2604
      %v2778 = vpop.f32.mrf.mxu0
      %v2779 = vadd.f32 0.0, %v2778
      %v2780 = vpop.f32.mrf.mxu0
      %v2781 = vadd.f32 0.0, %v2780
      %2782 = vdwg.mxu0
      %v2783 = vadd.f32 %v2494, %v2677
      %v2784 = vadd.f32 %v2495, %v2679
      %v2785 = vadd.f32 %v2496, %v2683
      %v2786 = vadd.f32 %v2497, %v2685
      %v2787 = vadd.f32 %v2498, %v2689
      %v2788 = vadd.f32 %v2499, %v2691
      %v2789 = vadd.f32 %v2500, %v2695
      %v2790 = vadd.f32 %v2501, %v2697
      %v2791 = vadd.f32 %v2502, %v2701
      %v2792 = vadd.f32 %v2503, %v2703
      %v2793 = vadd.f32 %v2504, %v2707
      %v2794 = vadd.f32 %v2505, %v2709
      %v2795 = vadd.f32 %v2506, %v2713
      %v2796 = vadd.f32 %v2507, %v2715
      %v2797 = vadd.f32 %v2508, %v2719
      %v2798 = vadd.f32 %v2509, %v2721
      %v2799 = vadd.f32 %v2510, %v2725
      %v2800 = vadd.f32 %v2511, %v2727
      %v2801 = vadd.f32 %v2512, %v2731
      %v2802 = vadd.f32 %v2513, %v2733
      %v2803 = vadd.f32 %v2514, %v2737
      %v2804 = vadd.f32 %v2515, %v2739
      %v2805 = vadd.f32 %v2516, %v2743
      %v2806 = vadd.f32 %v2517, %v2745
      %v2807 = vadd.f32 %v2518, %v2749
      %v2808 = vadd.f32 %v2519, %v2751
      %v2809 = vadd.f32 %v2520, %v2755
      %v2810 = vadd.f32 %v2521, %v2757
      %v2811 = vadd.f32 %v2522, %v2761
      %v2812 = vadd.f32 %v2523, %v2763
      %v2813 = vadd.f32 %v2524, %v2767
      %v2814 = vadd.f32 %v2525, %v2769
      %v2815 = vadd.f32 %v2526, %v2773
      %v2816 = vadd.f32 %v2527, %v2775
      %v2817 = vadd.f32 %v2528, %v2779
      %v2818 = vadd.f32 %v2529, %v2781
      %v2819 = vld [vmem:[%s2] sm:$0x3]
      %v2821 = vlaneseq
      %v2822 = vshrl.u32 %v2821, 7
      %v2823 = vsub.s32 0, %v2822
      %v2824 = vrot.slane %v2819, %v2823
      %v2825 = vlaneseq
      %v2826 = vshrl.u32 %v2825, 7
      %v2827 = vsub.s32 1, %v2826
      %v2828 = vrot.slane %v2819, %v2827
      %v2831 = vadd.f32 %v2783, %v2824
      %v2832 = vadd.f32 %v2784, %v2828
      %v2833 = vadd.f32 %v2785, %v2824
      %v2834 = vadd.f32 %v2786, %v2828
      %v2835 = vadd.f32 %v2787, %v2824
      %v2836 = vadd.f32 %v2788, %v2828
      %v2837 = vadd.f32 %v2789, %v2824
      %v2838 = vadd.f32 %v2790, %v2828
      %v2839 = vadd.f32 %v2791, %v2824
      %v2840 = vadd.f32 %v2792, %v2828
      %v2841 = vadd.f32 %v2793, %v2824
      %v2842 = vadd.f32 %v2794, %v2828
      %v2843 = vadd.f32 %v2795, %v2824
      %v2844 = vadd.f32 %v2796, %v2828
      %v2845 = vadd.f32 %v2797, %v2824
      %v2846 = vadd.f32 %v2798, %v2828
      %v2847 = vadd.f32 %v2799, %v2824
      %v2848 = vadd.f32 %v2800, %v2828
      %v2849 = vadd.f32 %v2801, %v2824
      %v2850 = vadd.f32 %v2802, %v2828
      %v2851 = vadd.f32 %v2803, %v2824
      %v2852 = vadd.f32 %v2804, %v2828
      %v2853 = vadd.f32 %v2805, %v2824
      %v2854 = vadd.f32 %v2806, %v2828
      %v2855 = vadd.f32 %v2807, %v2824
      %v2856 = vadd.f32 %v2808, %v2828
      %v2857 = vadd.f32 %v2809, %v2824
      %v2858 = vadd.f32 %v2810, %v2828
      %v2859 = vadd.f32 %v2811, %v2824
      %v2860 = vadd.f32 %v2812, %v2828
      %v2861 = vadd.f32 %v2813, %v2824
      %v2862 = vadd.f32 %v2814, %v2828
      %v2863 = vadd.f32 %v2815, %v2824
      %v2864 = vadd.f32 %v2816, %v2828
      %v2865 = vadd.f32 %v2817, %v2824
      %v2866 = vadd.f32 %v2818, %v2828
      %v2867 = vtanh.pop %v2831
      %v2868 = vtanh.pop %v2833
      %v2869 = vtanh.pop %v2835
      %v2870 = vtanh.pop %v2837
      %v2871 = vtanh.pop %v2839
      %v2872 = vtanh.pop %v2841
      %v2873 = vtanh.pop %v2843
      %v2874 = vtanh.pop %v2845
      %v2875 = vtanh.pop %v2847
      %v2876 = vtanh.pop %v2849
      %v2877 = vtanh.pop %v2851
      %v2878 = vtanh.pop %v2853
      %v2879 = vtanh.pop %v2855
      %v2880 = vtanh.pop %v2857
      %v2881 = vtanh.pop %v2859
      %v2882 = vtanh.pop %v2861
      %v2883 = vtanh.pop %v2863
      %v2884 = vtanh.pop %v2865
      %v2885 = vld [vmem:[%s3] sm:$0xff]
      %v2886 = vld [vmem:[%s3 + $0x8] sm:$0xff]
      %v2887 = vld [vmem:[%s3 + $0x10] sm:$0xff]
      %v2888 = vld [vmem:[%s3 + $0x18] sm:$0xff]
      %v2889 = vld [vmem:[%s3 + $0x20] sm:$0xff]
      %v2890 = vld [vmem:[%s3 + $0x28] sm:$0xff]
      %v2891 = vld [vmem:[%s3 + $0x30] sm:$0xff]
      %v2892 = vld [vmem:[%s3 + $0x38] sm:$0xff]
      %v2893 = vld [vmem:[%s3 + $0x40] sm:$0xff]
      %v2894 = vld [vmem:[%s3 + $0x48] sm:$0xff]
      %v2895 = vld [vmem:[%s3 + $0x50] sm:$0xff]
      %v2896 = vld [vmem:[%s3 + $0x58] sm:$0xff]
      %v2897 = vld [vmem:[%s3 + $0x60] sm:$0xff]
      %v2898 = vld [vmem:[%s3 + $0x68] sm:$0xff]
      %v2899 = vld [vmem:[%s3 + $0x70] sm:$0xff]
      %v2900 = vld [vmem:[%s3 + $0x78] sm:$0xff]
      %v2901 = vld [vmem:[%s4] sm:$0x1]
      %v2903 = vlaneseq
      %v2904 = vshrl.u32 %v2903, 7
      %v2905 = vsub.s32 0, %v2904
      %v2906 = vrot.slane %v2901, %v2905
      %2908 = vmatprep.subr.mxu0 0.0
      %2909 = vmatpush1.msra.mxu0 %v2900
      %2910 = vmatprep.subr.mxu0 0.0
      %2911 = vmatpush1.msra.mxu0 %v2899
      %2912 = vmatprep.subr.mxu0 0.0
      %2913 = vmatpush1.msra.mxu0 %v2898
      %2914 = vmatprep.subr.mxu0 0.0
      %2915 = vmatpush1.msra.mxu0 %v2897
      %2916 = vmatprep.subr.mxu0 0.0
      %2917 = vmatpush1.msra.mxu0 %v2896
      %2918 = vmatprep.subr.mxu0 0.0
      %2919 = vmatpush1.msra.mxu0 %v2895
      %2920 = vmatprep.subr.mxu0 0.0
      %2921 = vmatpush1.msra.mxu0 %v2894
      %2922 = vmatprep.subr.mxu0 0.0
      %2923 = vmatpush1.msra.mxu0 %v2893
      %2924 = vmatprep.subr.mxu0 0.0
      %2925 = vmatpush1.msra.mxu0 %v2892
      %2926 = vmatprep.subr.mxu0 0.0
      %2927 = vmatpush1.msra.mxu0 %v2891
      %2928 = vmatprep.subr.mxu0 0.0
      %2929 = vmatpush1.msra.mxu0 %v2890
      %2930 = vmatprep.subr.mxu0 0.0
      %2931 = vmatpush1.msra.mxu0 %v2889
      %2932 = vmatprep.subr.mxu0 0.0
      %2933 = vmatpush1.msra.mxu0 %v2888
      %2934 = vmatprep.subr.mxu0 0.0
      %2935 = vmatpush1.msra.mxu0 %v2887
      %2936 = vmatprep.subr.mxu0 0.0
      %2937 = vmatpush1.msra.mxu0 %v2886
      %2938 = vmatprep.subr.mxu0 0.0
      %2939 = vmatpush1.msra.mxu0 %v2885
      %2940 = vmatprep.subr.mxu0 0.0
      %2941 = vmatpush2.msra.mxu0 0.0
      %2942 = vmatprep.subr.mxu0 0.0
      %2943 = vmatpush2.msra.mxu0 0.0
      %2944 = vmatprep.subr.mxu0 0.0
      %2945 = vmatpush2.msra.mxu0 0.0
      %2946 = vmatprep.subr.mxu0 0.0
      %2947 = vmatpush2.msra.mxu0 0.0
      %2948 = vmatprep.subr.mxu0 0.0
      %2949 = vmatpush2.msra.mxu0 0.0
      %2950 = vmatprep.subr.mxu0 0.0
      %2951 = vmatpush2.msra.mxu0 0.0
      %2952 = vmatprep.subr.mxu0 0.0
      %2953 = vmatpush2.msra.mxu0 0.0
      %2954 = vmatprep.subr.mxu0 0.0
      %2955 = vmatpush2.msra.mxu0 0.0
      %2956 = vmatprep.subr.mxu0 0.0
      %2957 = vmatpush2.msra.mxu0 0.0
      %2958 = vmatprep.subr.mxu0 0.0
      %2959 = vmatpush2.msra.mxu0 0.0
      %2960 = vmatprep.subr.mxu0 0.0
      %2961 = vmatpush2.msra.mxu0 0.0
      %2962 = vmatprep.subr.mxu0 0.0
      %2963 = vmatpush2.msra.mxu0 0.0
      %2964 = vmatprep.subr.mxu0 0.0
      %2965 = vmatpush2.msra.mxu0 0.0
      %2966 = vmatprep.subr.mxu0 0.0
      %2967 = vmatpush2.msra.mxu0 0.0
      %2968 = vmatprep.subr.mxu0 0.0
      %2969 = vmatpush2.msra.mxu0 0.0
      %2970 = vmatprep.subr.mxu0 0.0
      %2971 = vmatpush2.msra.mxu0 0.0
      %2972 = vmatprep.mubr.f32.mxu0 0.0
      %2973 = vmatmul.mubr.f32.gmra.mxu0 %v2867
      %v2974 = vpop.f32.mrf.mxu0
      %v2975 = vadd.f32 %v2906, %v2974
      %v2976 = vpop.f32.mrf.mxu0
      %2977 = vmatprep.mubr.f32.mxu0 0.0
      %2978 = vmatmul.mubr.f32.gmra.mxu0 %v2868
      %v2979 = vpop.f32.mrf.mxu0
      %v2980 = vadd.f32 %v2906, %v2979
      %v2981 = vpop.f32.mrf.mxu0
      %2982 = vmatprep.mubr.f32.mxu0 0.0
      %2983 = vmatmul.mubr.f32.gmra.mxu0 %v2869
      %v2984 = vpop.f32.mrf.mxu0
      %v2985 = vadd.f32 %v2906, %v2984
      %v2986 = vpop.f32.mrf.mxu0
      %2987 = vmatprep.mubr.f32.mxu0 0.0
      %2988 = vmatmul.mubr.f32.gmra.mxu0 %v2870
      %v2989 = vpop.f32.mrf.mxu0
      %v2990 = vadd.f32 %v2906, %v2989
      %v2991 = vpop.f32.mrf.mxu0
      %2992 = vmatprep.mubr.f32.mxu0 0.0
      %2993 = vmatmul.mubr.f32.gmra.mxu0 %v2871
      %v2994 = vpop.f32.mrf.mxu0
      %v2995 = vadd.f32 %v2906, %v2994
      %v2996 = vpop.f32.mrf.mxu0
      %2997 = vmatprep.mubr.f32.mxu0 0.0
      %2998 = vmatmul.mubr.f32.gmra.mxu0 %v2872
      %v2999 = vpop.f32.mrf.mxu0
      %v3000 = vadd.f32 %v2906, %v2999
      %v3001 = vpop.f32.mrf.mxu0
      %3002 = vmatprep.mubr.f32.mxu0 0.0
      %3003 = vmatmul.mubr.f32.gmra.mxu0 %v2873
      %v3004 = vpop.f32.mrf.mxu0
      %v3005 = vadd.f32 %v2906, %v3004
      %v3006 = vpop.f32.mrf.mxu0
      %3007 = vmatprep.mubr.f32.mxu0 0.0
      %3008 = vmatmul.mubr.f32.gmra.mxu0 %v2874
      %v3009 = vpop.f32.mrf.mxu0
      %v3010 = vadd.f32 %v2906, %v3009
      %v3011 = vpop.f32.mrf.mxu0
      %3012 = vmatprep.mubr.f32.mxu0 0.0
      %3013 = vmatmul.mubr.f32.gmra.mxu0 %v2875
      %v3014 = vpop.f32.mrf.mxu0
      %v3015 = vadd.f32 %v2906, %v3014
      %v3016 = vpop.f32.mrf.mxu0
      %3017 = vmatprep.mubr.f32.mxu0 0.0
      %3018 = vmatmul.mubr.f32.gmra.mxu0 %v2876
      %v3019 = vpop.f32.mrf.mxu0
      %v3020 = vadd.f32 %v2906, %v3019
      %v3021 = vpop.f32.mrf.mxu0
      %3022 = vmatprep.mubr.f32.mxu0 0.0
      %3023 = vmatmul.mubr.f32.gmra.mxu0 %v2877
      %v3024 = vpop.f32.mrf.mxu0
      %v3025 = vadd.f32 %v2906, %v3024
      %v3026 = vpop.f32.mrf.mxu0
      %3027 = vmatprep.mubr.f32.mxu0 0.0
      %3028 = vmatmul.mubr.f32.gmra.mxu0 %v2878
      %v3029 = vpop.f32.mrf.mxu0
      %v3030 = vadd.f32 %v2906, %v3029
      %v3031 = vpop.f32.mrf.mxu0
      %3032 = vmatprep.mubr.f32.mxu0 0.0
      %3033 = vmatmul.mubr.f32.gmra.mxu0 %v2879
      %v3034 = vpop.f32.mrf.mxu0
      %v3035 = vadd.f32 %v2906, %v3034
      %v3036 = vpop.f32.mrf.mxu0
      %3037 = vmatprep.mubr.f32.mxu0 0.0
      %3038 = vmatmul.mubr.f32.gmra.mxu0 %v2880
      %v3039 = vpop.f32.mrf.mxu0
      %v3040 = vadd.f32 %v2906, %v3039
      %v3041 = vpop.f32.mrf.mxu0
      %3042 = vmatprep.mubr.f32.mxu0 0.0
      %3043 = vmatmul.mubr.f32.gmra.mxu0 %v2881
      %v3044 = vpop.f32.mrf.mxu0
      %v3045 = vadd.f32 %v2906, %v3044
      %v3046 = vpop.f32.mrf.mxu0
      %3047 = vmatprep.mubr.f32.mxu0 0.0
      %3048 = vmatmul.mubr.f32.gmra.mxu0 %v2882
      %v3049 = vpop.f32.mrf.mxu0
      %v3050 = vadd.f32 %v2906, %v3049
      %v3051 = vpop.f32.mrf.mxu0
      %3052 = vmatprep.mubr.f32.mxu0 0.0
      %3053 = vmatmul.mubr.f32.gmra.mxu0 %v2883
      %v3054 = vpop.f32.mrf.mxu0
      %v3055 = vadd.f32 %v2906, %v3054
      %v3056 = vpop.f32.mrf.mxu0
      %3057 = vmatprep.mubr.f32.mxu0 0.0
      %3058 = vmatmul.mubr.f32.gmra.mxu0 %v2884
      %v3059 = vpop.f32.mrf.mxu0
      %v3060 = vadd.f32 %v2906, %v3059
      %v3061 = vpop.f32.mrf.mxu0
      %3062 = vdwg.mxu0
      %3064 = vset.pattern.permute.xlu0 0
      %3065 = vperm.xlu0 %3064, %v2832
      %v3066 = vpop.permute.xlu0 %3065
      %3069 = vset.pattern.permute.xlu0 0
      %3070 = vperm.xlu0 %3069, %v2834
      %v3071 = vpop.permute.xlu0 %3070
      %3074 = vset.pattern.permute.xlu0 0
      %3075 = vperm.xlu0 %3074, %v2836
      %v3076 = vpop.permute.xlu0 %3075
      %3079 = vset.pattern.permute.xlu0 0
      %3080 = vperm.xlu0 %3079, %v2838
      %v3081 = vpop.permute.xlu0 %3080
      %3084 = vset.pattern.permute.xlu0 0
      %3085 = vperm.xlu0 %3084, %v2840
      %v3086 = vpop.permute.xlu0 %3085
      %3089 = vset.pattern.permute.xlu0 0
      %3090 = vperm.xlu0 %3089, %v2842
      %v3091 = vpop.permute.xlu0 %3090
      %3094 = vset.pattern.permute.xlu0 0
      %3095 = vperm.xlu0 %3094, %v2844
      %v3096 = vpop.permute.xlu0 %3095
      %3099 = vset.pattern.permute.xlu0 0
      %3100 = vperm.xlu0 %3099, %v2846
      %v3101 = vpop.permute.xlu0 %3100
      %3104 = vset.pattern.permute.xlu0 0
      %3105 = vperm.xlu0 %3104, %v2848
      %v3106 = vpop.permute.xlu0 %3105
      %3109 = vset.pattern.permute.xlu0 0
      %3110 = vperm.xlu0 %3109, %v2850
      %v3111 = vpop.permute.xlu0 %3110
      %3114 = vset.pattern.permute.xlu0 0
      %3115 = vperm.xlu0 %3114, %v2852
      %v3116 = vpop.permute.xlu0 %3115
      %3119 = vset.pattern.permute.xlu0 0
      %3120 = vperm.xlu0 %3119, %v2854
      %v3121 = vpop.permute.xlu0 %3120
      %3124 = vset.pattern.permute.xlu0 0
      %3125 = vperm.xlu0 %3124, %v2856
      %v3126 = vpop.permute.xlu0 %3125
      %3129 = vset.pattern.permute.xlu0 0
      %3130 = vperm.xlu0 %3129, %v2858
      %v3131 = vpop.permute.xlu0 %3130
      %3134 = vset.pattern.permute.xlu0 0
      %3135 = vperm.xlu0 %3134, %v2860
      %v3136 = vpop.permute.xlu0 %3135
      %3139 = vset.pattern.permute.xlu0 0
      %3140 = vperm.xlu0 %3139, %v2862
      %v3141 = vpop.permute.xlu0 %3140
      %3144 = vset.pattern.permute.xlu0 0
      %3145 = vperm.xlu0 %3144, %v2864
      %v3146 = vpop.permute.xlu0 %3145
      %3149 = vset.pattern.permute.xlu0 0
      %3150 = vperm.xlu0 %3149, %v2866
      %v3151 = vpop.permute.xlu0 %3150
      %v3153 = vmul.f32 %v2975, %v3066
      %v3154 = vmul.f32 %v2980, %v3071
      %v3155 = vmul.f32 %v2985, %v3076
      %v3156 = vmul.f32 %v2990, %v3081
      %v3157 = vmul.f32 %v2995, %v3086
      %v3158 = vmul.f32 %v3000, %v3091
      %v3159 = vmul.f32 %v3005, %v3096
      %v3160 = vmul.f32 %v3010, %v3101
      %v3161 = vmul.f32 %v3015, %v3106
      %v3162 = vmul.f32 %v3020, %v3111
      %v3163 = vmul.f32 %v3025, %v3116
      %v3164 = vmul.f32 %v3030, %v3121
      %v3165 = vmul.f32 %v3035, %v3126
      %v3166 = vmul.f32 %v3040, %v3131
      %v3167 = vmul.f32 %v3045, %v3136
      %v3168 = vmul.f32 %v3050, %v3141
      %v3169 = vmul.f32 %v3055, %v3146
      %v3170 = vmul.f32 %v3060, %v3151
      %v3171 = vadd.f32 %v3153, 0.0
      %v3172 = vadd.f32 %v3154, 0.0
      %v3173 = vadd.f32 %v3155, 0.0
      %v3174 = vadd.f32 %v3156, 0.0
      %v3175 = vadd.f32 %v3157, 0.0
      %v3176 = vadd.f32 %v3158, 0.0
      %v3177 = vadd.f32 %v3159, 0.0
      %v3178 = vadd.f32 %v3160, 0.0
      %v3179 = vadd.f32 %v3161, 0.0
      %v3180 = vadd.f32 %v3162, 0.0
      %v3181 = vadd.f32 %v3163, 0.0
      %v3182 = vadd.f32 %v3164, 0.0
      %v3183 = vadd.f32 %v3165, 0.0
      %v3184 = vadd.f32 %v3166, 0.0
      %v3185 = vadd.f32 %v3167, 0.0
      %v3186 = vadd.f32 %v3168, 0.0
      %v3187 = vadd.f32 %v3169, 0.0
      %v3188 = vadd.f32 %v3170, 0.0
      %s3189 = scalar_lea.vmem %s3, 128
      %v3190 = vld [vmem:[%s3189] sm:$0xff]
      %v3191 = vld [vmem:[%s3189 + $0x8] sm:$0xff]
      %v3192 = vld [vmem:[%s3189 + $0x10] sm:$0xff]
      %v3193 = vld [vmem:[%s3189 + $0x18] sm:$0xff]
      %v3194 = vld [vmem:[%s3189 + $0x20] sm:$0xff]
      %v3195 = vld [vmem:[%s3189 + $0x28] sm:$0xff]
      %v3196 = vld [vmem:[%s3189 + $0x30] sm:$0xff]
      %v3197 = vld [vmem:[%s3189 + $0x38] sm:$0xff]
      %v3198 = vld [vmem:[%s3189 + $0x40] sm:$0xff]
      %v3199 = vld [vmem:[%s3189 + $0x48] sm:$0xff]
      %v3200 = vld [vmem:[%s3189 + $0x50] sm:$0xff]
      %v3201 = vld [vmem:[%s3189 + $0x58] sm:$0xff]
      %v3202 = vld [vmem:[%s3189 + $0x60] sm:$0xff]
      %v3203 = vld [vmem:[%s3189 + $0x68] sm:$0xff]
      %v3204 = vld [vmem:[%s3189 + $0x70] sm:$0xff]
      %v3205 = vld [vmem:[%s3189 + $0x78] sm:$0xff]
      %s3206 = scalar_lea.vmem %s4, 1
      %v3207 = vld [vmem:[%s3206] sm:$0x1]
      %v3209 = vlaneseq
      %v3210 = vshrl.u32 %v3209, 7
      %v3211 = vsub.s32 0, %v3210
      %v3212 = vrot.slane %v3207, %v3211
      %3214 = vmatprep.subr.mxu0 0.0
      %3215 = vmatpush1.msra.mxu0 %v3205
      %3216 = vmatprep.subr.mxu0 0.0
      %3217 = vmatpush1.msra.mxu0 %v3204
      %3218 = vmatprep.subr.mxu0 0.0
      %3219 = vmatpush1.msra.mxu0 %v3203
      %3220 = vmatprep.subr.mxu0 0.0
      %3221 = vmatpush1.msra.mxu0 %v3202
      %3222 = vmatprep.subr.mxu0 0.0
      %3223 = vmatpush1.msra.mxu0 %v3201
      %3224 = vmatprep.subr.mxu0 0.0
      %3225 = vmatpush1.msra.mxu0 %v3200
      %3226 = vmatprep.subr.mxu0 0.0
      %3227 = vmatpush1.msra.mxu0 %v3199
      %3228 = vmatprep.subr.mxu0 0.0
      %3229 = vmatpush1.msra.mxu0 %v3198
      %3230 = vmatprep.subr.mxu0 0.0
      %3231 = vmatpush1.msra.mxu0 %v3197
      %3232 = vmatprep.subr.mxu0 0.0
      %3233 = vmatpush1.msra.mxu0 %v3196
      %3234 = vmatprep.subr.mxu0 0.0
      %3235 = vmatpush1.msra.mxu0 %v3195
      %3236 = vmatprep.subr.mxu0 0.0
      %3237 = vmatpush1.msra.mxu0 %v3194
      %3238 = vmatprep.subr.mxu0 0.0
      %3239 = vmatpush1.msra.mxu0 %v3193
      %3240 = vmatprep.subr.mxu0 0.0
      %3241 = vmatpush1.msra.mxu0 %v3192
      %3242 = vmatprep.subr.mxu0 0.0
      %3243 = vmatpush1.msra.mxu0 %v3191
      %3244 = vmatprep.subr.mxu0 0.0
      %3245 = vmatpush1.msra.mxu0 %v3190
      %3246 = vmatprep.subr.mxu0 0.0
      %3247 = vmatpush2.msra.mxu0 0.0
      %3248 = vmatprep.subr.mxu0 0.0
      %3249 = vmatpush2.msra.mxu0 0.0
      %3250 = vmatprep.subr.mxu0 0.0
      %3251 = vmatpush2.msra.mxu0 0.0
      %3252 = vmatprep.subr.mxu0 0.0
      %3253 = vmatpush2.msra.mxu0 0.0
      %3254 = vmatprep.subr.mxu0 0.0
      %3255 = vmatpush2.msra.mxu0 0.0
      %3256 = vmatprep.subr.mxu0 0.0
      %3257 = vmatpush2.msra.mxu0 0.0
      %3258 = vmatprep.subr.mxu0 0.0
      %3259 = vmatpush2.msra.mxu0 0.0
      %3260 = vmatprep.subr.mxu0 0.0
      %3261 = vmatpush2.msra.mxu0 0.0
      %3262 = vmatprep.subr.mxu0 0.0
      %3263 = vmatpush2.msra.mxu0 0.0
      %3264 = vmatprep.subr.mxu0 0.0
      %3265 = vmatpush2.msra.mxu0 0.0
      %3266 = vmatprep.subr.mxu0 0.0
      %3267 = vmatpush2.msra.mxu0 0.0
      %3268 = vmatprep.subr.mxu0 0.0
      %3269 = vmatpush2.msra.mxu0 0.0
      %3270 = vmatprep.subr.mxu0 0.0
      %3271 = vmatpush2.msra.mxu0 0.0
      %3272 = vmatprep.subr.mxu0 0.0
      %3273 = vmatpush2.msra.mxu0 0.0
      %3274 = vmatprep.subr.mxu0 0.0
      %3275 = vmatpush2.msra.mxu0 0.0
      %3276 = vmatprep.subr.mxu0 0.0
      %3277 = vmatpush2.msra.mxu0 0.0
      %3278 = vmatprep.mubr.f32.mxu0 0.0
      %3279 = vmatmul.mubr.f32.gmra.mxu0 %v2867
      %v3280 = vpop.f32.mrf.mxu0
      %v3281 = vadd.f32 %v3212, %v3280
      %v3282 = vpop.f32.mrf.mxu0
      %3283 = vmatprep.mubr.f32.mxu0 0.0
      %3284 = vmatmul.mubr.f32.gmra.mxu0 %v2868
      %v3285 = vpop.f32.mrf.mxu0
      %v3286 = vadd.f32 %v3212, %v3285
      %v3287 = vpop.f32.mrf.mxu0
      %3288 = vmatprep.mubr.f32.mxu0 0.0
      %3289 = vmatmul.mubr.f32.gmra.mxu0 %v2869
      %v3290 = vpop.f32.mrf.mxu0
      %v3291 = vadd.f32 %v3212, %v3290
      %v3292 = vpop.f32.mrf.mxu0
      %3293 = vmatprep.mubr.f32.mxu0 0.0
      %3294 = vmatmul.mubr.f32.gmra.mxu0 %v2870
      %v3295 = vpop.f32.mrf.mxu0
      %v3296 = vadd.f32 %v3212, %v3295
      %v3297 = vpop.f32.mrf.mxu0
      %3298 = vmatprep.mubr.f32.mxu0 0.0
      %3299 = vmatmul.mubr.f32.gmra.mxu0 %v2871
      %v3300 = vpop.f32.mrf.mxu0
      %v3301 = vadd.f32 %v3212, %v3300
      %v3302 = vpop.f32.mrf.mxu0
      %3303 = vmatprep.mubr.f32.mxu0 0.0
      %3304 = vmatmul.mubr.f32.gmra.mxu0 %v2872
      %v3305 = vpop.f32.mrf.mxu0
      %v3306 = vadd.f32 %v3212, %v3305
      %v3307 = vpop.f32.mrf.mxu0
      %3308 = vmatprep.mubr.f32.mxu0 0.0
      %3309 = vmatmul.mubr.f32.gmra.mxu0 %v2873
      %v3310 = vpop.f32.mrf.mxu0
      %v3311 = vadd.f32 %v3212, %v3310
      %v3312 = vpop.f32.mrf.mxu0
      %3313 = vmatprep.mubr.f32.mxu0 0.0
      %3314 = vmatmul.mubr.f32.gmra.mxu0 %v2874
      %v3315 = vpop.f32.mrf.mxu0
      %v3316 = vadd.f32 %v3212, %v3315
      %v3317 = vpop.f32.mrf.mxu0
      %3318 = vmatprep.mubr.f32.mxu0 0.0
      %3319 = vmatmul.mubr.f32.gmra.mxu0 %v2875
      %v3320 = vpop.f32.mrf.mxu0
      %v3321 = vadd.f32 %v3212, %v3320
      %v3322 = vpop.f32.mrf.mxu0
      %3323 = vmatprep.mubr.f32.mxu0 0.0
      %3324 = vmatmul.mubr.f32.gmra.mxu0 %v2876
      %v3325 = vpop.f32.mrf.mxu0
      %v3326 = vadd.f32 %v3212, %v3325
      %v3327 = vpop.f32.mrf.mxu0
      %3328 = vmatprep.mubr.f32.mxu0 0.0
      %3329 = vmatmul.mubr.f32.gmra.mxu0 %v2877
      %v3330 = vpop.f32.mrf.mxu0
      %v3331 = vadd.f32 %v3212, %v3330
      %v3332 = vpop.f32.mrf.mxu0
      %3333 = vmatprep.mubr.f32.mxu0 0.0
      %3334 = vmatmul.mubr.f32.gmra.mxu0 %v2878
      %v3335 = vpop.f32.mrf.mxu0
      %v3336 = vadd.f32 %v3212, %v3335
      %v3337 = vpop.f32.mrf.mxu0
      %3338 = vmatprep.mubr.f32.mxu0 0.0
      %3339 = vmatmul.mubr.f32.gmra.mxu0 %v2879
      %v3340 = vpop.f32.mrf.mxu0
      %v3341 = vadd.f32 %v3212, %v3340
      %v3342 = vpop.f32.mrf.mxu0
      %3343 = vmatprep.mubr.f32.mxu0 0.0
      %3344 = vmatmul.mubr.f32.gmra.mxu0 %v2880
      %v3345 = vpop.f32.mrf.mxu0
      %v3346 = vadd.f32 %v3212, %v3345
      %v3347 = vpop.f32.mrf.mxu0
      %3348 = vmatprep.mubr.f32.mxu0 0.0
      %3349 = vmatmul.mubr.f32.gmra.mxu0 %v2881
      %v3350 = vpop.f32.mrf.mxu0
      %v3351 = vadd.f32 %v3212, %v3350
      %v3352 = vpop.f32.mrf.mxu0
      %3353 = vmatprep.mubr.f32.mxu0 0.0
      %3354 = vmatmul.mubr.f32.gmra.mxu0 %v2882
      %v3355 = vpop.f32.mrf.mxu0
      %v3356 = vadd.f32 %v3212, %v3355
      %v3357 = vpop.f32.mrf.mxu0
      %3358 = vmatprep.mubr.f32.mxu0 0.0
      %3359 = vmatmul.mubr.f32.gmra.mxu0 %v2883
      %v3360 = vpop.f32.mrf.mxu0
      %v3361 = vadd.f32 %v3212, %v3360
      %v3362 = vpop.f32.mrf.mxu0
      %3363 = vmatprep.mubr.f32.mxu0 0.0
      %3364 = vmatmul.mubr.f32.gmra.mxu0 %v2884
      %v3365 = vpop.f32.mrf.mxu0
      %v3366 = vadd.f32 %v3212, %v3365
      %v3367 = vpop.f32.mrf.mxu0
      %3368 = vdwg.mxu0
      %3369 = vset.pattern.permute.xlu0 1
      %3370 = vperm.xlu0 %3369, %v2832
      %v3371 = vpop.permute.xlu0 %3370
      %3373 = vset.pattern.permute.xlu0 1
      %3374 = vperm.xlu0 %3373, %v2834
      %v3375 = vpop.permute.xlu0 %3374
      %3377 = vset.pattern.permute.xlu0 1
      %3378 = vperm.xlu0 %3377, %v2836
      %v3379 = vpop.permute.xlu0 %3378
      %3381 = vset.pattern.permute.xlu0 1
      %3382 = vperm.xlu0 %3381, %v2838
      %v3383 = vpop.permute.xlu0 %3382
      %3385 = vset.pattern.permute.xlu0 1
      %3386 = vperm.xlu0 %3385, %v2840
      %v3387 = vpop.permute.xlu0 %3386
      %3389 = vset.pattern.permute.xlu0 1
      %3390 = vperm.xlu0 %3389, %v2842
      %v3391 = vpop.permute.xlu0 %3390
      %3393 = vset.pattern.permute.xlu0 1
      %3394 = vperm.xlu0 %3393, %v2844
      %v3395 = vpop.permute.xlu0 %3394
      %3397 = vset.pattern.permute.xlu0 1
      %3398 = vperm.xlu0 %3397, %v2846
      %v3399 = vpop.permute.xlu0 %3398
      %3401 = vset.pattern.permute.xlu0 1
      %3402 = vperm.xlu0 %3401, %v2848
      %v3403 = vpop.permute.xlu0 %3402
      %3405 = vset.pattern.permute.xlu0 1
      %3406 = vperm.xlu0 %3405, %v2850
      %v3407 = vpop.permute.xlu0 %3406
      %3409 = vset.pattern.permute.xlu0 1
      %3410 = vperm.xlu0 %3409, %v2852
      %v3411 = vpop.permute.xlu0 %3410
      %3413 = vset.pattern.permute.xlu0 1
      %3414 = vperm.xlu0 %3413, %v2854
      %v3415 = vpop.permute.xlu0 %3414
      %3417 = vset.pattern.permute.xlu0 1
      %3418 = vperm.xlu0 %3417, %v2856
      %v3419 = vpop.permute.xlu0 %3418
      %3421 = vset.pattern.permute.xlu0 1
      %3422 = vperm.xlu0 %3421, %v2858
      %v3423 = vpop.permute.xlu0 %3422
      %3425 = vset.pattern.permute.xlu0 1
      %3426 = vperm.xlu0 %3425, %v2860
      %v3427 = vpop.permute.xlu0 %3426
      %3429 = vset.pattern.permute.xlu0 1
      %3430 = vperm.xlu0 %3429, %v2862
      %v3431 = vpop.permute.xlu0 %3430
      %3433 = vset.pattern.permute.xlu0 1
      %3434 = vperm.xlu0 %3433, %v2864
      %v3435 = vpop.permute.xlu0 %3434
      %3437 = vset.pattern.permute.xlu0 1
      %3438 = vperm.xlu0 %3437, %v2866
      %v3439 = vpop.permute.xlu0 %3438
      %v3441 = vmul.f32 %v3281, %v3371
      %v3442 = vmul.f32 %v3286, %v3375
      %v3443 = vmul.f32 %v3291, %v3379
      %v3444 = vmul.f32 %v3296, %v3383
      %v3445 = vmul.f32 %v3301, %v3387
      %v3446 = vmul.f32 %v3306, %v3391
      %v3447 = vmul.f32 %v3311, %v3395
      %v3448 = vmul.f32 %v3316, %v3399
      %v3449 = vmul.f32 %v3321, %v3403
      %v3450 = vmul.f32 %v3326, %v3407
      %v3451 = vmul.f32 %v3331, %v3411
      %v3452 = vmul.f32 %v3336, %v3415
      %v3453 = vmul.f32 %v3341, %v3419
      %v3454 = vmul.f32 %v3346, %v3423
      %v3455 = vmul.f32 %v3351, %v3427
      %v3456 = vmul.f32 %v3356, %v3431
      %v3457 = vmul.f32 %v3361, %v3435
      %v3458 = vmul.f32 %v3366, %v3439
      %v3459 = vadd.f32 %v3171, %v3441
      %v3460 = vadd.f32 %v3172, %v3442
      %v3461 = vadd.f32 %v3173, %v3443
      %v3462 = vadd.f32 %v3174, %v3444
      %v3463 = vadd.f32 %v3175, %v3445
      %v3464 = vadd.f32 %v3176, %v3446
      %v3465 = vadd.f32 %v3177, %v3447
      %v3466 = vadd.f32 %v3178, %v3448
      %v3467 = vadd.f32 %v3179, %v3449
      %v3468 = vadd.f32 %v3180, %v3450
      %v3469 = vadd.f32 %v3181, %v3451
      %v3470 = vadd.f32 %v3182, %v3452
      %v3471 = vadd.f32 %v3183, %v3453
      %v3472 = vadd.f32 %v3184, %v3454
      %v3473 = vadd.f32 %v3185, %v3455
      %v3474 = vadd.f32 %v3186, %v3456
      %v3475 = vadd.f32 %v3187, %v3457
      %v3476 = vadd.f32 %v3188, %v3458
      %s3477 = scalar_lea.vmem %s3, 256
      %v3478 = vld [vmem:[%s3477] sm:$0xff]
      %v3479 = vld [vmem:[%s3477 + $0x8] sm:$0xff]
      %v3480 = vld [vmem:[%s3477 + $0x10] sm:$0xff]
      %v3481 = vld [vmem:[%s3477 + $0x18] sm:$0xff]
      %v3482 = vld [vmem:[%s3477 + $0x20] sm:$0xff]
      %v3483 = vld [vmem:[%s3477 + $0x28] sm:$0xff]
      %v3484 = vld [vmem:[%s3477 + $0x30] sm:$0xff]
      %v3485 = vld [vmem:[%s3477 + $0x38] sm:$0xff]
      %v3486 = vld [vmem:[%s3477 + $0x40] sm:$0xff]
      %v3487 = vld [vmem:[%s3477 + $0x48] sm:$0xff]
      %v3488 = vld [vmem:[%s3477 + $0x50] sm:$0xff]
      %v3489 = vld [vmem:[%s3477 + $0x58] sm:$0xff]
      %v3490 = vld [vmem:[%s3477 + $0x60] sm:$0xff]
      %v3491 = vld [vmem:[%s3477 + $0x68] sm:$0xff]
      %v3492 = vld [vmem:[%s3477 + $0x70] sm:$0xff]
      %v3493 = vld [vmem:[%s3477 + $0x78] sm:$0xff]
      %s3494 = scalar_lea.vmem %s4, 2
      %v3495 = vld [vmem:[%s3494] sm:$0x1]
      %v3497 = vlaneseq
      %v3498 = vshrl.u32 %v3497, 7
      %v3499 = vsub.s32 0, %v3498
      %v3500 = vrot.slane %v3495, %v3499
      %3502 = vmatprep.subr.mxu0 0.0
      %3503 = vmatpush1.msra.mxu0 %v3493
      %3504 = vmatprep.subr.mxu0 0.0
      %3505 = vmatpush1.msra.mxu0 %v3492
      %3506 = vmatprep.subr.mxu0 0.0
      %3507 = vmatpush1.msra.mxu0 %v3491
      %3508 = vmatprep.subr.mxu0 0.0
      %3509 = vmatpush1.msra.mxu0 %v3490
      %3510 = vmatprep.subr.mxu0 0.0
      %3511 = vmatpush1.msra.mxu0 %v3489
      %3512 = vmatprep.subr.mxu0 0.0
      %3513 = vmatpush1.msra.mxu0 %v3488
      %3514 = vmatprep.subr.mxu0 0.0
      %3515 = vmatpush1.msra.mxu0 %v3487
      %3516 = vmatprep.subr.mxu0 0.0
      %3517 = vmatpush1.msra.mxu0 %v3486
      %3518 = vmatprep.subr.mxu0 0.0
      %3519 = vmatpush1.msra.mxu0 %v3485
      %3520 = vmatprep.subr.mxu0 0.0
      %3521 = vmatpush1.msra.mxu0 %v3484
      %3522 = vmatprep.subr.mxu0 0.0
      %3523 = vmatpush1.msra.mxu0 %v3483
      %3524 = vmatprep.subr.mxu0 0.0
      %3525 = vmatpush1.msra.mxu0 %v3482
      %3526 = vmatprep.subr.mxu0 0.0
      %3527 = vmatpush1.msra.mxu0 %v3481
      %3528 = vmatprep.subr.mxu0 0.0
      %3529 = vmatpush1.msra.mxu0 %v3480
      %3530 = vmatprep.subr.mxu0 0.0
      %3531 = vmatpush1.msra.mxu0 %v3479
      %3532 = vmatprep.subr.mxu0 0.0
      %3533 = vmatpush1.msra.mxu0 %v3478
      %3534 = vmatprep.subr.mxu0 0.0
      %3535 = vmatpush2.msra.mxu0 0.0
      %3536 = vmatprep.subr.mxu0 0.0
      %3537 = vmatpush2.msra.mxu0 0.0
      %3538 = vmatprep.subr.mxu0 0.0
      %3539 = vmatpush2.msra.mxu0 0.0
      %3540 = vmatprep.subr.mxu0 0.0
      %3541 = vmatpush2.msra.mxu0 0.0
      %3542 = vmatprep.subr.mxu0 0.0
      %3543 = vmatpush2.msra.mxu0 0.0
      %3544 = vmatprep.subr.mxu0 0.0
      %3545 = vmatpush2.msra.mxu0 0.0
      %3546 = vmatprep.subr.mxu0 0.0
      %3547 = vmatpush2.msra.mxu0 0.0
      %3548 = vmatprep.subr.mxu0 0.0
      %3549 = vmatpush2.msra.mxu0 0.0
      %3550 = vmatprep.subr.mxu0 0.0
      %3551 = vmatpush2.msra.mxu0 0.0
      %3552 = vmatprep.subr.mxu0 0.0
      %3553 = vmatpush2.msra.mxu0 0.0
      %3554 = vmatprep.subr.mxu0 0.0
      %3555 = vmatpush2.msra.mxu0 0.0
      %3556 = vmatprep.subr.mxu0 0.0
      %3557 = vmatpush2.msra.mxu0 0.0
      %3558 = vmatprep.subr.mxu0 0.0
      %3559 = vmatpush2.msra.mxu0 0.0
      %3560 = vmatprep.subr.mxu0 0.0
      %3561 = vmatpush2.msra.mxu0 0.0
      %3562 = vmatprep.subr.mxu0 0.0
      %3563 = vmatpush2.msra.mxu0 0.0
      %3564 = vmatprep.subr.mxu0 0.0
      %3565 = vmatpush2.msra.mxu0 0.0
      %3566 = vmatprep.mubr.f32.mxu0 0.0
      %3567 = vmatmul.mubr.f32.gmra.mxu0 %v2867
      %v3568 = vpop.f32.mrf.mxu0
      %v3569 = vadd.f32 %v3500, %v3568
      %v3570 = vpop.f32.mrf.mxu0
      %3571 = vmatprep.mubr.f32.mxu0 0.0
      %3572 = vmatmul.mubr.f32.gmra.mxu0 %v2868
      %v3573 = vpop.f32.mrf.mxu0
      %v3574 = vadd.f32 %v3500, %v3573
      %v3575 = vpop.f32.mrf.mxu0
      %3576 = vmatprep.mubr.f32.mxu0 0.0
      %3577 = vmatmul.mubr.f32.gmra.mxu0 %v2869
      %v3578 = vpop.f32.mrf.mxu0
      %v3579 = vadd.f32 %v3500, %v3578
      %v3580 = vpop.f32.mrf.mxu0
      %3581 = vmatprep.mubr.f32.mxu0 0.0
      %3582 = vmatmul.mubr.f32.gmra.mxu0 %v2870
      %v3583 = vpop.f32.mrf.mxu0
      %v3584 = vadd.f32 %v3500, %v3583
      %v3585 = vpop.f32.mrf.mxu0
      %3586 = vmatprep.mubr.f32.mxu0 0.0
      %3587 = vmatmul.mubr.f32.gmra.mxu0 %v2871
      %v3588 = vpop.f32.mrf.mxu0
      %v3589 = vadd.f32 %v3500, %v3588
      %v3590 = vpop.f32.mrf.mxu0
      %3591 = vmatprep.mubr.f32.mxu0 0.0
      %3592 = vmatmul.mubr.f32.gmra.mxu0 %v2872
      %v3593 = vpop.f32.mrf.mxu0
      %v3594 = vadd.f32 %v3500, %v3593
      %v3595 = vpop.f32.mrf.mxu0
      %3596 = vmatprep.mubr.f32.mxu0 0.0
      %3597 = vmatmul.mubr.f32.gmra.mxu0 %v2873
      %v3598 = vpop.f32.mrf.mxu0
      %v3599 = vadd.f32 %v3500, %v3598
      %v3600 = vpop.f32.mrf.mxu0
      %3601 = vmatprep.mubr.f32.mxu0 0.0
      %3602 = vmatmul.mubr.f32.gmra.mxu0 %v2874
      %v3603 = vpop.f32.mrf.mxu0
      %v3604 = vadd.f32 %v3500, %v3603
      %v3605 = vpop.f32.mrf.mxu0
      %3606 = vmatprep.mubr.f32.mxu0 0.0
      %3607 = vmatmul.mubr.f32.gmra.mxu0 %v2875
      %v3608 = vpop.f32.mrf.mxu0
      %v3609 = vadd.f32 %v3500, %v3608
      %v3610 = vpop.f32.mrf.mxu0
      %3611 = vmatprep.mubr.f32.mxu0 0.0
      %3612 = vmatmul.mubr.f32.gmra.mxu0 %v2876
      %v3613 = vpop.f32.mrf.mxu0
      %v3614 = vadd.f32 %v3500, %v3613
      %v3615 = vpop.f32.mrf.mxu0
      %3616 = vmatprep.mubr.f32.mxu0 0.0
      %3617 = vmatmul.mubr.f32.gmra.mxu0 %v2877
      %v3618 = vpop.f32.mrf.mxu0
      %v3619 = vadd.f32 %v3500, %v3618
      %v3620 = vpop.f32.mrf.mxu0
      %3621 = vmatprep.mubr.f32.mxu0 0.0
      %3622 = vmatmul.mubr.f32.gmra.mxu0 %v2878
      %v3623 = vpop.f32.mrf.mxu0
      %v3624 = vadd.f32 %v3500, %v3623
      %v3625 = vpop.f32.mrf.mxu0
      %3626 = vmatprep.mubr.f32.mxu0 0.0
      %3627 = vmatmul.mubr.f32.gmra.mxu0 %v2879
      %v3628 = vpop.f32.mrf.mxu0
      %v3629 = vadd.f32 %v3500, %v3628
      %v3630 = vpop.f32.mrf.mxu0
      %3631 = vmatprep.mubr.f32.mxu0 0.0
      %3632 = vmatmul.mubr.f32.gmra.mxu0 %v2880
      %v3633 = vpop.f32.mrf.mxu0
      %v3634 = vadd.f32 %v3500, %v3633
      %v3635 = vpop.f32.mrf.mxu0
      %3636 = vmatprep.mubr.f32.mxu0 0.0
      %3637 = vmatmul.mubr.f32.gmra.mxu0 %v2881
      %v3638 = vpop.f32.mrf.mxu0
      %v3639 = vadd.f32 %v3500, %v3638
      %v3640 = vpop.f32.mrf.mxu0
      %3641 = vmatprep.mubr.f32.mxu0 0.0
      %3642 = vmatmul.mubr.f32.gmra.mxu0 %v2882
      %v3643 = vpop.f32.mrf.mxu0
      %v3644 = vadd.f32 %v3500, %v3643
      %v3645 = vpop.f32.mrf.mxu0
      %3646 = vmatprep.mubr.f32.mxu0 0.0
      %3647 = vmatmul.mubr.f32.gmra.mxu0 %v2883
      %v3648 = vpop.f32.mrf.mxu0
      %v3649 = vadd.f32 %v3500, %v3648
      %v3650 = vpop.f32.mrf.mxu0
      %3651 = vmatprep.mubr.f32.mxu0 0.0
      %3652 = vmatmul.mubr.f32.gmra.mxu0 %v2884
      %v3653 = vpop.f32.mrf.mxu0
      %v3654 = vadd.f32 %v3500, %v3653
      %v3655 = vpop.f32.mrf.mxu0
      %3656 = vdwg.mxu0
      %3657 = vset.pattern.permute.xlu0 2
      %3658 = vperm.xlu0 %3657, %v2832
      %v3659 = vpop.permute.xlu0 %3658
      %3661 = vset.pattern.permute.xlu0 2
      %3662 = vperm.xlu0 %3661, %v2834
      %v3663 = vpop.permute.xlu0 %3662
      %3665 = vset.pattern.permute.xlu0 2
      %3666 = vperm.xlu0 %3665, %v2836
      %v3667 = vpop.permute.xlu0 %3666
      %3669 = vset.pattern.permute.xlu0 2
      %3670 = vperm.xlu0 %3669, %v2838
      %v3671 = vpop.permute.xlu0 %3670
      %3673 = vset.pattern.permute.xlu0 2
      %3674 = vperm.xlu0 %3673, %v2840
      %v3675 = vpop.permute.xlu0 %3674
      %3677 = vset.pattern.permute.xlu0 2
      %3678 = vperm.xlu0 %3677, %v2842
      %v3679 = vpop.permute.xlu0 %3678
      %3681 = vset.pattern.permute.xlu0 2
      %3682 = vperm.xlu0 %3681, %v2844
      %v3683 = vpop.permute.xlu0 %3682
      %3685 = vset.pattern.permute.xlu0 2
      %3686 = vperm.xlu0 %3685, %v2846
      %v3687 = vpop.permute.xlu0 %3686
      %3689 = vset.pattern.permute.xlu0 2
      %3690 = vperm.xlu0 %3689, %v2848
      %v3691 = vpop.permute.xlu0 %3690
      %3693 = vset.pattern.permute.xlu0 2
      %3694 = vperm.xlu0 %3693, %v2850
      %v3695 = vpop.permute.xlu0 %3694
      %3697 = vset.pattern.permute.xlu0 2
      %3698 = vperm.xlu0 %3697, %v2852
      %v3699 = vpop.permute.xlu0 %3698
      %3701 = vset.pattern.permute.xlu0 2
      %3702 = vperm.xlu0 %3701, %v2854
      %v3703 = vpop.permute.xlu0 %3702
      %3705 = vset.pattern.permute.xlu0 2
      %3706 = vperm.xlu0 %3705, %v2856
      %v3707 = vpop.permute.xlu0 %3706
      %3709 = vset.pattern.permute.xlu0 2
      %3710 = vperm.xlu0 %3709, %v2858
      %v3711 = vpop.permute.xlu0 %3710
      %3713 = vset.pattern.permute.xlu0 2
      %3714 = vperm.xlu0 %3713, %v2860
      %v3715 = vpop.permute.xlu0 %3714
      %3717 = vset.pattern.permute.xlu0 2
      %3718 = vperm.xlu0 %3717, %v2862
      %v3719 = vpop.permute.xlu0 %3718
      %3721 = vset.pattern.permute.xlu0 2
      %3722 = vperm.xlu0 %3721, %v2864
      %v3723 = vpop.permute.xlu0 %3722
      %3725 = vset.pattern.permute.xlu0 2
      %3726 = vperm.xlu0 %3725, %v2866
      %v3727 = vpop.permute.xlu0 %3726
      %v3729 = vmul.f32 %v3569, %v3659
      %v3730 = vmul.f32 %v3574, %v3663
      %v3731 = vmul.f32 %v3579, %v3667
      %v3732 = vmul.f32 %v3584, %v3671
      %v3733 = vmul.f32 %v3589, %v3675
      %v3734 = vmul.f32 %v3594, %v3679
      %v3735 = vmul.f32 %v3599, %v3683
      %v3736 = vmul.f32 %v3604, %v3687
      %v3737 = vmul.f32 %v3609, %v3691
      %v3738 = vmul.f32 %v3614, %v3695
      %v3739 = vmul.f32 %v3619, %v3699
      %v3740 = vmul.f32 %v3624, %v3703
      %v3741 = vmul.f32 %v3629, %v3707
      %v3742 = vmul.f32 %v3634, %v3711
      %v3743 = vmul.f32 %v3639, %v3715
      %v3744 = vmul.f32 %v3644, %v3719
      %v3745 = vmul.f32 %v3649, %v3723
      %v3746 = vmul.f32 %v3654, %v3727
      %v3747 = vadd.f32 %v3459, %v3729
      %v3748 = vadd.f32 %v3460, %v3730
      %v3749 = vadd.f32 %v3461, %v3731
      %v3750 = vadd.f32 %v3462, %v3732
      %v3751 = vadd.f32 %v3463, %v3733
      %v3752 = vadd.f32 %v3464, %v3734
      %v3753 = vadd.f32 %v3465, %v3735
      %v3754 = vadd.f32 %v3466, %v3736
      %v3755 = vadd.f32 %v3467, %v3737
      %v3756 = vadd.f32 %v3468, %v3738
      %v3757 = vadd.f32 %v3469, %v3739
      %v3758 = vadd.f32 %v3470, %v3740
      %v3759 = vadd.f32 %v3471, %v3741
      %v3760 = vadd.f32 %v3472, %v3742
      %v3761 = vadd.f32 %v3473, %v3743
      %v3762 = vadd.f32 %v3474, %v3744
      %v3763 = vadd.f32 %v3475, %v3745
      %v3764 = vadd.f32 %v3476, %v3746
      %s3765 = scalar_lea.vmem %s3, 384
      %v3766 = vld [vmem:[%s3765] sm:$0xff]
      %v3767 = vld [vmem:[%s3765 + $0x8] sm:$0xff]
      %v3768 = vld [vmem:[%s3765 + $0x10] sm:$0xff]
      %v3769 = vld [vmem:[%s3765 + $0x18] sm:$0xff]
      %v3770 = vld [vmem:[%s3765 + $0x20] sm:$0xff]
      %v3771 = vld [vmem:[%s3765 + $0x28] sm:$0xff]
      %v3772 = vld [vmem:[%s3765 + $0x30] sm:$0xff]
      %v3773 = vld [vmem:[%s3765 + $0x38] sm:$0xff]
      %v3774 = vld [vmem:[%s3765 + $0x40] sm:$0xff]
      %v3775 = vld [vmem:[%s3765 + $0x48] sm:$0xff]
      %v3776 = vld [vmem:[%s3765 + $0x50] sm:$0xff]
      %v3777 = vld [vmem:[%s3765 + $0x58] sm:$0xff]
      %v3778 = vld [vmem:[%s3765 + $0x60] sm:$0xff]
      %v3779 = vld [vmem:[%s3765 + $0x68] sm:$0xff]
      %v3780 = vld [vmem:[%s3765 + $0x70] sm:$0xff]
      %v3781 = vld [vmem:[%s3765 + $0x78] sm:$0xff]
      %s3782 = scalar_lea.vmem %s4, 3
      %v3783 = vld [vmem:[%s3782] sm:$0x1]
      %v3785 = vlaneseq
      %v3786 = vshrl.u32 %v3785, 7
      %v3787 = vsub.s32 0, %v3786
      %v3788 = vrot.slane %v3783, %v3787
      %3790 = vmatprep.subr.mxu0 0.0
      %3791 = vmatpush1.msra.mxu0 %v3781
      %3792 = vmatprep.subr.mxu0 0.0
      %3793 = vmatpush1.msra.mxu0 %v3780
      %3794 = vmatprep.subr.mxu0 0.0
      %3795 = vmatpush1.msra.mxu0 %v3779
      %3796 = vmatprep.subr.mxu0 0.0
      %3797 = vmatpush1.msra.mxu0 %v3778
      %3798 = vmatprep.subr.mxu0 0.0
      %3799 = vmatpush1.msra.mxu0 %v3777
      %3800 = vmatprep.subr.mxu0 0.0
      %3801 = vmatpush1.msra.mxu0 %v3776
      %3802 = vmatprep.subr.mxu0 0.0
      %3803 = vmatpush1.msra.mxu0 %v3775
      %3804 = vmatprep.subr.mxu0 0.0
      %3805 = vmatpush1.msra.mxu0 %v3774
      %3806 = vmatprep.subr.mxu0 0.0
      %3807 = vmatpush1.msra.mxu0 %v3773
      %3808 = vmatprep.subr.mxu0 0.0
      %3809 = vmatpush1.msra.mxu0 %v3772
      %3810 = vmatprep.subr.mxu0 0.0
      %3811 = vmatpush1.msra.mxu0 %v3771
      %3812 = vmatprep.subr.mxu0 0.0
      %3813 = vmatpush1.msra.mxu0 %v3770
      %3814 = vmatprep.subr.mxu0 0.0
      %3815 = vmatpush1.msra.mxu0 %v3769
      %3816 = vmatprep.subr.mxu0 0.0
      %3817 = vmatpush1.msra.mxu0 %v3768
      %3818 = vmatprep.subr.mxu0 0.0
      %3819 = vmatpush1.msra.mxu0 %v3767
      %3820 = vmatprep.subr.mxu0 0.0
      %3821 = vmatpush1.msra.mxu0 %v3766
      %3822 = vmatprep.subr.mxu0 0.0
      %3823 = vmatpush2.msra.mxu0 0.0
      %3824 = vmatprep.subr.mxu0 0.0
      %3825 = vmatpush2.msra.mxu0 0.0
      %3826 = vmatprep.subr.mxu0 0.0
      %3827 = vmatpush2.msra.mxu0 0.0
      %3828 = vmatprep.subr.mxu0 0.0
      %3829 = vmatpush2.msra.mxu0 0.0
      %3830 = vmatprep.subr.mxu0 0.0
      %3831 = vmatpush2.msra.mxu0 0.0
      %3832 = vmatprep.subr.mxu0 0.0
      %3833 = vmatpush2.msra.mxu0 0.0
      %3834 = vmatprep.subr.mxu0 0.0
      %3835 = vmatpush2.msra.mxu0 0.0
      %3836 = vmatprep.subr.mxu0 0.0
      %3837 = vmatpush2.msra.mxu0 0.0
      %3838 = vmatprep.subr.mxu0 0.0
      %3839 = vmatpush2.msra.mxu0 0.0
      %3840 = vmatprep.subr.mxu0 0.0
      %3841 = vmatpush2.msra.mxu0 0.0
      %3842 = vmatprep.subr.mxu0 0.0
      %3843 = vmatpush2.msra.mxu0 0.0
      %3844 = vmatprep.subr.mxu0 0.0
      %3845 = vmatpush2.msra.mxu0 0.0
      %3846 = vmatprep.subr.mxu0 0.0
      %3847 = vmatpush2.msra.mxu0 0.0
      %3848 = vmatprep.subr.mxu0 0.0
      %3849 = vmatpush2.msra.mxu0 0.0
      %3850 = vmatprep.subr.mxu0 0.0
      %3851 = vmatpush2.msra.mxu0 0.0
      %3852 = vmatprep.subr.mxu0 0.0
      %3853 = vmatpush2.msra.mxu0 0.0
      %3854 = vmatprep.mubr.f32.mxu0 0.0
      %3855 = vmatmul.mubr.f32.gmra.mxu0 %v2867
      %v3856 = vpop.f32.mrf.mxu0
      %v3857 = vadd.f32 %v3788, %v3856
      %v3858 = vpop.f32.mrf.mxu0
      %3859 = vmatprep.mubr.f32.mxu0 0.0
      %3860 = vmatmul.mubr.f32.gmra.mxu0 %v2868
      %v3861 = vpop.f32.mrf.mxu0
      %v3862 = vadd.f32 %v3788, %v3861
      %v3863 = vpop.f32.mrf.mxu0
      %3864 = vmatprep.mubr.f32.mxu0 0.0
      %3865 = vmatmul.mubr.f32.gmra.mxu0 %v2869
      %v3866 = vpop.f32.mrf.mxu0
      %v3867 = vadd.f32 %v3788, %v3866
      %v3868 = vpop.f32.mrf.mxu0
      %3869 = vmatprep.mubr.f32.mxu0 0.0
      %3870 = vmatmul.mubr.f32.gmra.mxu0 %v2870
      %v3871 = vpop.f32.mrf.mxu0
      %v3872 = vadd.f32 %v3788, %v3871
      %v3873 = vpop.f32.mrf.mxu0
      %3874 = vmatprep.mubr.f32.mxu0 0.0
      %3875 = vmatmul.mubr.f32.gmra.mxu0 %v2871
      %v3876 = vpop.f32.mrf.mxu0
      %v3877 = vadd.f32 %v3788, %v3876
      %v3878 = vpop.f32.mrf.mxu0
      %3879 = vmatprep.mubr.f32.mxu0 0.0
      %3880 = vmatmul.mubr.f32.gmra.mxu0 %v2872
      %v3881 = vpop.f32.mrf.mxu0
      %v3882 = vadd.f32 %v3788, %v3881
      %v3883 = vpop.f32.mrf.mxu0
      %3884 = vmatprep.mubr.f32.mxu0 0.0
      %3885 = vmatmul.mubr.f32.gmra.mxu0 %v2873
      %v3886 = vpop.f32.mrf.mxu0
      %v3887 = vadd.f32 %v3788, %v3886
      %v3888 = vpop.f32.mrf.mxu0
      %3889 = vmatprep.mubr.f32.mxu0 0.0
      %3890 = vmatmul.mubr.f32.gmra.mxu0 %v2874
      %v3891 = vpop.f32.mrf.mxu0
      %v3892 = vadd.f32 %v3788, %v3891
      %v3893 = vpop.f32.mrf.mxu0
      %3894 = vmatprep.mubr.f32.mxu0 0.0
      %3895 = vmatmul.mubr.f32.gmra.mxu0 %v2875
      %v3896 = vpop.f32.mrf.mxu0
      %v3897 = vadd.f32 %v3788, %v3896
      %v3898 = vpop.f32.mrf.mxu0
      %3899 = vmatprep.mubr.f32.mxu0 0.0
      %3900 = vmatmul.mubr.f32.gmra.mxu0 %v2876
      %v3901 = vpop.f32.mrf.mxu0
      %v3902 = vadd.f32 %v3788, %v3901
      %v3903 = vpop.f32.mrf.mxu0
      %3904 = vmatprep.mubr.f32.mxu0 0.0
      %3905 = vmatmul.mubr.f32.gmra.mxu0 %v2877
      %v3906 = vpop.f32.mrf.mxu0
      %v3907 = vadd.f32 %v3788, %v3906
      %v3908 = vpop.f32.mrf.mxu0
      %3909 = vmatprep.mubr.f32.mxu0 0.0
      %3910 = vmatmul.mubr.f32.gmra.mxu0 %v2878
      %v3911 = vpop.f32.mrf.mxu0
      %v3912 = vadd.f32 %v3788, %v3911
      %v3913 = vpop.f32.mrf.mxu0
      %3914 = vmatprep.mubr.f32.mxu0 0.0
      %3915 = vmatmul.mubr.f32.gmra.mxu0 %v2879
      %v3916 = vpop.f32.mrf.mxu0
      %v3917 = vadd.f32 %v3788, %v3916
      %v3918 = vpop.f32.mrf.mxu0
      %3919 = vmatprep.mubr.f32.mxu0 0.0
      %3920 = vmatmul.mubr.f32.gmra.mxu0 %v2880
      %v3921 = vpop.f32.mrf.mxu0
      %v3922 = vadd.f32 %v3788, %v3921
      %v3923 = vpop.f32.mrf.mxu0
      %3924 = vmatprep.mubr.f32.mxu0 0.0
      %3925 = vmatmul.mubr.f32.gmra.mxu0 %v2881
      %v3926 = vpop.f32.mrf.mxu0
      %v3927 = vadd.f32 %v3788, %v3926
      %v3928 = vpop.f32.mrf.mxu0
      %3929 = vmatprep.mubr.f32.mxu0 0.0
      %3930 = vmatmul.mubr.f32.gmra.mxu0 %v2882
      %v3931 = vpop.f32.mrf.mxu0
      %v3932 = vadd.f32 %v3788, %v3931
      %v3933 = vpop.f32.mrf.mxu0
      %3934 = vmatprep.mubr.f32.mxu0 0.0
      %3935 = vmatmul.mubr.f32.gmra.mxu0 %v2883
      %v3936 = vpop.f32.mrf.mxu0
      %v3937 = vadd.f32 %v3788, %v3936
      %v3938 = vpop.f32.mrf.mxu0
      %3939 = vmatprep.mubr.f32.mxu0 0.0
      %3940 = vmatmul.mubr.f32.gmra.mxu0 %v2884
      %v3941 = vpop.f32.mrf.mxu0
      %v3942 = vadd.f32 %v3788, %v3941
      %v3943 = vpop.f32.mrf.mxu0
      %3944 = vdwg.mxu0
      %3945 = vset.pattern.permute.xlu0 3
      %3946 = vperm.xlu0 %3945, %v2832
      %v3947 = vpop.permute.xlu0 %3946
      %3949 = vset.pattern.permute.xlu0 3
      %3950 = vperm.xlu0 %3949, %v2834
      %v3951 = vpop.permute.xlu0 %3950
      %3953 = vset.pattern.permute.xlu0 3
      %3954 = vperm.xlu0 %3953, %v2836
      %v3955 = vpop.permute.xlu0 %3954
      %3957 = vset.pattern.permute.xlu0 3
      %3958 = vperm.xlu0 %3957, %v2838
      %v3959 = vpop.permute.xlu0 %3958
      %3961 = vset.pattern.permute.xlu0 3
      %3962 = vperm.xlu0 %3961, %v2840
      %v3963 = vpop.permute.xlu0 %3962
      %3965 = vset.pattern.permute.xlu0 3
      %3966 = vperm.xlu0 %3965, %v2842
      %v3967 = vpop.permute.xlu0 %3966
      %3969 = vset.pattern.permute.xlu0 3
      %3970 = vperm.xlu0 %3969, %v2844
      %v3971 = vpop.permute.xlu0 %3970
      %3973 = vset.pattern.permute.xlu0 3
      %3974 = vperm.xlu0 %3973, %v2846
      %v3975 = vpop.permute.xlu0 %3974
      %3977 = vset.pattern.permute.xlu0 3
      %3978 = vperm.xlu0 %3977, %v2848
      %v3979 = vpop.permute.xlu0 %3978
      %3981 = vset.pattern.permute.xlu0 3
      %3982 = vperm.xlu0 %3981, %v2850
      %v3983 = vpop.permute.xlu0 %3982
      %3985 = vset.pattern.permute.xlu0 3
      %3986 = vperm.xlu0 %3985, %v2852
      %v3987 = vpop.permute.xlu0 %3986
      %3989 = vset.pattern.permute.xlu0 3
      %3990 = vperm.xlu0 %3989, %v2854
      %v3991 = vpop.permute.xlu0 %3990
      %3993 = vset.pattern.permute.xlu0 3
      %3994 = vperm.xlu0 %3993, %v2856
      %v3995 = vpop.permute.xlu0 %3994
      %3997 = vset.pattern.permute.xlu0 3
      %3998 = vperm.xlu0 %3997, %v2858
      %v3999 = vpop.permute.xlu0 %3998
      %4001 = vset.pattern.permute.xlu0 3
      %4002 = vperm.xlu0 %4001, %v2860
      %v4003 = vpop.permute.xlu0 %4002
      %4005 = vset.pattern.permute.xlu0 3
      %4006 = vperm.xlu0 %4005, %v2862
      %v4007 = vpop.permute.xlu0 %4006
      %4009 = vset.pattern.permute.xlu0 3
      %4010 = vperm.xlu0 %4009, %v2864
      %v4011 = vpop.permute.xlu0 %4010
      %4013 = vset.pattern.permute.xlu0 3
      %4014 = vperm.xlu0 %4013, %v2866
      %v4015 = vpop.permute.xlu0 %4014
      %v4017 = vmul.f32 %v3857, %v3947
      %v4018 = vmul.f32 %v3862, %v3951
      %v4019 = vmul.f32 %v3867, %v3955
      %v4020 = vmul.f32 %v3872, %v3959
      %v4021 = vmul.f32 %v3877, %v3963
      %v4022 = vmul.f32 %v3882, %v3967
      %v4023 = vmul.f32 %v3887, %v3971
      %v4024 = vmul.f32 %v3892, %v3975
      %v4025 = vmul.f32 %v3897, %v3979
      %v4026 = vmul.f32 %v3902, %v3983
      %v4027 = vmul.f32 %v3907, %v3987
      %v4028 = vmul.f32 %v3912, %v3991
      %v4029 = vmul.f32 %v3917, %v3995
      %v4030 = vmul.f32 %v3922, %v3999
      %v4031 = vmul.f32 %v3927, %v4003
      %v4032 = vmul.f32 %v3932, %v4007
      %v4033 = vmul.f32 %v3937, %v4011
      %v4034 = vmul.f32 %v3942, %v4015
      %v4035 = vadd.f32 %v3747, %v4017
      %v4036 = vadd.f32 %v3748, %v4018
      %v4037 = vadd.f32 %v3749, %v4019
      %v4038 = vadd.f32 %v3750, %v4020
      %v4039 = vadd.f32 %v3751, %v4021
      %v4040 = vadd.f32 %v3752, %v4022
      %v4041 = vadd.f32 %v3753, %v4023
      %v4042 = vadd.f32 %v3754, %v4024
      %v4043 = vadd.f32 %v3755, %v4025
      %v4044 = vadd.f32 %v3756, %v4026
      %v4045 = vadd.f32 %v3757, %v4027
      %v4046 = vadd.f32 %v3758, %v4028
      %v4047 = vadd.f32 %v3759, %v4029
      %v4048 = vadd.f32 %v3760, %v4030
      %v4049 = vadd.f32 %v3761, %v4031
      %v4050 = vadd.f32 %v3762, %v4032
      %v4051 = vadd.f32 %v3763, %v4033
      %v4052 = vadd.f32 %v3764, %v4034
      %s4053 = scalar_lea.vmem %s3, 512
      %v4054 = vld [vmem:[%s4053] sm:$0xff]
      %v4055 = vld [vmem:[%s4053 + $0x8] sm:$0xff]
      %v4056 = vld [vmem:[%s4053 + $0x10] sm:$0xff]
      %v4057 = vld [vmem:[%s4053 + $0x18] sm:$0xff]
      %v4058 = vld [vmem:[%s4053 + $0x20] sm:$0xff]
      %v4059 = vld [vmem:[%s4053 + $0x28] sm:$0xff]
      %v4060 = vld [vmem:[%s4053 + $0x30] sm:$0xff]
      %v4061 = vld [vmem:[%s4053 + $0x38] sm:$0xff]
      %v4062 = vld [vmem:[%s4053 + $0x40] sm:$0xff]
      %v4063 = vld [vmem:[%s4053 + $0x48] sm:$0xff]
      %v4064 = vld [vmem:[%s4053 + $0x50] sm:$0xff]
      %v4065 = vld [vmem:[%s4053 + $0x58] sm:$0xff]
      %v4066 = vld [vmem:[%s4053 + $0x60] sm:$0xff]
      %v4067 = vld [vmem:[%s4053 + $0x68] sm:$0xff]
      %v4068 = vld [vmem:[%s4053 + $0x70] sm:$0xff]
      %v4069 = vld [vmem:[%s4053 + $0x78] sm:$0xff]
      %s4070 = scalar_lea.vmem %s4, 4
      %v4071 = vld [vmem:[%s4070] sm:$0x1]
      %v4073 = vlaneseq
      %v4074 = vshrl.u32 %v4073, 7
      %v4075 = vsub.s32 0, %v4074
      %v4076 = vrot.slane %v4071, %v4075
      %4078 = vmatprep.subr.mxu0 0.0
      %4079 = vmatpush1.msra.mxu0 %v4069
      %4080 = vmatprep.subr.mxu0 0.0
      %4081 = vmatpush1.msra.mxu0 %v4068
      %4082 = vmatprep.subr.mxu0 0.0
      %4083 = vmatpush1.msra.mxu0 %v4067
      %4084 = vmatprep.subr.mxu0 0.0
      %4085 = vmatpush1.msra.mxu0 %v4066
      %4086 = vmatprep.subr.mxu0 0.0
      %4087 = vmatpush1.msra.mxu0 %v4065
      %4088 = vmatprep.subr.mxu0 0.0
      %4089 = vmatpush1.msra.mxu0 %v4064
      %4090 = vmatprep.subr.mxu0 0.0
      %4091 = vmatpush1.msra.mxu0 %v4063
      %4092 = vmatprep.subr.mxu0 0.0
      %4093 = vmatpush1.msra.mxu0 %v4062
      %4094 = vmatprep.subr.mxu0 0.0
      %4095 = vmatpush1.msra.mxu0 %v4061
      %4096 = vmatprep.subr.mxu0 0.0
      %4097 = vmatpush1.msra.mxu0 %v4060
      %4098 = vmatprep.subr.mxu0 0.0
      %4099 = vmatpush1.msra.mxu0 %v4059
      %4100 = vmatprep.subr.mxu0 0.0
      %4101 = vmatpush1.msra.mxu0 %v4058
      %4102 = vmatprep.subr.mxu0 0.0
      %4103 = vmatpush1.msra.mxu0 %v4057
      %4104 = vmatprep.subr.mxu0 0.0
      %4105 = vmatpush1.msra.mxu0 %v4056
      %4106 = vmatprep.subr.mxu0 0.0
      %4107 = vmatpush1.msra.mxu0 %v4055
      %4108 = vmatprep.subr.mxu0 0.0
      %4109 = vmatpush1.msra.mxu0 %v4054
      %4110 = vmatprep.subr.mxu0 0.0
      %4111 = vmatpush2.msra.mxu0 0.0
      %4112 = vmatprep.subr.mxu0 0.0
      %4113 = vmatpush2.msra.mxu0 0.0
      %4114 = vmatprep.subr.mxu0 0.0
      %4115 = vmatpush2.msra.mxu0 0.0
      %4116 = vmatprep.subr.mxu0 0.0
      %4117 = vmatpush2.msra.mxu0 0.0
      %4118 = vmatprep.subr.mxu0 0.0
      %4119 = vmatpush2.msra.mxu0 0.0
      %4120 = vmatprep.subr.mxu0 0.0
      %4121 = vmatpush2.msra.mxu0 0.0
      %4122 = vmatprep.subr.mxu0 0.0
      %4123 = vmatpush2.msra.mxu0 0.0
      %4124 = vmatprep.subr.mxu0 0.0
      %4125 = vmatpush2.msra.mxu0 0.0
      %4126 = vmatprep.subr.mxu0 0.0
      %4127 = vmatpush2.msra.mxu0 0.0
      %4128 = vmatprep.subr.mxu0 0.0
      %4129 = vmatpush2.msra.mxu0 0.0
      %4130 = vmatprep.subr.mxu0 0.0
      %4131 = vmatpush2.msra.mxu0 0.0
      %4132 = vmatprep.subr.mxu0 0.0
      %4133 = vmatpush2.msra.mxu0 0.0
      %4134 = vmatprep.subr.mxu0 0.0
      %4135 = vmatpush2.msra.mxu0 0.0
      %4136 = vmatprep.subr.mxu0 0.0
      %4137 = vmatpush2.msra.mxu0 0.0
      %4138 = vmatprep.subr.mxu0 0.0
      %4139 = vmatpush2.msra.mxu0 0.0
      %4140 = vmatprep.subr.mxu0 0.0
      %4141 = vmatpush2.msra.mxu0 0.0
      %4142 = vmatprep.mubr.f32.mxu0 0.0
      %4143 = vmatmul.mubr.f32.gmra.mxu0 %v2867
      %v4144 = vpop.f32.mrf.mxu0
      %v4145 = vadd.f32 %v4076, %v4144
      %v4146 = vpop.f32.mrf.mxu0
      %4147 = vmatprep.mubr.f32.mxu0 0.0
      %4148 = vmatmul.mubr.f32.gmra.mxu0 %v2868
      %v4149 = vpop.f32.mrf.mxu0
      %v4150 = vadd.f32 %v4076, %v4149
      %v4151 = vpop.f32.mrf.mxu0
      %4152 = vmatprep.mubr.f32.mxu0 0.0
      %4153 = vmatmul.mubr.f32.gmra.mxu0 %v2869
      %v4154 = vpop.f32.mrf.mxu0
      %v4155 = vadd.f32 %v4076, %v4154
      %v4156 = vpop.f32.mrf.mxu0
      %4157 = vmatprep.mubr.f32.mxu0 0.0
      %4158 = vmatmul.mubr.f32.gmra.mxu0 %v2870
      %v4159 = vpop.f32.mrf.mxu0
      %v4160 = vadd.f32 %v4076, %v4159
      %v4161 = vpop.f32.mrf.mxu0
      %4162 = vmatprep.mubr.f32.mxu0 0.0
      %4163 = vmatmul.mubr.f32.gmra.mxu0 %v2871
      %v4164 = vpop.f32.mrf.mxu0
      %v4165 = vadd.f32 %v4076, %v4164
      %v4166 = vpop.f32.mrf.mxu0
      %4167 = vmatprep.mubr.f32.mxu0 0.0
      %4168 = vmatmul.mubr.f32.gmra.mxu0 %v2872
      %v4169 = vpop.f32.mrf.mxu0
      %v4170 = vadd.f32 %v4076, %v4169
      %v4171 = vpop.f32.mrf.mxu0
      %4172 = vmatprep.mubr.f32.mxu0 0.0
      %4173 = vmatmul.mubr.f32.gmra.mxu0 %v2873
      %v4174 = vpop.f32.mrf.mxu0
      %v4175 = vadd.f32 %v4076, %v4174
      %v4176 = vpop.f32.mrf.mxu0
      %4177 = vmatprep.mubr.f32.mxu0 0.0
      %4178 = vmatmul.mubr.f32.gmra.mxu0 %v2874
      %v4179 = vpop.f32.mrf.mxu0
      %v4180 = vadd.f32 %v4076, %v4179
      %v4181 = vpop.f32.mrf.mxu0
      %4182 = vmatprep.mubr.f32.mxu0 0.0
      %4183 = vmatmul.mubr.f32.gmra.mxu0 %v2875
      %v4184 = vpop.f32.mrf.mxu0
      %v4185 = vadd.f32 %v4076, %v4184
      %v4186 = vpop.f32.mrf.mxu0
      %4187 = vmatprep.mubr.f32.mxu0 0.0
      %4188 = vmatmul.mubr.f32.gmra.mxu0 %v2876
      %v4189 = vpop.f32.mrf.mxu0
      %v4190 = vadd.f32 %v4076, %v4189
      %v4191 = vpop.f32.mrf.mxu0
      %4192 = vmatprep.mubr.f32.mxu0 0.0
      %4193 = vmatmul.mubr.f32.gmra.mxu0 %v2877
      %v4194 = vpop.f32.mrf.mxu0
      %v4195 = vadd.f32 %v4076, %v4194
      %v4196 = vpop.f32.mrf.mxu0
      %4197 = vmatprep.mubr.f32.mxu0 0.0
      %4198 = vmatmul.mubr.f32.gmra.mxu0 %v2878
      %v4199 = vpop.f32.mrf.mxu0
      %v4200 = vadd.f32 %v4076, %v4199
      %v4201 = vpop.f32.mrf.mxu0
      %4202 = vmatprep.mubr.f32.mxu0 0.0
      %4203 = vmatmul.mubr.f32.gmra.mxu0 %v2879
      %v4204 = vpop.f32.mrf.mxu0
      %v4205 = vadd.f32 %v4076, %v4204
      %v4206 = vpop.f32.mrf.mxu0
      %4207 = vmatprep.mubr.f32.mxu0 0.0
      %4208 = vmatmul.mubr.f32.gmra.mxu0 %v2880
      %v4209 = vpop.f32.mrf.mxu0
      %v4210 = vadd.f32 %v4076, %v4209
      %v4211 = vpop.f32.mrf.mxu0
      %4212 = vmatprep.mubr.f32.mxu0 0.0
      %4213 = vmatmul.mubr.f32.gmra.mxu0 %v2881
      %v4214 = vpop.f32.mrf.mxu0
      %v4215 = vadd.f32 %v4076, %v4214
      %v4216 = vpop.f32.mrf.mxu0
      %4217 = vmatprep.mubr.f32.mxu0 0.0
      %4218 = vmatmul.mubr.f32.gmra.mxu0 %v2882
      %v4219 = vpop.f32.mrf.mxu0
      %v4220 = vadd.f32 %v4076, %v4219
      %v4221 = vpop.f32.mrf.mxu0
      %4222 = vmatprep.mubr.f32.mxu0 0.0
      %4223 = vmatmul.mubr.f32.gmra.mxu0 %v2883
      %v4224 = vpop.f32.mrf.mxu0
      %v4225 = vadd.f32 %v4076, %v4224
      %v4226 = vpop.f32.mrf.mxu0
      %4227 = vmatprep.mubr.f32.mxu0 0.0
      %4228 = vmatmul.mubr.f32.gmra.mxu0 %v2884
      %v4229 = vpop.f32.mrf.mxu0
      %v4230 = vadd.f32 %v4076, %v4229
      %v4231 = vpop.f32.mrf.mxu0
      %4232 = vdwg.mxu0
      %4233 = vset.pattern.permute.xlu0 4
      %4234 = vperm.xlu0 %4233, %v2832
      %v4235 = vpop.permute.xlu0 %4234
      %4237 = vset.pattern.permute.xlu0 4
      %4238 = vperm.xlu0 %4237, %v2834
      %v4239 = vpop.permute.xlu0 %4238
      %4241 = vset.pattern.permute.xlu0 4
      %4242 = vperm.xlu0 %4241, %v2836
      %v4243 = vpop.permute.xlu0 %4242
      %4245 = vset.pattern.permute.xlu0 4
      %4246 = vperm.xlu0 %4245, %v2838
      %v4247 = vpop.permute.xlu0 %4246
      %4249 = vset.pattern.permute.xlu0 4
      %4250 = vperm.xlu0 %4249, %v2840
      %v4251 = vpop.permute.xlu0 %4250
      %4253 = vset.pattern.permute.xlu0 4
      %4254 = vperm.xlu0 %4253, %v2842
      %v4255 = vpop.permute.xlu0 %4254
      %4257 = vset.pattern.permute.xlu0 4
      %4258 = vperm.xlu0 %4257, %v2844
      %v4259 = vpop.permute.xlu0 %4258
      %4261 = vset.pattern.permute.xlu0 4
      %4262 = vperm.xlu0 %4261, %v2846
      %v4263 = vpop.permute.xlu0 %4262
      %4265 = vset.pattern.permute.xlu0 4
      %4266 = vperm.xlu0 %4265, %v2848
      %v4267 = vpop.permute.xlu0 %4266
      %4269 = vset.pattern.permute.xlu0 4
      %4270 = vperm.xlu0 %4269, %v2850
      %v4271 = vpop.permute.xlu0 %4270
      %4273 = vset.pattern.permute.xlu0 4
      %4274 = vperm.xlu0 %4273, %v2852
      %v4275 = vpop.permute.xlu0 %4274
      %4277 = vset.pattern.permute.xlu0 4
      %4278 = vperm.xlu0 %4277, %v2854
      %v4279 = vpop.permute.xlu0 %4278
      %4281 = vset.pattern.permute.xlu0 4
      %4282 = vperm.xlu0 %4281, %v2856
      %v4283 = vpop.permute.xlu0 %4282
      %4285 = vset.pattern.permute.xlu0 4
      %4286 = vperm.xlu0 %4285, %v2858
      %v4287 = vpop.permute.xlu0 %4286
      %4289 = vset.pattern.permute.xlu0 4
      %4290 = vperm.xlu0 %4289, %v2860
      %v4291 = vpop.permute.xlu0 %4290
      %4293 = vset.pattern.permute.xlu0 4
      %4294 = vperm.xlu0 %4293, %v2862
      %v4295 = vpop.permute.xlu0 %4294
      %4297 = vset.pattern.permute.xlu0 4
      %4298 = vperm.xlu0 %4297, %v2864
      %v4299 = vpop.permute.xlu0 %4298
      %4301 = vset.pattern.permute.xlu0 4
      %4302 = vperm.xlu0 %4301, %v2866
      %v4303 = vpop.permute.xlu0 %4302
      %v4305 = vmul.f32 %v4145, %v4235
      %v4306 = vmul.f32 %v4150, %v4239
      %v4307 = vmul.f32 %v4155, %v4243
      %v4308 = vmul.f32 %v4160, %v4247
      %v4309 = vmul.f32 %v4165, %v4251
      %v4310 = vmul.f32 %v4170, %v4255
      %v4311 = vmul.f32 %v4175, %v4259
      %v4312 = vmul.f32 %v4180, %v4263
      %v4313 = vmul.f32 %v4185, %v4267
      %v4314 = vmul.f32 %v4190, %v4271
      %v4315 = vmul.f32 %v4195, %v4275
      %v4316 = vmul.f32 %v4200, %v4279
      %v4317 = vmul.f32 %v4205, %v4283
      %v4318 = vmul.f32 %v4210, %v4287
      %v4319 = vmul.f32 %v4215, %v4291
      %v4320 = vmul.f32 %v4220, %v4295
      %v4321 = vmul.f32 %v4225, %v4299
      %v4322 = vmul.f32 %v4230, %v4303
      %v4323 = vadd.f32 %v4035, %v4305
      %v4324 = vadd.f32 %v4036, %v4306
      %v4325 = vadd.f32 %v4037, %v4307
      %v4326 = vadd.f32 %v4038, %v4308
      %v4327 = vadd.f32 %v4039, %v4309
      %v4328 = vadd.f32 %v4040, %v4310
      %v4329 = vadd.f32 %v4041, %v4311
      %v4330 = vadd.f32 %v4042, %v4312
      %v4331 = vadd.f32 %v4043, %v4313
      %v4332 = vadd.f32 %v4044, %v4314
      %v4333 = vadd.f32 %v4045, %v4315
      %v4334 = vadd.f32 %v4046, %v4316
      %v4335 = vadd.f32 %v4047, %v4317
      %v4336 = vadd.f32 %v4048, %v4318
      %v4337 = vadd.f32 %v4049, %v4319
      %v4338 = vadd.f32 %v4050, %v4320
      %v4339 = vadd.f32 %v4051, %v4321
      %v4340 = vadd.f32 %v4052, %v4322
      %s4341 = scalar_lea.vmem %s3, 640
      %v4342 = vld [vmem:[%s4341] sm:$0xff]
      %v4343 = vld [vmem:[%s4341 + $0x8] sm:$0xff]
      %v4344 = vld [vmem:[%s4341 + $0x10] sm:$0xff]
      %v4345 = vld [vmem:[%s4341 + $0x18] sm:$0xff]
      %v4346 = vld [vmem:[%s4341 + $0x20] sm:$0xff]
      %v4347 = vld [vmem:[%s4341 + $0x28] sm:$0xff]
      %v4348 = vld [vmem:[%s4341 + $0x30] sm:$0xff]
      %v4349 = vld [vmem:[%s4341 + $0x38] sm:$0xff]
      %v4350 = vld [vmem:[%s4341 + $0x40] sm:$0xff]
      %v4351 = vld [vmem:[%s4341 + $0x48] sm:$0xff]
      %v4352 = vld [vmem:[%s4341 + $0x50] sm:$0xff]
      %v4353 = vld [vmem:[%s4341 + $0x58] sm:$0xff]
      %v4354 = vld [vmem:[%s4341 + $0x60] sm:$0xff]
      %v4355 = vld [vmem:[%s4341 + $0x68] sm:$0xff]
      %v4356 = vld [vmem:[%s4341 + $0x70] sm:$0xff]
      %v4357 = vld [vmem:[%s4341 + $0x78] sm:$0xff]
      %s4358 = scalar_lea.vmem %s4, 5
      %v4359 = vld [vmem:[%s4358] sm:$0x1]
      %v4361 = vlaneseq
      %v4362 = vshrl.u32 %v4361, 7
      %v4363 = vsub.s32 0, %v4362
      %v4364 = vrot.slane %v4359, %v4363
      %4366 = vmatprep.subr.mxu0 0.0
      %4367 = vmatpush1.msra.mxu0 %v4357
      %4368 = vmatprep.subr.mxu0 0.0
      %4369 = vmatpush1.msra.mxu0 %v4356
      %4370 = vmatprep.subr.mxu0 0.0
      %4371 = vmatpush1.msra.mxu0 %v4355
      %4372 = vmatprep.subr.mxu0 0.0
      %4373 = vmatpush1.msra.mxu0 %v4354
      %4374 = vmatprep.subr.mxu0 0.0
      %4375 = vmatpush1.msra.mxu0 %v4353
      %4376 = vmatprep.subr.mxu0 0.0
      %4377 = vmatpush1.msra.mxu0 %v4352
      %4378 = vmatprep.subr.mxu0 0.0
      %4379 = vmatpush1.msra.mxu0 %v4351
      %4380 = vmatprep.subr.mxu0 0.0
      %4381 = vmatpush1.msra.mxu0 %v4350
      %4382 = vmatprep.subr.mxu0 0.0
      %4383 = vmatpush1.msra.mxu0 %v4349
      %4384 = vmatprep.subr.mxu0 0.0
      %4385 = vmatpush1.msra.mxu0 %v4348
      %4386 = vmatprep.subr.mxu0 0.0
      %4387 = vmatpush1.msra.mxu0 %v4347
      %4388 = vmatprep.subr.mxu0 0.0
      %4389 = vmatpush1.msra.mxu0 %v4346
      %4390 = vmatprep.subr.mxu0 0.0
      %4391 = vmatpush1.msra.mxu0 %v4345
      %4392 = vmatprep.subr.mxu0 0.0
      %4393 = vmatpush1.msra.mxu0 %v4344
      %4394 = vmatprep.subr.mxu0 0.0
      %4395 = vmatpush1.msra.mxu0 %v4343
      %4396 = vmatprep.subr.mxu0 0.0
      %4397 = vmatpush1.msra.mxu0 %v4342
      %4398 = vmatprep.subr.mxu0 0.0
      %4399 = vmatpush2.msra.mxu0 0.0
      %4400 = vmatprep.subr.mxu0 0.0
      %4401 = vmatpush2.msra.mxu0 0.0
      %4402 = vmatprep.subr.mxu0 0.0
      %4403 = vmatpush2.msra.mxu0 0.0
      %4404 = vmatprep.subr.mxu0 0.0
      %4405 = vmatpush2.msra.mxu0 0.0
      %4406 = vmatprep.subr.mxu0 0.0
      %4407 = vmatpush2.msra.mxu0 0.0
      %4408 = vmatprep.subr.mxu0 0.0
      %4409 = vmatpush2.msra.mxu0 0.0
      %4410 = vmatprep.subr.mxu0 0.0
      %4411 = vmatpush2.msra.mxu0 0.0
      %4412 = vmatprep.subr.mxu0 0.0
      %4413 = vmatpush2.msra.mxu0 0.0
      %4414 = vmatprep.subr.mxu0 0.0
      %4415 = vmatpush2.msra.mxu0 0.0
      %4416 = vmatprep.subr.mxu0 0.0
      %4417 = vmatpush2.msra.mxu0 0.0
      %4418 = vmatprep.subr.mxu0 0.0
      %4419 = vmatpush2.msra.mxu0 0.0
      %4420 = vmatprep.subr.mxu0 0.0
      %4421 = vmatpush2.msra.mxu0 0.0
      %4422 = vmatprep.subr.mxu0 0.0
      %4423 = vmatpush2.msra.mxu0 0.0
      %4424 = vmatprep.subr.mxu0 0.0
      %4425 = vmatpush2.msra.mxu0 0.0
      %4426 = vmatprep.subr.mxu0 0.0
      %4427 = vmatpush2.msra.mxu0 0.0
      %4428 = vmatprep.subr.mxu0 0.0
      %4429 = vmatpush2.msra.mxu0 0.0
      %4430 = vmatprep.mubr.f32.mxu0 0.0
      %4431 = vmatmul.mubr.f32.gmra.mxu0 %v2867
      %v4432 = vpop.f32.mrf.mxu0
      %v4433 = vadd.f32 %v4364, %v4432
      %v4434 = vpop.f32.mrf.mxu0
      %4435 = vmatprep.mubr.f32.mxu0 0.0
      %4436 = vmatmul.mubr.f32.gmra.mxu0 %v2868
      %v4437 = vpop.f32.mrf.mxu0
      %v4438 = vadd.f32 %v4364, %v4437
      %v4439 = vpop.f32.mrf.mxu0
      %4440 = vmatprep.mubr.f32.mxu0 0.0
      %4441 = vmatmul.mubr.f32.gmra.mxu0 %v2869
      %v4442 = vpop.f32.mrf.mxu0
      %v4443 = vadd.f32 %v4364, %v4442
      %v4444 = vpop.f32.mrf.mxu0
      %4445 = vmatprep.mubr.f32.mxu0 0.0
      %4446 = vmatmul.mubr.f32.gmra.mxu0 %v2870
      %v4447 = vpop.f32.mrf.mxu0
      %v4448 = vadd.f32 %v4364, %v4447
      %v4449 = vpop.f32.mrf.mxu0
      %4450 = vmatprep.mubr.f32.mxu0 0.0
      %4451 = vmatmul.mubr.f32.gmra.mxu0 %v2871
      %v4452 = vpop.f32.mrf.mxu0
      %v4453 = vadd.f32 %v4364, %v4452
      %v4454 = vpop.f32.mrf.mxu0
      %4455 = vmatprep.mubr.f32.mxu0 0.0
      %4456 = vmatmul.mubr.f32.gmra.mxu0 %v2872
      %v4457 = vpop.f32.mrf.mxu0
      %v4458 = vadd.f32 %v4364, %v4457
      %v4459 = vpop.f32.mrf.mxu0
      %4460 = vmatprep.mubr.f32.mxu0 0.0
      %4461 = vmatmul.mubr.f32.gmra.mxu0 %v2873
      %v4462 = vpop.f32.mrf.mxu0
      %v4463 = vadd.f32 %v4364, %v4462
      %v4464 = vpop.f32.mrf.mxu0
      %4465 = vmatprep.mubr.f32.mxu0 0.0
      %4466 = vmatmul.mubr.f32.gmra.mxu0 %v2874
      %v4467 = vpop.f32.mrf.mxu0
      %v4468 = vadd.f32 %v4364, %v4467
      %v4469 = vpop.f32.mrf.mxu0
      %4470 = vmatprep.mubr.f32.mxu0 0.0
      %4471 = vmatmul.mubr.f32.gmra.mxu0 %v2875
      %v4472 = vpop.f32.mrf.mxu0
      %v4473 = vadd.f32 %v4364, %v4472
      %v4474 = vpop.f32.mrf.mxu0
      %4475 = vmatprep.mubr.f32.mxu0 0.0
      %4476 = vmatmul.mubr.f32.gmra.mxu0 %v2876
      %v4477 = vpop.f32.mrf.mxu0
      %v4478 = vadd.f32 %v4364, %v4477
      %v4479 = vpop.f32.mrf.mxu0
      %4480 = vmatprep.mubr.f32.mxu0 0.0
      %4481 = vmatmul.mubr.f32.gmra.mxu0 %v2877
      %v4482 = vpop.f32.mrf.mxu0
      %v4483 = vadd.f32 %v4364, %v4482
      %v4484 = vpop.f32.mrf.mxu0
      %4485 = vmatprep.mubr.f32.mxu0 0.0
      %4486 = vmatmul.mubr.f32.gmra.mxu0 %v2878
      %v4487 = vpop.f32.mrf.mxu0
      %v4488 = vadd.f32 %v4364, %v4487
      %v4489 = vpop.f32.mrf.mxu0
      %4490 = vmatprep.mubr.f32.mxu0 0.0
      %4491 = vmatmul.mubr.f32.gmra.mxu0 %v2879
      %v4492 = vpop.f32.mrf.mxu0
      %v4493 = vadd.f32 %v4364, %v4492
      %v4494 = vpop.f32.mrf.mxu0
      %4495 = vmatprep.mubr.f32.mxu0 0.0
      %4496 = vmatmul.mubr.f32.gmra.mxu0 %v2880
      %v4497 = vpop.f32.mrf.mxu0
      %v4498 = vadd.f32 %v4364, %v4497
      %v4499 = vpop.f32.mrf.mxu0
      %4500 = vmatprep.mubr.f32.mxu0 0.0
      %4501 = vmatmul.mubr.f32.gmra.mxu0 %v2881
      %v4502 = vpop.f32.mrf.mxu0
      %v4503 = vadd.f32 %v4364, %v4502
      %v4504 = vpop.f32.mrf.mxu0
      %4505 = vmatprep.mubr.f32.mxu0 0.0
      %4506 = vmatmul.mubr.f32.gmra.mxu0 %v2882
      %v4507 = vpop.f32.mrf.mxu0
      %v4508 = vadd.f32 %v4364, %v4507
      %v4509 = vpop.f32.mrf.mxu0
      %4510 = vmatprep.mubr.f32.mxu0 0.0
      %4511 = vmatmul.mubr.f32.gmra.mxu0 %v2883
      %v4512 = vpop.f32.mrf.mxu0
      %v4513 = vadd.f32 %v4364, %v4512
      %v4514 = vpop.f32.mrf.mxu0
      %4515 = vmatprep.mubr.f32.mxu0 0.0
      %4516 = vmatmul.mubr.f32.gmra.mxu0 %v2884
      %v4517 = vpop.f32.mrf.mxu0
      %v4518 = vadd.f32 %v4364, %v4517
      %v4519 = vpop.f32.mrf.mxu0
      %4520 = vdwg.mxu0
      %4521 = vset.pattern.permute.xlu0 5
      %4522 = vperm.xlu0 %4521, %v2832
      %v4523 = vpop.permute.xlu0 %4522
      %4525 = vset.pattern.permute.xlu0 5
      %4526 = vperm.xlu0 %4525, %v2834
      %v4527 = vpop.permute.xlu0 %4526
      %4529 = vset.pattern.permute.xlu0 5
      %4530 = vperm.xlu0 %4529, %v2836
      %v4531 = vpop.permute.xlu0 %4530
      %4533 = vset.pattern.permute.xlu0 5
      %4534 = vperm.xlu0 %4533, %v2838
      %v4535 = vpop.permute.xlu0 %4534
      %4537 = vset.pattern.permute.xlu0 5
      %4538 = vperm.xlu0 %4537, %v2840
      %v4539 = vpop.permute.xlu0 %4538
      %4541 = vset.pattern.permute.xlu0 5
      %4542 = vperm.xlu0 %4541, %v2842
      %v4543 = vpop.permute.xlu0 %4542
      %4545 = vset.pattern.permute.xlu0 5
      %4546 = vperm.xlu0 %4545, %v2844
      %v4547 = vpop.permute.xlu0 %4546
      %4549 = vset.pattern.permute.xlu0 5
      %4550 = vperm.xlu0 %4549, %v2846
      %v4551 = vpop.permute.xlu0 %4550
      %4553 = vset.pattern.permute.xlu0 5
      %4554 = vperm.xlu0 %4553, %v2848
      %v4555 = vpop.permute.xlu0 %4554
      %4557 = vset.pattern.permute.xlu0 5
      %4558 = vperm.xlu0 %4557, %v2850
      %v4559 = vpop.permute.xlu0 %4558
      %4561 = vset.pattern.permute.xlu0 5
      %4562 = vperm.xlu0 %4561, %v2852
      %v4563 = vpop.permute.xlu0 %4562
      %4565 = vset.pattern.permute.xlu0 5
      %4566 = vperm.xlu0 %4565, %v2854
      %v4567 = vpop.permute.xlu0 %4566
      %4569 = vset.pattern.permute.xlu0 5
      %4570 = vperm.xlu0 %4569, %v2856
      %v4571 = vpop.permute.xlu0 %4570
      %4573 = vset.pattern.permute.xlu0 5
      %4574 = vperm.xlu0 %4573, %v2858
      %v4575 = vpop.permute.xlu0 %4574
      %4577 = vset.pattern.permute.xlu0 5
      %4578 = vperm.xlu0 %4577, %v2860
      %v4579 = vpop.permute.xlu0 %4578
      %4581 = vset.pattern.permute.xlu0 5
      %4582 = vperm.xlu0 %4581, %v2862
      %v4583 = vpop.permute.xlu0 %4582
      %4585 = vset.pattern.permute.xlu0 5
      %4586 = vperm.xlu0 %4585, %v2864
      %v4587 = vpop.permute.xlu0 %4586
      %4589 = vset.pattern.permute.xlu0 5
      %4590 = vperm.xlu0 %4589, %v2866
      %v4591 = vpop.permute.xlu0 %4590
      %v4593 = vmul.f32 %v4433, %v4523
      %v4594 = vmul.f32 %v4438, %v4527
      %v4595 = vmul.f32 %v4443, %v4531
      %v4596 = vmul.f32 %v4448, %v4535
      %v4597 = vmul.f32 %v4453, %v4539
      %v4598 = vmul.f32 %v4458, %v4543
      %v4599 = vmul.f32 %v4463, %v4547
      %v4600 = vmul.f32 %v4468, %v4551
      %v4601 = vmul.f32 %v4473, %v4555
      %v4602 = vmul.f32 %v4478, %v4559
      %v4603 = vmul.f32 %v4483, %v4563
      %v4604 = vmul.f32 %v4488, %v4567
      %v4605 = vmul.f32 %v4493, %v4571
      %v4606 = vmul.f32 %v4498, %v4575
      %v4607 = vmul.f32 %v4503, %v4579
      %v4608 = vmul.f32 %v4508, %v4583
      %v4609 = vmul.f32 %v4513, %v4587
      %v4610 = vmul.f32 %v4518, %v4591
      %v4611 = vadd.f32 %v4323, %v4593
      %v4612 = vadd.f32 %v4324, %v4594
      %v4613 = vadd.f32 %v4325, %v4595
      %v4614 = vadd.f32 %v4326, %v4596
      %v4615 = vadd.f32 %v4327, %v4597
      %v4616 = vadd.f32 %v4328, %v4598
      %v4617 = vadd.f32 %v4329, %v4599
      %v4618 = vadd.f32 %v4330, %v4600
      %v4619 = vadd.f32 %v4331, %v4601
      %v4620 = vadd.f32 %v4332, %v4602
      %v4621 = vadd.f32 %v4333, %v4603
      %v4622 = vadd.f32 %v4334, %v4604
      %v4623 = vadd.f32 %v4335, %v4605
      %v4624 = vadd.f32 %v4336, %v4606
      %v4625 = vadd.f32 %v4337, %v4607
      %v4626 = vadd.f32 %v4338, %v4608
      %v4627 = vadd.f32 %v4339, %v4609
      %v4628 = vadd.f32 %v4340, %v4610
      %s4629 = scalar_lea.vmem %s3, 768
      %v4630 = vld [vmem:[%s4629] sm:$0xff]
      %v4631 = vld [vmem:[%s4629 + $0x8] sm:$0xff]
      %v4632 = vld [vmem:[%s4629 + $0x10] sm:$0xff]
      %v4633 = vld [vmem:[%s4629 + $0x18] sm:$0xff]
      %v4634 = vld [vmem:[%s4629 + $0x20] sm:$0xff]
      %v4635 = vld [vmem:[%s4629 + $0x28] sm:$0xff]
      %v4636 = vld [vmem:[%s4629 + $0x30] sm:$0xff]
      %v4637 = vld [vmem:[%s4629 + $0x38] sm:$0xff]
      %v4638 = vld [vmem:[%s4629 + $0x40] sm:$0xff]
      %v4639 = vld [vmem:[%s4629 + $0x48] sm:$0xff]
      %v4640 = vld [vmem:[%s4629 + $0x50] sm:$0xff]
      %v4641 = vld [vmem:[%s4629 + $0x58] sm:$0xff]
      %v4642 = vld [vmem:[%s4629 + $0x60] sm:$0xff]
      %v4643 = vld [vmem:[%s4629 + $0x68] sm:$0xff]
      %v4644 = vld [vmem:[%s4629 + $0x70] sm:$0xff]
      %v4645 = vld [vmem:[%s4629 + $0x78] sm:$0xff]
      %s4646 = scalar_lea.vmem %s4, 6
      %v4647 = vld [vmem:[%s4646] sm:$0x1]
      %v4649 = vlaneseq
      %v4650 = vshrl.u32 %v4649, 7
      %v4651 = vsub.s32 0, %v4650
      %v4652 = vrot.slane %v4647, %v4651
      %4654 = vmatprep.subr.mxu0 0.0
      %4655 = vmatpush1.msra.mxu0 %v4645
      %4656 = vmatprep.subr.mxu0 0.0
      %4657 = vmatpush1.msra.mxu0 %v4644
      %4658 = vmatprep.subr.mxu0 0.0
      %4659 = vmatpush1.msra.mxu0 %v4643
      %4660 = vmatprep.subr.mxu0 0.0
      %4661 = vmatpush1.msra.mxu0 %v4642
      %4662 = vmatprep.subr.mxu0 0.0
      %4663 = vmatpush1.msra.mxu0 %v4641
      %4664 = vmatprep.subr.mxu0 0.0
      %4665 = vmatpush1.msra.mxu0 %v4640
      %4666 = vmatprep.subr.mxu0 0.0
      %4667 = vmatpush1.msra.mxu0 %v4639
      %4668 = vmatprep.subr.mxu0 0.0
      %4669 = vmatpush1.msra.mxu0 %v4638
      %4670 = vmatprep.subr.mxu0 0.0
      %4671 = vmatpush1.msra.mxu0 %v4637
      %4672 = vmatprep.subr.mxu0 0.0
      %4673 = vmatpush1.msra.mxu0 %v4636
      %4674 = vmatprep.subr.mxu0 0.0
      %4675 = vmatpush1.msra.mxu0 %v4635
      %4676 = vmatprep.subr.mxu0 0.0
      %4677 = vmatpush1.msra.mxu0 %v4634
      %4678 = vmatprep.subr.mxu0 0.0
      %4679 = vmatpush1.msra.mxu0 %v4633
      %4680 = vmatprep.subr.mxu0 0.0
      %4681 = vmatpush1.msra.mxu0 %v4632
      %4682 = vmatprep.subr.mxu0 0.0
      %4683 = vmatpush1.msra.mxu0 %v4631
      %4684 = vmatprep.subr.mxu0 0.0
      %4685 = vmatpush1.msra.mxu0 %v4630
      %4686 = vmatprep.subr.mxu0 0.0
      %4687 = vmatpush2.msra.mxu0 0.0
      %4688 = vmatprep.subr.mxu0 0.0
      %4689 = vmatpush2.msra.mxu0 0.0
      %4690 = vmatprep.subr.mxu0 0.0
      %4691 = vmatpush2.msra.mxu0 0.0
      %4692 = vmatprep.subr.mxu0 0.0
      %4693 = vmatpush2.msra.mxu0 0.0
      %4694 = vmatprep.subr.mxu0 0.0
      %4695 = vmatpush2.msra.mxu0 0.0
      %4696 = vmatprep.subr.mxu0 0.0
      %4697 = vmatpush2.msra.mxu0 0.0
      %4698 = vmatprep.subr.mxu0 0.0
      %4699 = vmatpush2.msra.mxu0 0.0
      %4700 = vmatprep.subr.mxu0 0.0
      %4701 = vmatpush2.msra.mxu0 0.0
      %4702 = vmatprep.subr.mxu0 0.0
      %4703 = vmatpush2.msra.mxu0 0.0
      %4704 = vmatprep.subr.mxu0 0.0
      %4705 = vmatpush2.msra.mxu0 0.0
      %4706 = vmatprep.subr.mxu0 0.0
      %4707 = vmatpush2.msra.mxu0 0.0
      %4708 = vmatprep.subr.mxu0 0.0
      %4709 = vmatpush2.msra.mxu0 0.0
      %4710 = vmatprep.subr.mxu0 0.0
      %4711 = vmatpush2.msra.mxu0 0.0
      %4712 = vmatprep.subr.mxu0 0.0
      %4713 = vmatpush2.msra.mxu0 0.0
      %4714 = vmatprep.subr.mxu0 0.0
      %4715 = vmatpush2.msra.mxu0 0.0
      %4716 = vmatprep.subr.mxu0 0.0
      %4717 = vmatpush2.msra.mxu0 0.0
      %4718 = vmatprep.mubr.f32.mxu0 0.0
      %4719 = vmatmul.mubr.f32.gmra.mxu0 %v2867
      %v4720 = vpop.f32.mrf.mxu0
      %v4721 = vadd.f32 %v4652, %v4720
      %v4722 = vpop.f32.mrf.mxu0
      %4723 = vmatprep.mubr.f32.mxu0 0.0
      %4724 = vmatmul.mubr.f32.gmra.mxu0 %v2868
      %v4725 = vpop.f32.mrf.mxu0
      %v4726 = vadd.f32 %v4652, %v4725
      %v4727 = vpop.f32.mrf.mxu0
      %4728 = vmatprep.mubr.f32.mxu0 0.0
      %4729 = vmatmul.mubr.f32.gmra.mxu0 %v2869
      %v4730 = vpop.f32.mrf.mxu0
      %v4731 = vadd.f32 %v4652, %v4730
      %v4732 = vpop.f32.mrf.mxu0
      %4733 = vmatprep.mubr.f32.mxu0 0.0
      %4734 = vmatmul.mubr.f32.gmra.mxu0 %v2870
      %v4735 = vpop.f32.mrf.mxu0
      %v4736 = vadd.f32 %v4652, %v4735
      %v4737 = vpop.f32.mrf.mxu0
      %4738 = vmatprep.mubr.f32.mxu0 0.0
      %4739 = vmatmul.mubr.f32.gmra.mxu0 %v2871
      %v4740 = vpop.f32.mrf.mxu0
      %v4741 = vadd.f32 %v4652, %v4740
      %v4742 = vpop.f32.mrf.mxu0
      %4743 = vmatprep.mubr.f32.mxu0 0.0
      %4744 = vmatmul.mubr.f32.gmra.mxu0 %v2872
      %v4745 = vpop.f32.mrf.mxu0
      %v4746 = vadd.f32 %v4652, %v4745
      %v4747 = vpop.f32.mrf.mxu0
      %4748 = vmatprep.mubr.f32.mxu0 0.0
      %4749 = vmatmul.mubr.f32.gmra.mxu0 %v2873
      %v4750 = vpop.f32.mrf.mxu0
      %v4751 = vadd.f32 %v4652, %v4750
      %v4752 = vpop.f32.mrf.mxu0
      %4753 = vmatprep.mubr.f32.mxu0 0.0
      %4754 = vmatmul.mubr.f32.gmra.mxu0 %v2874
      %v4755 = vpop.f32.mrf.mxu0
      %v4756 = vadd.f32 %v4652, %v4755
      %v4757 = vpop.f32.mrf.mxu0
      %4758 = vmatprep.mubr.f32.mxu0 0.0
      %4759 = vmatmul.mubr.f32.gmra.mxu0 %v2875
      %v4760 = vpop.f32.mrf.mxu0
      %v4761 = vadd.f32 %v4652, %v4760
      %v4762 = vpop.f32.mrf.mxu0
      %4763 = vmatprep.mubr.f32.mxu0 0.0
      %4764 = vmatmul.mubr.f32.gmra.mxu0 %v2876
      %v4765 = vpop.f32.mrf.mxu0
      %v4766 = vadd.f32 %v4652, %v4765
      %v4767 = vpop.f32.mrf.mxu0
      %4768 = vmatprep.mubr.f32.mxu0 0.0
      %4769 = vmatmul.mubr.f32.gmra.mxu0 %v2877
      %v4770 = vpop.f32.mrf.mxu0
      %v4771 = vadd.f32 %v4652, %v4770
      %v4772 = vpop.f32.mrf.mxu0
      %4773 = vmatprep.mubr.f32.mxu0 0.0
      %4774 = vmatmul.mubr.f32.gmra.mxu0 %v2878
      %v4775 = vpop.f32.mrf.mxu0
      %v4776 = vadd.f32 %v4652, %v4775
      %v4777 = vpop.f32.mrf.mxu0
      %4778 = vmatprep.mubr.f32.mxu0 0.0
      %4779 = vmatmul.mubr.f32.gmra.mxu0 %v2879
      %v4780 = vpop.f32.mrf.mxu0
      %v4781 = vadd.f32 %v4652, %v4780
      %v4782 = vpop.f32.mrf.mxu0
      %4783 = vmatprep.mubr.f32.mxu0 0.0
      %4784 = vmatmul.mubr.f32.gmra.mxu0 %v2880
      %v4785 = vpop.f32.mrf.mxu0
      %v4786 = vadd.f32 %v4652, %v4785
      %v4787 = vpop.f32.mrf.mxu0
      %4788 = vmatprep.mubr.f32.mxu0 0.0
      %4789 = vmatmul.mubr.f32.gmra.mxu0 %v2881
      %v4790 = vpop.f32.mrf.mxu0
      %v4791 = vadd.f32 %v4652, %v4790
      %v4792 = vpop.f32.mrf.mxu0
      %4793 = vmatprep.mubr.f32.mxu0 0.0
      %4794 = vmatmul.mubr.f32.gmra.mxu0 %v2882
      %v4795 = vpop.f32.mrf.mxu0
      %v4796 = vadd.f32 %v4652, %v4795
      %v4797 = vpop.f32.mrf.mxu0
      %4798 = vmatprep.mubr.f32.mxu0 0.0
      %4799 = vmatmul.mubr.f32.gmra.mxu0 %v2883
      %v4800 = vpop.f32.mrf.mxu0
      %v4801 = vadd.f32 %v4652, %v4800
      %v4802 = vpop.f32.mrf.mxu0
      %4803 = vmatprep.mubr.f32.mxu0 0.0
      %4804 = vmatmul.mubr.f32.gmra.mxu0 %v2884
      %v4805 = vpop.f32.mrf.mxu0
      %v4806 = vadd.f32 %v4652, %v4805
      %v4807 = vpop.f32.mrf.mxu0
      %4808 = vdwg.mxu0
      %4809 = vset.pattern.permute.xlu0 6
      %4810 = vperm.xlu0 %4809, %v2832
      %v4811 = vpop.permute.xlu0 %4810
      %4813 = vset.pattern.permute.xlu0 6
      %4814 = vperm.xlu0 %4813, %v2834
      %v4815 = vpop.permute.xlu0 %4814
      %4817 = vset.pattern.permute.xlu0 6
      %4818 = vperm.xlu0 %4817, %v2836
      %v4819 = vpop.permute.xlu0 %4818
      %4821 = vset.pattern.permute.xlu0 6
      %4822 = vperm.xlu0 %4821, %v2838
      %v4823 = vpop.permute.xlu0 %4822
      %4825 = vset.pattern.permute.xlu0 6
      %4826 = vperm.xlu0 %4825, %v2840
      %v4827 = vpop.permute.xlu0 %4826
      %4829 = vset.pattern.permute.xlu0 6
      %4830 = vperm.xlu0 %4829, %v2842
      %v4831 = vpop.permute.xlu0 %4830
      %4833 = vset.pattern.permute.xlu0 6
      %4834 = vperm.xlu0 %4833, %v2844
      %v4835 = vpop.permute.xlu0 %4834
      %4837 = vset.pattern.permute.xlu0 6
      %4838 = vperm.xlu0 %4837, %v2846
      %v4839 = vpop.permute.xlu0 %4838
      %4841 = vset.pattern.permute.xlu0 6
      %4842 = vperm.xlu0 %4841, %v2848
      %v4843 = vpop.permute.xlu0 %4842
      %4845 = vset.pattern.permute.xlu0 6
      %4846 = vperm.xlu0 %4845, %v2850
      %v4847 = vpop.permute.xlu0 %4846
      %4849 = vset.pattern.permute.xlu0 6
      %4850 = vperm.xlu0 %4849, %v2852
      %v4851 = vpop.permute.xlu0 %4850
      %4853 = vset.pattern.permute.xlu0 6
      %4854 = vperm.xlu0 %4853, %v2854
      %v4855 = vpop.permute.xlu0 %4854
      %4857 = vset.pattern.permute.xlu0 6
      %4858 = vperm.xlu0 %4857, %v2856
      %v4859 = vpop.permute.xlu0 %4858
      %4861 = vset.pattern.permute.xlu0 6
      %4862 = vperm.xlu0 %4861, %v2858
      %v4863 = vpop.permute.xlu0 %4862
      %4865 = vset.pattern.permute.xlu0 6
      %4866 = vperm.xlu0 %4865, %v2860
      %v4867 = vpop.permute.xlu0 %4866
      %4869 = vset.pattern.permute.xlu0 6
      %4870 = vperm.xlu0 %4869, %v2862
      %v4871 = vpop.permute.xlu0 %4870
      %4873 = vset.pattern.permute.xlu0 6
      %4874 = vperm.xlu0 %4873, %v2864
      %v4875 = vpop.permute.xlu0 %4874
      %4877 = vset.pattern.permute.xlu0 6
      %4878 = vperm.xlu0 %4877, %v2866
      %v4879 = vpop.permute.xlu0 %4878
      %v4881 = vmul.f32 %v4721, %v4811
      %v4882 = vmul.f32 %v4726, %v4815
      %v4883 = vmul.f32 %v4731, %v4819
      %v4884 = vmul.f32 %v4736, %v4823
      %v4885 = vmul.f32 %v4741, %v4827
      %v4886 = vmul.f32 %v4746, %v4831
      %v4887 = vmul.f32 %v4751, %v4835
      %v4888 = vmul.f32 %v4756, %v4839
      %v4889 = vmul.f32 %v4761, %v4843
      %v4890 = vmul.f32 %v4766, %v4847
      %v4891 = vmul.f32 %v4771, %v4851
      %v4892 = vmul.f32 %v4776, %v4855
      %v4893 = vmul.f32 %v4781, %v4859
      %v4894 = vmul.f32 %v4786, %v4863
      %v4895 = vmul.f32 %v4791, %v4867
      %v4896 = vmul.f32 %v4796, %v4871
      %v4897 = vmul.f32 %v4801, %v4875
      %v4898 = vmul.f32 %v4806, %v4879
      %v4899 = vadd.f32 %v4611, %v4881
      %v4900 = vadd.f32 %v4612, %v4882
      %v4901 = vadd.f32 %v4613, %v4883
      %v4902 = vadd.f32 %v4614, %v4884
      %v4903 = vadd.f32 %v4615, %v4885
      %v4904 = vadd.f32 %v4616, %v4886
      %v4905 = vadd.f32 %v4617, %v4887
      %v4906 = vadd.f32 %v4618, %v4888
      %v4907 = vadd.f32 %v4619, %v4889
      %v4908 = vadd.f32 %v4620, %v4890
      %v4909 = vadd.f32 %v4621, %v4891
      %v4910 = vadd.f32 %v4622, %v4892
      %v4911 = vadd.f32 %v4623, %v4893
      %v4912 = vadd.f32 %v4624, %v4894
      %v4913 = vadd.f32 %v4625, %v4895
      %v4914 = vadd.f32 %v4626, %v4896
      %v4915 = vadd.f32 %v4627, %v4897
      %v4916 = vadd.f32 %v4628, %v4898
      %s4917 = scalar_lea.vmem %s3, 896
      %v4918 = vld [vmem:[%s4917] sm:$0xff]
      %v4919 = vld [vmem:[%s4917 + $0x8] sm:$0xff]
      %v4920 = vld [vmem:[%s4917 + $0x10] sm:$0xff]
      %v4921 = vld [vmem:[%s4917 + $0x18] sm:$0xff]
      %v4922 = vld [vmem:[%s4917 + $0x20] sm:$0xff]
      %v4923 = vld [vmem:[%s4917 + $0x28] sm:$0xff]
      %v4924 = vld [vmem:[%s4917 + $0x30] sm:$0xff]
      %v4925 = vld [vmem:[%s4917 + $0x38] sm:$0xff]
      %v4926 = vld [vmem:[%s4917 + $0x40] sm:$0xff]
      %v4927 = vld [vmem:[%s4917 + $0x48] sm:$0xff]
      %v4928 = vld [vmem:[%s4917 + $0x50] sm:$0xff]
      %v4929 = vld [vmem:[%s4917 + $0x58] sm:$0xff]
      %v4930 = vld [vmem:[%s4917 + $0x60] sm:$0xff]
      %v4931 = vld [vmem:[%s4917 + $0x68] sm:$0xff]
      %v4932 = vld [vmem:[%s4917 + $0x70] sm:$0xff]
      %v4933 = vld [vmem:[%s4917 + $0x78] sm:$0xff]
      %s4934 = scalar_lea.vmem %s4, 7
      %v4935 = vld [vmem:[%s4934] sm:$0x1]
      %v4937 = vlaneseq
      %v4938 = vshrl.u32 %v4937, 7
      %v4939 = vsub.s32 0, %v4938
      %v4940 = vrot.slane %v4935, %v4939
      %4942 = vmatprep.subr.mxu0 0.0
      %4943 = vmatpush1.msra.mxu0 %v4933
      %4944 = vmatprep.subr.mxu0 0.0
      %4945 = vmatpush1.msra.mxu0 %v4932
      %4946 = vmatprep.subr.mxu0 0.0
      %4947 = vmatpush1.msra.mxu0 %v4931
      %4948 = vmatprep.subr.mxu0 0.0
      %4949 = vmatpush1.msra.mxu0 %v4930
      %4950 = vmatprep.subr.mxu0 0.0
      %4951 = vmatpush1.msra.mxu0 %v4929
      %4952 = vmatprep.subr.mxu0 0.0
      %4953 = vmatpush1.msra.mxu0 %v4928
      %4954 = vmatprep.subr.mxu0 0.0
      %4955 = vmatpush1.msra.mxu0 %v4927
      %4956 = vmatprep.subr.mxu0 0.0
      %4957 = vmatpush1.msra.mxu0 %v4926
      %4958 = vmatprep.subr.mxu0 0.0
      %4959 = vmatpush1.msra.mxu0 %v4925
      %4960 = vmatprep.subr.mxu0 0.0
      %4961 = vmatpush1.msra.mxu0 %v4924
      %4962 = vmatprep.subr.mxu0 0.0
      %4963 = vmatpush1.msra.mxu0 %v4923
      %4964 = vmatprep.subr.mxu0 0.0
      %4965 = vmatpush1.msra.mxu0 %v4922
      %4966 = vmatprep.subr.mxu0 0.0
      %4967 = vmatpush1.msra.mxu0 %v4921
      %4968 = vmatprep.subr.mxu0 0.0
      %4969 = vmatpush1.msra.mxu0 %v4920
      %4970 = vmatprep.subr.mxu0 0.0
      %4971 = vmatpush1.msra.mxu0 %v4919
      %4972 = vmatprep.subr.mxu0 0.0
      %4973 = vmatpush1.msra.mxu0 %v4918
      %4974 = vmatprep.subr.mxu0 0.0
      %4975 = vmatpush2.msra.mxu0 0.0
      %4976 = vmatprep.subr.mxu0 0.0
      %4977 = vmatpush2.msra.mxu0 0.0
      %4978 = vmatprep.subr.mxu0 0.0
      %4979 = vmatpush2.msra.mxu0 0.0
      %4980 = vmatprep.subr.mxu0 0.0
      %4981 = vmatpush2.msra.mxu0 0.0
      %4982 = vmatprep.subr.mxu0 0.0
      %4983 = vmatpush2.msra.mxu0 0.0
      %4984 = vmatprep.subr.mxu0 0.0
      %4985 = vmatpush2.msra.mxu0 0.0
      %4986 = vmatprep.subr.mxu0 0.0
      %4987 = vmatpush2.msra.mxu0 0.0
      %4988 = vmatprep.subr.mxu0 0.0
      %4989 = vmatpush2.msra.mxu0 0.0
      %4990 = vmatprep.subr.mxu0 0.0
      %4991 = vmatpush2.msra.mxu0 0.0
      %4992 = vmatprep.subr.mxu0 0.0
      %4993 = vmatpush2.msra.mxu0 0.0
      %4994 = vmatprep.subr.mxu0 0.0
      %4995 = vmatpush2.msra.mxu0 0.0
      %4996 = vmatprep.subr.mxu0 0.0
      %4997 = vmatpush2.msra.mxu0 0.0
      %4998 = vmatprep.subr.mxu0 0.0
      %4999 = vmatpush2.msra.mxu0 0.0
      %5000 = vmatprep.subr.mxu0 0.0
      %5001 = vmatpush2.msra.mxu0 0.0
      %5002 = vmatprep.subr.mxu0 0.0
      %5003 = vmatpush2.msra.mxu0 0.0
      %5004 = vmatprep.subr.mxu0 0.0
      %5005 = vmatpush2.msra.mxu0 0.0
      %5006 = vmatprep.mubr.f32.mxu0 0.0
      %5007 = vmatmul.mubr.f32.gmra.mxu0 %v2867
      %v5008 = vpop.f32.mrf.mxu0
      %v5009 = vadd.f32 %v4940, %v5008
      %v5010 = vpop.f32.mrf.mxu0
      %5011 = vmatprep.mubr.f32.mxu0 0.0
      %5012 = vmatmul.mubr.f32.gmra.mxu0 %v2868
      %v5013 = vpop.f32.mrf.mxu0
      %v5014 = vadd.f32 %v4940, %v5013
      %v5015 = vpop.f32.mrf.mxu0
      %5016 = vmatprep.mubr.f32.mxu0 0.0
      %5017 = vmatmul.mubr.f32.gmra.mxu0 %v2869
      %v5018 = vpop.f32.mrf.mxu0
      %v5019 = vadd.f32 %v4940, %v5018
      %v5020 = vpop.f32.mrf.mxu0
      %5021 = vmatprep.mubr.f32.mxu0 0.0
      %5022 = vmatmul.mubr.f32.gmra.mxu0 %v2870
      %v5023 = vpop.f32.mrf.mxu0
      %v5024 = vadd.f32 %v4940, %v5023
      %v5025 = vpop.f32.mrf.mxu0
      %5026 = vmatprep.mubr.f32.mxu0 0.0
      %5027 = vmatmul.mubr.f32.gmra.mxu0 %v2871
      %v5028 = vpop.f32.mrf.mxu0
      %v5029 = vadd.f32 %v4940, %v5028
      %v5030 = vpop.f32.mrf.mxu0
      %5031 = vmatprep.mubr.f32.mxu0 0.0
      %5032 = vmatmul.mubr.f32.gmra.mxu0 %v2872
      %v5033 = vpop.f32.mrf.mxu0
      %v5034 = vadd.f32 %v4940, %v5033
      %v5035 = vpop.f32.mrf.mxu0
      %5036 = vmatprep.mubr.f32.mxu0 0.0
      %5037 = vmatmul.mubr.f32.gmra.mxu0 %v2873
      %v5038 = vpop.f32.mrf.mxu0
      %v5039 = vadd.f32 %v4940, %v5038
      %v5040 = vpop.f32.mrf.mxu0
      %5041 = vmatprep.mubr.f32.mxu0 0.0
      %5042 = vmatmul.mubr.f32.gmra.mxu0 %v2874
      %v5043 = vpop.f32.mrf.mxu0
      %v5044 = vadd.f32 %v4940, %v5043
      %v5045 = vpop.f32.mrf.mxu0
      %5046 = vmatprep.mubr.f32.mxu0 0.0
      %5047 = vmatmul.mubr.f32.gmra.mxu0 %v2875
      %v5048 = vpop.f32.mrf.mxu0
      %v5049 = vadd.f32 %v4940, %v5048
      %v5050 = vpop.f32.mrf.mxu0
      %5051 = vmatprep.mubr.f32.mxu0 0.0
      %5052 = vmatmul.mubr.f32.gmra.mxu0 %v2876
      %v5053 = vpop.f32.mrf.mxu0
      %v5054 = vadd.f32 %v4940, %v5053
      %v5055 = vpop.f32.mrf.mxu0
      %5056 = vmatprep.mubr.f32.mxu0 0.0
      %5057 = vmatmul.mubr.f32.gmra.mxu0 %v2877
      %v5058 = vpop.f32.mrf.mxu0
      %v5059 = vadd.f32 %v4940, %v5058
      %v5060 = vpop.f32.mrf.mxu0
      %5061 = vmatprep.mubr.f32.mxu0 0.0
      %5062 = vmatmul.mubr.f32.gmra.mxu0 %v2878
      %v5063 = vpop.f32.mrf.mxu0
      %v5064 = vadd.f32 %v4940, %v5063
      %v5065 = vpop.f32.mrf.mxu0
      %5066 = vmatprep.mubr.f32.mxu0 0.0
      %5067 = vmatmul.mubr.f32.gmra.mxu0 %v2879
      %v5068 = vpop.f32.mrf.mxu0
      %v5069 = vadd.f32 %v4940, %v5068
      %v5070 = vpop.f32.mrf.mxu0
      %5071 = vmatprep.mubr.f32.mxu0 0.0
      %5072 = vmatmul.mubr.f32.gmra.mxu0 %v2880
      %v5073 = vpop.f32.mrf.mxu0
      %v5074 = vadd.f32 %v4940, %v5073
      %v5075 = vpop.f32.mrf.mxu0
      %5076 = vmatprep.mubr.f32.mxu0 0.0
      %5077 = vmatmul.mubr.f32.gmra.mxu0 %v2881
      %v5078 = vpop.f32.mrf.mxu0
      %v5079 = vadd.f32 %v4940, %v5078
      %v5080 = vpop.f32.mrf.mxu0
      %5081 = vmatprep.mubr.f32.mxu0 0.0
      %5082 = vmatmul.mubr.f32.gmra.mxu0 %v2882
      %v5083 = vpop.f32.mrf.mxu0
      %v5084 = vadd.f32 %v4940, %v5083
      %v5085 = vpop.f32.mrf.mxu0
      %5086 = vmatprep.mubr.f32.mxu0 0.0
      %5087 = vmatmul.mubr.f32.gmra.mxu0 %v2883
      %v5088 = vpop.f32.mrf.mxu0
      %v5089 = vadd.f32 %v4940, %v5088
      %v5090 = vpop.f32.mrf.mxu0
      %5091 = vmatprep.mubr.f32.mxu0 0.0
      %5092 = vmatmul.mubr.f32.gmra.mxu0 %v2884
      %v5093 = vpop.f32.mrf.mxu0
      %v5094 = vadd.f32 %v4940, %v5093
      %v5095 = vpop.f32.mrf.mxu0
      %5096 = vdwg.mxu0
      %5097 = vset.pattern.permute.xlu0 7
      %5098 = vperm.xlu0 %5097, %v2832
      %v5099 = vpop.permute.xlu0 %5098
      %5101 = vset.pattern.permute.xlu0 7
      %5102 = vperm.xlu0 %5101, %v2834
      %v5103 = vpop.permute.xlu0 %5102
      %5105 = vset.pattern.permute.xlu0 7
      %5106 = vperm.xlu0 %5105, %v2836
      %v5107 = vpop.permute.xlu0 %5106
      %5109 = vset.pattern.permute.xlu0 7
      %5110 = vperm.xlu0 %5109, %v2838
      %v5111 = vpop.permute.xlu0 %5110
      %5113 = vset.pattern.permute.xlu0 7
      %5114 = vperm.xlu0 %5113, %v2840
      %v5115 = vpop.permute.xlu0 %5114
      %5117 = vset.pattern.permute.xlu0 7
      %5118 = vperm.xlu0 %5117, %v2842
      %v5119 = vpop.permute.xlu0 %5118
      %5121 = vset.pattern.permute.xlu0 7
      %5122 = vperm.xlu0 %5121, %v2844
      %v5123 = vpop.permute.xlu0 %5122
      %5125 = vset.pattern.permute.xlu0 7
      %5126 = vperm.xlu0 %5125, %v2846
      %v5127 = vpop.permute.xlu0 %5126
      %5129 = vset.pattern.permute.xlu0 7
      %5130 = vperm.xlu0 %5129, %v2848
      %v5131 = vpop.permute.xlu0 %5130
      %5133 = vset.pattern.permute.xlu0 7
      %5134 = vperm.xlu0 %5133, %v2850
      %v5135 = vpop.permute.xlu0 %5134
      %5137 = vset.pattern.permute.xlu0 7
      %5138 = vperm.xlu0 %5137, %v2852
      %v5139 = vpop.permute.xlu0 %5138
      %5141 = vset.pattern.permute.xlu0 7
      %5142 = vperm.xlu0 %5141, %v2854
      %v5143 = vpop.permute.xlu0 %5142
      %5145 = vset.pattern.permute.xlu0 7
      %5146 = vperm.xlu0 %5145, %v2856
      %v5147 = vpop.permute.xlu0 %5146
      %5149 = vset.pattern.permute.xlu0 7
      %5150 = vperm.xlu0 %5149, %v2858
      %v5151 = vpop.permute.xlu0 %5150
      %5153 = vset.pattern.permute.xlu0 7
      %5154 = vperm.xlu0 %5153, %v2860
      %v5155 = vpop.permute.xlu0 %5154
      %5157 = vset.pattern.permute.xlu0 7
      %5158 = vperm.xlu0 %5157, %v2862
      %v5159 = vpop.permute.xlu0 %5158
      %5161 = vset.pattern.permute.xlu0 7
      %5162 = vperm.xlu0 %5161, %v2864
      %v5163 = vpop.permute.xlu0 %5162
      %5165 = vset.pattern.permute.xlu0 7
      %5166 = vperm.xlu0 %5165, %v2866
      %v5167 = vpop.permute.xlu0 %5166
      %v5169 = vmul.f32 %v5009, %v5099
      %v5170 = vmul.f32 %v5014, %v5103
      %v5171 = vmul.f32 %v5019, %v5107
      %v5172 = vmul.f32 %v5024, %v5111
      %v5173 = vmul.f32 %v5029, %v5115
      %v5174 = vmul.f32 %v5034, %v5119
      %v5175 = vmul.f32 %v5039, %v5123
      %v5176 = vmul.f32 %v5044, %v5127
      %v5177 = vmul.f32 %v5049, %v5131
      %v5178 = vmul.f32 %v5054, %v5135
      %v5179 = vmul.f32 %v5059, %v5139
      %v5180 = vmul.f32 %v5064, %v5143
      %v5181 = vmul.f32 %v5069, %v5147
      %v5182 = vmul.f32 %v5074, %v5151
      %v5183 = vmul.f32 %v5079, %v5155
      %v5184 = vmul.f32 %v5084, %v5159
      %v5185 = vmul.f32 %v5089, %v5163
      %v5186 = vmul.f32 %v5094, %v5167
      %v5187 = vadd.f32 %v4899, %v5169
      %v5188 = vadd.f32 %v4900, %v5170
      %v5189 = vadd.f32 %v4901, %v5171
      %v5190 = vadd.f32 %v4902, %v5172
      %v5191 = vadd.f32 %v4903, %v5173
      %v5192 = vadd.f32 %v4904, %v5174
      %v5193 = vadd.f32 %v4905, %v5175
      %v5194 = vadd.f32 %v4906, %v5176
      %v5195 = vadd.f32 %v4907, %v5177
      %v5196 = vadd.f32 %v4908, %v5178
      %v5197 = vadd.f32 %v4909, %v5179
      %v5198 = vadd.f32 %v4910, %v5180
      %v5199 = vadd.f32 %v4911, %v5181
      %v5200 = vadd.f32 %v4912, %v5182
      %v5201 = vadd.f32 %v4913, %v5183
      %v5202 = vadd.f32 %v4914, %v5184
      %v5203 = vadd.f32 %v4915, %v5185
      %v5204 = vadd.f32 %v4916, %v5186
      %s5205 = scalar_lea.vmem %s3, 1024
      %v5206 = vld [vmem:[%s5205] sm:$0xff]
      %v5207 = vld [vmem:[%s5205 + $0x8] sm:$0xff]
      %v5208 = vld [vmem:[%s5205 + $0x10] sm:$0xff]
      %v5209 = vld [vmem:[%s5205 + $0x18] sm:$0xff]
      %v5210 = vld [vmem:[%s5205 + $0x20] sm:$0xff]
      %v5211 = vld [vmem:[%s5205 + $0x28] sm:$0xff]
      %v5212 = vld [vmem:[%s5205 + $0x30] sm:$0xff]
      %v5213 = vld [vmem:[%s5205 + $0x38] sm:$0xff]
      %v5214 = vld [vmem:[%s5205 + $0x40] sm:$0xff]
      %v5215 = vld [vmem:[%s5205 + $0x48] sm:$0xff]
      %v5216 = vld [vmem:[%s5205 + $0x50] sm:$0xff]
      %v5217 = vld [vmem:[%s5205 + $0x58] sm:$0xff]
      %v5218 = vld [vmem:[%s5205 + $0x60] sm:$0xff]
      %v5219 = vld [vmem:[%s5205 + $0x68] sm:$0xff]
      %v5220 = vld [vmem:[%s5205 + $0x70] sm:$0xff]
      %v5221 = vld [vmem:[%s5205 + $0x78] sm:$0xff]
      %s5222 = scalar_lea.vmem %s4, 8
      %v5223 = vld [vmem:[%s5222] sm:$0x1]
      %v5225 = vlaneseq
      %v5226 = vshrl.u32 %v5225, 7
      %v5227 = vsub.s32 0, %v5226
      %v5228 = vrot.slane %v5223, %v5227
      %5230 = vmatprep.subr.mxu0 0.0
      %5231 = vmatpush1.msra.mxu0 %v5221
      %5232 = vmatprep.subr.mxu0 0.0
      %5233 = vmatpush1.msra.mxu0 %v5220
      %5234 = vmatprep.subr.mxu0 0.0
      %5235 = vmatpush1.msra.mxu0 %v5219
      %5236 = vmatprep.subr.mxu0 0.0
      %5237 = vmatpush1.msra.mxu0 %v5218
      %5238 = vmatprep.subr.mxu0 0.0
      %5239 = vmatpush1.msra.mxu0 %v5217
      %5240 = vmatprep.subr.mxu0 0.0
      %5241 = vmatpush1.msra.mxu0 %v5216
      %5242 = vmatprep.subr.mxu0 0.0
      %5243 = vmatpush1.msra.mxu0 %v5215
      %5244 = vmatprep.subr.mxu0 0.0
      %5245 = vmatpush1.msra.mxu0 %v5214
      %5246 = vmatprep.subr.mxu0 0.0
      %5247 = vmatpush1.msra.mxu0 %v5213
      %5248 = vmatprep.subr.mxu0 0.0
      %5249 = vmatpush1.msra.mxu0 %v5212
      %5250 = vmatprep.subr.mxu0 0.0
      %5251 = vmatpush1.msra.mxu0 %v5211
      %5252 = vmatprep.subr.mxu0 0.0
      %5253 = vmatpush1.msra.mxu0 %v5210
      %5254 = vmatprep.subr.mxu0 0.0
      %5255 = vmatpush1.msra.mxu0 %v5209
      %5256 = vmatprep.subr.mxu0 0.0
      %5257 = vmatpush1.msra.mxu0 %v5208
      %5258 = vmatprep.subr.mxu0 0.0
      %5259 = vmatpush1.msra.mxu0 %v5207
      %5260 = vmatprep.subr.mxu0 0.0
      %5261 = vmatpush1.msra.mxu0 %v5206
      %5262 = vmatprep.subr.mxu0 0.0
      %5263 = vmatpush2.msra.mxu0 0.0
      %5264 = vmatprep.subr.mxu0 0.0
      %5265 = vmatpush2.msra.mxu0 0.0
      %5266 = vmatprep.subr.mxu0 0.0
      %5267 = vmatpush2.msra.mxu0 0.0
      %5268 = vmatprep.subr.mxu0 0.0
      %5269 = vmatpush2.msra.mxu0 0.0
      %5270 = vmatprep.subr.mxu0 0.0
      %5271 = vmatpush2.msra.mxu0 0.0
      %5272 = vmatprep.subr.mxu0 0.0
      %5273 = vmatpush2.msra.mxu0 0.0
      %5274 = vmatprep.subr.mxu0 0.0
      %5275 = vmatpush2.msra.mxu0 0.0
      %5276 = vmatprep.subr.mxu0 0.0
      %5277 = vmatpush2.msra.mxu0 0.0
      %5278 = vmatprep.subr.mxu0 0.0
      %5279 = vmatpush2.msra.mxu0 0.0
      %5280 = vmatprep.subr.mxu0 0.0
      %5281 = vmatpush2.msra.mxu0 0.0
      %5282 = vmatprep.subr.mxu0 0.0
      %5283 = vmatpush2.msra.mxu0 0.0
      %5284 = vmatprep.subr.mxu0 0.0
      %5285 = vmatpush2.msra.mxu0 0.0
      %5286 = vmatprep.subr.mxu0 0.0
      %5287 = vmatpush2.msra.mxu0 0.0
      %5288 = vmatprep.subr.mxu0 0.0
      %5289 = vmatpush2.msra.mxu0 0.0
      %5290 = vmatprep.subr.mxu0 0.0
      %5291 = vmatpush2.msra.mxu0 0.0
      %5292 = vmatprep.subr.mxu0 0.0
      %5293 = vmatpush2.msra.mxu0 0.0
      %5294 = vmatprep.mubr.f32.mxu0 0.0
      %5295 = vmatmul.mubr.f32.gmra.mxu0 %v2867
      %v5296 = vpop.f32.mrf.mxu0
      %v5297 = vadd.f32 %v5228, %v5296
      %v5298 = vpop.f32.mrf.mxu0
      %5299 = vmatprep.mubr.f32.mxu0 0.0
      %5300 = vmatmul.mubr.f32.gmra.mxu0 %v2868
      %v5301 = vpop.f32.mrf.mxu0
      %v5302 = vadd.f32 %v5228, %v5301
      %v5303 = vpop.f32.mrf.mxu0
      %5304 = vmatprep.mubr.f32.mxu0 0.0
      %5305 = vmatmul.mubr.f32.gmra.mxu0 %v2869
      %v5306 = vpop.f32.mrf.mxu0
      %v5307 = vadd.f32 %v5228, %v5306
      %v5308 = vpop.f32.mrf.mxu0
      %5309 = vmatprep.mubr.f32.mxu0 0.0
      %5310 = vmatmul.mubr.f32.gmra.mxu0 %v2870
      %v5311 = vpop.f32.mrf.mxu0
      %v5312 = vadd.f32 %v5228, %v5311
      %v5313 = vpop.f32.mrf.mxu0
      %5314 = vmatprep.mubr.f32.mxu0 0.0
      %5315 = vmatmul.mubr.f32.gmra.mxu0 %v2871
      %v5316 = vpop.f32.mrf.mxu0
      %v5317 = vadd.f32 %v5228, %v5316
      %v5318 = vpop.f32.mrf.mxu0
      %5319 = vmatprep.mubr.f32.mxu0 0.0
      %5320 = vmatmul.mubr.f32.gmra.mxu0 %v2872
      %v5321 = vpop.f32.mrf.mxu0
      %v5322 = vadd.f32 %v5228, %v5321
      %v5323 = vpop.f32.mrf.mxu0
      %5324 = vmatprep.mubr.f32.mxu0 0.0
      %5325 = vmatmul.mubr.f32.gmra.mxu0 %v2873
      %v5326 = vpop.f32.mrf.mxu0
      %v5327 = vadd.f32 %v5228, %v5326
      %v5328 = vpop.f32.mrf.mxu0
      %5329 = vmatprep.mubr.f32.mxu0 0.0
      %5330 = vmatmul.mubr.f32.gmra.mxu0 %v2874
      %v5331 = vpop.f32.mrf.mxu0
      %v5332 = vadd.f32 %v5228, %v5331
      %v5333 = vpop.f32.mrf.mxu0
      %5334 = vmatprep.mubr.f32.mxu0 0.0
      %5335 = vmatmul.mubr.f32.gmra.mxu0 %v2875
      %v5336 = vpop.f32.mrf.mxu0
      %v5337 = vadd.f32 %v5228, %v5336
      %v5338 = vpop.f32.mrf.mxu0
      %5339 = vmatprep.mubr.f32.mxu0 0.0
      %5340 = vmatmul.mubr.f32.gmra.mxu0 %v2876
      %v5341 = vpop.f32.mrf.mxu0
      %v5342 = vadd.f32 %v5228, %v5341
      %v5343 = vpop.f32.mrf.mxu0
      %5344 = vmatprep.mubr.f32.mxu0 0.0
      %5345 = vmatmul.mubr.f32.gmra.mxu0 %v2877
      %v5346 = vpop.f32.mrf.mxu0
      %v5347 = vadd.f32 %v5228, %v5346
      %v5348 = vpop.f32.mrf.mxu0
      %5349 = vmatprep.mubr.f32.mxu0 0.0
      %5350 = vmatmul.mubr.f32.gmra.mxu0 %v2878
      %v5351 = vpop.f32.mrf.mxu0
      %v5352 = vadd.f32 %v5228, %v5351
      %v5353 = vpop.f32.mrf.mxu0
      %5354 = vmatprep.mubr.f32.mxu0 0.0
      %5355 = vmatmul.mubr.f32.gmra.mxu0 %v2879
      %v5356 = vpop.f32.mrf.mxu0
      %v5357 = vadd.f32 %v5228, %v5356
      %v5358 = vpop.f32.mrf.mxu0
      %5359 = vmatprep.mubr.f32.mxu0 0.0
      %5360 = vmatmul.mubr.f32.gmra.mxu0 %v2880
      %v5361 = vpop.f32.mrf.mxu0
      %v5362 = vadd.f32 %v5228, %v5361
      %v5363 = vpop.f32.mrf.mxu0
      %5364 = vmatprep.mubr.f32.mxu0 0.0
      %5365 = vmatmul.mubr.f32.gmra.mxu0 %v2881
      %v5366 = vpop.f32.mrf.mxu0
      %v5367 = vadd.f32 %v5228, %v5366
      %v5368 = vpop.f32.mrf.mxu0
      %5369 = vmatprep.mubr.f32.mxu0 0.0
      %5370 = vmatmul.mubr.f32.gmra.mxu0 %v2882
      %v5371 = vpop.f32.mrf.mxu0
      %v5372 = vadd.f32 %v5228, %v5371
      %v5373 = vpop.f32.mrf.mxu0
      %5374 = vmatprep.mubr.f32.mxu0 0.0
      %5375 = vmatmul.mubr.f32.gmra.mxu0 %v2883
      %v5376 = vpop.f32.mrf.mxu0
      %v5377 = vadd.f32 %v5228, %v5376
      %v5378 = vpop.f32.mrf.mxu0
      %5379 = vmatprep.mubr.f32.mxu0 0.0
      %5380 = vmatmul.mubr.f32.gmra.mxu0 %v2884
      %v5381 = vpop.f32.mrf.mxu0
      %v5382 = vadd.f32 %v5228, %v5381
      %v5383 = vpop.f32.mrf.mxu0
      %5384 = vdwg.mxu0
      %5385 = vset.pattern.permute.xlu0 8
      %5386 = vperm.xlu0 %5385, %v2832
      %v5387 = vpop.permute.xlu0 %5386
      %5389 = vset.pattern.permute.xlu0 8
      %5390 = vperm.xlu0 %5389, %v2834
      %v5391 = vpop.permute.xlu0 %5390
      %5393 = vset.pattern.permute.xlu0 8
      %5394 = vperm.xlu0 %5393, %v2836
      %v5395 = vpop.permute.xlu0 %5394
      %5397 = vset.pattern.permute.xlu0 8
      %5398 = vperm.xlu0 %5397, %v2838
      %v5399 = vpop.permute.xlu0 %5398
      %5401 = vset.pattern.permute.xlu0 8
      %5402 = vperm.xlu0 %5401, %v2840
      %v5403 = vpop.permute.xlu0 %5402
      %5405 = vset.pattern.permute.xlu0 8
      %5406 = vperm.xlu0 %5405, %v2842
      %v5407 = vpop.permute.xlu0 %5406
      %5409 = vset.pattern.permute.xlu0 8
      %5410 = vperm.xlu0 %5409, %v2844
      %v5411 = vpop.permute.xlu0 %5410
      %5413 = vset.pattern.permute.xlu0 8
      %5414 = vperm.xlu0 %5413, %v2846
      %v5415 = vpop.permute.xlu0 %5414
      %5417 = vset.pattern.permute.xlu0 8
      %5418 = vperm.xlu0 %5417, %v2848
      %v5419 = vpop.permute.xlu0 %5418
      %5421 = vset.pattern.permute.xlu0 8
      %5422 = vperm.xlu0 %5421, %v2850
      %v5423 = vpop.permute.xlu0 %5422
      %5425 = vset.pattern.permute.xlu0 8
      %5426 = vperm.xlu0 %5425, %v2852
      %v5427 = vpop.permute.xlu0 %5426
      %5429 = vset.pattern.permute.xlu0 8
      %5430 = vperm.xlu0 %5429, %v2854
      %v5431 = vpop.permute.xlu0 %5430
      %5433 = vset.pattern.permute.xlu0 8
      %5434 = vperm.xlu0 %5433, %v2856
      %v5435 = vpop.permute.xlu0 %5434
      %5437 = vset.pattern.permute.xlu0 8
      %5438 = vperm.xlu0 %5437, %v2858
      %v5439 = vpop.permute.xlu0 %5438
      %5441 = vset.pattern.permute.xlu0 8
      %5442 = vperm.xlu0 %5441, %v2860
      %v5443 = vpop.permute.xlu0 %5442
      %5445 = vset.pattern.permute.xlu0 8
      %5446 = vperm.xlu0 %5445, %v2862
      %v5447 = vpop.permute.xlu0 %5446
      %5449 = vset.pattern.permute.xlu0 8
      %5450 = vperm.xlu0 %5449, %v2864
      %v5451 = vpop.permute.xlu0 %5450
      %5453 = vset.pattern.permute.xlu0 8
      %5454 = vperm.xlu0 %5453, %v2866
      %v5455 = vpop.permute.xlu0 %5454
      %v5457 = vmul.f32 %v5297, %v5387
      %v5458 = vmul.f32 %v5302, %v5391
      %v5459 = vmul.f32 %v5307, %v5395
      %v5460 = vmul.f32 %v5312, %v5399
      %v5461 = vmul.f32 %v5317, %v5403
      %v5462 = vmul.f32 %v5322, %v5407
      %v5463 = vmul.f32 %v5327, %v5411
      %v5464 = vmul.f32 %v5332, %v5415
      %v5465 = vmul.f32 %v5337, %v5419
      %v5466 = vmul.f32 %v5342, %v5423
      %v5467 = vmul.f32 %v5347, %v5427
      %v5468 = vmul.f32 %v5352, %v5431
      %v5469 = vmul.f32 %v5357, %v5435
      %v5470 = vmul.f32 %v5362, %v5439
      %v5471 = vmul.f32 %v5367, %v5443
      %v5472 = vmul.f32 %v5372, %v5447
      %v5473 = vmul.f32 %v5377, %v5451
      %v5474 = vmul.f32 %v5382, %v5455
      %v5475 = vadd.f32 %v5187, %v5457
      %v5476 = vadd.f32 %v5188, %v5458
      %v5477 = vadd.f32 %v5189, %v5459
      %v5478 = vadd.f32 %v5190, %v5460
      %v5479 = vadd.f32 %v5191, %v5461
      %v5480 = vadd.f32 %v5192, %v5462
      %v5481 = vadd.f32 %v5193, %v5463
      %v5482 = vadd.f32 %v5194, %v5464
      %v5483 = vadd.f32 %v5195, %v5465
      %v5484 = vadd.f32 %v5196, %v5466
      %v5485 = vadd.f32 %v5197, %v5467
      %v5486 = vadd.f32 %v5198, %v5468
      %v5487 = vadd.f32 %v5199, %v5469
      %v5488 = vadd.f32 %v5200, %v5470
      %v5489 = vadd.f32 %v5201, %v5471
      %v5490 = vadd.f32 %v5202, %v5472
      %v5491 = vadd.f32 %v5203, %v5473
      %v5492 = vadd.f32 %v5204, %v5474
      %v5493 = vld [vmem:[%s5] sm:$0x1]
      %v5495 = vlaneseq
      %v5496 = vshrl.u32 %v5495, 7
      %v5497 = vsub.s32 0, %v5496
      %v5498 = vrot.slane %v5493, %v5497
      %v5500 = vadd.f32 %v5475, %v5498
      %v5501 = vadd.f32 %v5476, %v5498
      %v5502 = vadd.f32 %v5477, %v5498
      %v5503 = vadd.f32 %v5478, %v5498
      %v5504 = vadd.f32 %v5479, %v5498
      %v5505 = vadd.f32 %v5480, %v5498
      %v5506 = vadd.f32 %v5481, %v5498
      %v5507 = vadd.f32 %v5482, %v5498
      %v5508 = vadd.f32 %v5483, %v5498
      %v5509 = vadd.f32 %v5484, %v5498
      %v5510 = vadd.f32 %v5485, %v5498
      %v5511 = vadd.f32 %v5486, %v5498
      %v5512 = vadd.f32 %v5487, %v5498
      %v5513 = vadd.f32 %v5488, %v5498
      %v5514 = vadd.f32 %v5489, %v5498
      %v5515 = vadd.f32 %v5490, %v5498
      %v5516 = vadd.f32 %v5491, %v5498
      %v5517 = vadd.f32 %v5492, %v5498
      %5518 = vst [vmem:[%s287] sm:$0xff] %v5500
      %5519 = vst [vmem:[%s287 + $0x8] sm:$0xff] %v5501
      %5520 = vst [vmem:[%s287 + $0x10] sm:$0xff] %v5502
      %5521 = vst [vmem:[%s287 + $0x18] sm:$0xff] %v5503
      %5522 = vst [vmem:[%s287 + $0x20] sm:$0xff] %v5504
      %5523 = vst [vmem:[%s287 + $0x28] sm:$0xff] %v5505
      %5524 = vst [vmem:[%s287 + $0x30] sm:$0xff] %v5506
      %5525 = vst [vmem:[%s287 + $0x38] sm:$0xff] %v5507
      %5526 = vst [vmem:[%s287 + $0x40] sm:$0xff] %v5508
      %5527 = vst [vmem:[%s287 + $0x48] sm:$0xff] %v5509
      %5528 = vst [vmem:[%s287 + $0x50] sm:$0xff] %v5510
      %5529 = vst [vmem:[%s287 + $0x58] sm:$0xff] %v5511
      %5530 = vst [vmem:[%s287 + $0x60] sm:$0xff] %v5512
      %5531 = vst [vmem:[%s287 + $0x68] sm:$0xff] %v5513
      %5532 = vst [vmem:[%s287 + $0x70] sm:$0xff] %v5514
      %5533 = vst [vmem:[%s287 + $0x78] sm:$0xff] %v5515
      %5534 = vst [vmem:[%s287 + $0x80] sm:$0xff] %v5516
      %5535 = vst [vmem:[%s287 + $0x88] sm:$0xff] %v5517
      %s5536 = smul.u32 18, %s22
      %p5537 = scmp.lt.s32.totalorder %s21, 1
      %s5538 = scalar_select %p5537, %s21, 1
      %p5539 = scmp.lt.s32.totalorder %s5536, 35
      %s5540 = scalar_select %p5539, %s5536, 35
      %s5541 = smul.addr %s5538, 36
      %s5542 = sadd.s32 %s5540, %s5541
      %s5543 = smul.addr %s5542, 8
      %s5544 = scalar_lea.vmem %s6, %s5543
      // Predicated region
      $region45: #{dynaconv_forward.1} parent=43 // pred_check
        %p5545 = pneg %p182
      $region46: #{dynaconv_forward.1} parent=43 // pred_check_branch
        %5547 = sbr.rel (%p5545) target = $region48
      $region47: #{dynaconv_forward.1} parent=43 // pred_region
        %s5548 = smul.u32 18, %s22
      $region48: #{dynaconv_forward.1} parent=43 // pred_fallthru
        _
    $region44: #{dynaconv_forward.1} parent=5 // pred_fallthru
      _
    %p5549 = scmp.le.s32.totalorder 2, %s12
    // Predicated region
    $region49: #{dynaconv_forward.1} parent=5 // pred_check
      %p5550 = pneg %p5549
    $region50: #{dynaconv_forward.1} parent=5 // pred_check_branch
      %5552 = sbr.rel (%p5550) target = $region52
    $region51: #{dynaconv_forward.1} parent=5 // pred_region
      %s5553 = ssub.s32 %s12, 2
      // Predicated region
      $region53: #{dynaconv_forward.1} parent=51 // pred_check
        %p5554 = pneg %p188
      $region54: #{dynaconv_forward.1} parent=51 // pred_check_branch
        %5556 = sbr.rel (%p5554) target = $region56
      $region55: #{dynaconv_forward.1} parent=51 // pred_region
        %s5557 = smul.u32 18, %s24
        %p5558 = scmp.lt.s32.totalorder %s23, 1
        %s5559 = scalar_select %p5558, %s23, 1
        %p5560 = scmp.lt.s32.totalorder %s5557, 35
        %s5561 = scalar_select %p5560, %s5557, 35
        %s5562 = smul.addr %s5559, 36
        %s5563 = sadd.s32 %s5561, %s5562
        %s5564 = smul.addr %s5563, 8
        %s5565 = scalar_lea.vmem %s6, %s5564
      $region56: #{dynaconv_forward.1} parent=51 // pred_fallthru
        _
    $region52: #{dynaconv_forward.1} parent=5 // pred_fallthru
      _
  $region6: #{dynaconv_forward.1} parent=0 // loop_footer
    %s16 = sadd.s32 1, %s12
  $region7: #{dynaconv_forward.1} parent=0 // loop_footer_branch
    %11 = sbr.rel target = $region3
  $region8: #{dynaconv_forward.1} parent=0 // loop_exit
    _

</llo_original>
